<compile_context>
chip_gen: v7x
topology: tpu7x:2x2x1
jax: 0.10.0
libtpu: 0.0.40
codegen_flags: <defaults>
</compile_context>

<pallas_src>
import jax
import jax.numpy as jnp
from jax.experimental import pallas as pl
from jax.experimental.pallas import tpu as pltpu


def _roll(v, shift, axis=1):
    """jnp.roll that is a no-op for shift == 0 (avoids a zero-size concat in lowering)."""
    if shift % v.shape[axis] == 0:
        return v
    return jnp.roll(v, shift, axis=axis)


# ----------------------------------------------------------------------------- kernel
def cnn1d_kernel(x_ref, m1_ref, sc1_ref, sh1_ref, s1_ref,
                 m2_ref, sc2_ref, sh2_ref, s2_ref, wc_ref, bc_ref,
                 o_ref, flat_ref):
    """Full CNN1D forward for one tile of TB samples."""
    tb = x_ref.shape[0]
    xb = x_ref[...]                                                          # (TB, 128)

    # Conv1d(1->16, k=15, circular pad 7): rolled-tap stack + one MXU matmul.
    xroll = jnp.concatenate([_roll(xb, 7 - t) for t in range(15)], axis=0)   # (15*TB, 128)
    a1 = jnp.dot(m1_ref[...], xroll, preferred_element_type=jnp.float32)     # (16*TB, 128)

    # BatchNorm1d(16) (running stats + conv bias folded) + LeakyReLU(0.01).
    a1 = a1 * sc1_ref[...] + sh1_ref[...]
    a1 = jnp.where(a1 > 0, a1, 0.01 * a1)

    # MaxPool1d(2,2): pairwise max on the VPU, even-lane selection on the MXU.
    p1 = jnp.dot(jnp.maximum(a1, _roll(a1, -1)), s1_ref[...],
                 preferred_element_type=jnp.float32)                         # (16*TB, 64)

    # Conv1d(16->32, k=5, circular pad 2): single matmul with K = 5*16*TB.
    proll = jnp.concatenate([_roll(p1, 2 - t) for t in range(5)], axis=0)    # (80*TB, 64)
    a2 = jnp.dot(m2_ref[...], proll, preferred_element_type=jnp.float32)     # (32*TB, 64)

    a2 = a2 * sc2_ref[...] + sh2_ref[...]
    a2 = jnp.where(a2 > 0, a2, 0.01 * a2)

    p2 = jnp.dot(jnp.maximum(a2, _roll(a2, -1)), s2_ref[...],
                 preferred_element_type=jnp.float32)                         # (32*TB, 32)

    # Channel-major flatten (== torch.flatten(x, 1)): move channels from rows to lanes
    # via static slice-stores into a VMEM scratch (explicit sublane->lane transpose).
    for c in range(32):
        flat_ref[:, c * 32:(c + 1) * 32] = p2[c * tb:(c + 1) * tb, :]

    # Fused classifier (fc2 o fc1 collapsed into one (1024, 10) weight) + softmax.
    logits = jnp.dot(flat_ref[...], wc_ref[...],
                     preferred_element_type=jnp.float32) + bc_ref[...]       # (TB, 10)
    z = logits - jnp.max(logits, axis=1, keepdims=True)
    e = jnp.exp(z)
    o_ref[...] = e * pl.reciprocal(jnp.sum(e, axis=1, keepdims=True), approx=True)


# ----------------------------------------------------------------------------- wrapper
def cnn1d_forward(x, p, eps=1e-5, tile_b=16):
    B = x.shape[0]
    assert x.shape[1:] == (1, 128)
    assert tile_b % 8 == 0
    TB = max(8, min(tile_b, ((B + 7) // 8) * 8))          # batch tile (multiple of 8)
    padded_B = -(-B // TB) * TB

    x2d = x[:, 0, :]                                      # (B, 128), in_channels == 1
    if padded_B != B:
        x2d = jnp.pad(x2d, ((0, padded_B - B), (0, 0)))

    # Fold BN running stats + conv bias into per-channel scale/shift, expanded per row
    # (row index = channel * TB + sample-in-tile).
    sc1 = p["g1"] / jnp.sqrt(p["v1"] + eps)
    sh1 = (p["b1"] - p["m1"]) * sc1 + p["beta1"]
    sc2 = p["g2"] / jnp.sqrt(p["v2"] + eps)
    sh2 = (p["b2"] - p["m2"]) * sc2 + p["beta2"]
    sc1r = jnp.repeat(sc1, TB)[:, None]                   # (16*TB, 1)
    sh1r = jnp.repeat(sh1, TB)[:, None]
    sc2r = jnp.repeat(sc2, TB)[:, None]                   # (32*TB, 1)
    sh2r = jnp.repeat(sh2, TB)[:, None]

    # Batch-block-diagonal conv weights (contraction over (tap, channel_in, sample)).
    eyeB = jnp.eye(TB, dtype=jnp.float32)
    w1 = p["w1"][:, 0, :]                                 # (16, 15)      [c_out, tap]
    M1 = (w1[:, None, :, None] * eyeB[None, :, None, :]).reshape(16 * TB, 15 * TB)
    w2t = jnp.transpose(p["w2"], (0, 2, 1))               # (32, 5, 16)   [c_out, tap, c_in]
    M2 = (w2t[:, None, :, :, None] * eyeB[None, :, None, None, :]
          ).reshape(32 * TB, 5 * 16 * TB)

    # Even-lane selection matrices for MaxPool1d(2, 2).
    S1 = (jnp.arange(128)[:, None] == 2 * jnp.arange(64)[None, :]).astype(jnp.float32)
    S2 = (jnp.arange(64)[:, None] == 2 * jnp.arange(32)[None, :]).astype(jnp.float32)

    # Collapse fc1/fc2 (no nonlinearity between them): one (1024, 10) weight + bias.
    Wc = jnp.dot(p["w3"].T, p["w4"].T, precision=jax.lax.Precision.HIGHEST)   # (1024, 10)
    bc = (jnp.dot(p["b3"], p["w4"].T, precision=jax.lax.Precision.HIGHEST)
          + p["b4"])[None, :]                                                 # (1, 10)

    out = pl.pallas_call(
        cnn1d_kernel,
        out_shape=jax.ShapeDtypeStruct((padded_B, 10), jnp.float32),
        grid=(padded_B // TB,),
        in_specs=[
            pl.BlockSpec((TB, 128), lambda i: (i, 0)),                 # x tile
            pl.BlockSpec((16 * TB, 15 * TB), lambda i: (0, 0)),        # conv1 weights
            pl.BlockSpec((16 * TB, 1), lambda i: (0, 0)),              # bn1 scale
            pl.BlockSpec((16 * TB, 1), lambda i: (0, 0)),              # bn1 shift
            pl.BlockSpec((128, 64), lambda i: (0, 0)),                 # pool1 select
            pl.BlockSpec((32 * TB, 5 * 16 * TB), lambda i: (0, 0)),    # conv2 weights
            pl.BlockSpec((32 * TB, 1), lambda i: (0, 0)),              # bn2 scale
            pl.BlockSpec((32 * TB, 1), lambda i: (0, 0)),              # bn2 shift
            pl.BlockSpec((64, 32), lambda i: (0, 0)),                  # pool2 select
            pl.BlockSpec((1024, 10), lambda i: (0, 0)),                # folded fc weight
            pl.BlockSpec((1, 10), lambda i: (0, 0)),                   # folded fc bias
        ],
        out_specs=pl.BlockSpec((TB, 10), lambda i: (i, 0)),
        scratch_shapes=[pltpu.VMEM((TB, 1024), jnp.float32)],          # flatten buffer
        compiler_params=pltpu.CompilerParams(dimension_semantics=("parallel",)),
    )(x2d, M1, sc1r, sh1r, S1, M2, sc2r, sh2r, S2, Wc, bc)
    return out[:B]


# ----------------------------------------------------------------------------- params / reference
def init_params(key):
    ks = jax.random.split(key, 16)
    p = {}
    p["w1"] = 0.1 * jax.random.normal(ks[0], (16, 1, 15), jnp.float32)
    p["b1"] = 0.1 * jax.random.normal(ks[1], (16,), jnp.float32)
    p["g1"] = 1.0 + 0.1 * jax.random.normal(ks[2], (16,), jnp.float32)
    p["beta1"] = 0.1 * jax.random.normal(ks[3], (16,), jnp.float32)
    p["m1"] = 0.1 * jax.random.normal(ks[4], (16,), jnp.float32)
    p["v1"] = 0.5 + jnp.abs(0.2 * jax.random.normal(ks[5], (16,), jnp.float32))
    p["w2"] = 0.1 * jax.random.normal(ks[6], (32, 16, 5), jnp.float32)
    p["b2"] = 0.1 * jax.random.normal(ks[7], (32,), jnp.float32)
    p["g2"] = 1.0 + 0.1 * jax.random.normal(ks[8], (32,), jnp.float32)
    p["beta2"] = 0.1 * jax.random.normal(ks[9], (32,), jnp.float32)
    p["m2"] = 0.1 * jax.random.normal(ks[10], (32,), jnp.float32)
    p["v2"] = 0.5 + jnp.abs(0.2 * jax.random.normal(ks[11], (32,), jnp.float32))
    p["w3"] = 0.03 * jax.random.normal(ks[12], (128, 1024), jnp.float32)   # torch (out, in)
    p["b3"] = 0.05 * jax.random.normal(ks[13], (128,), jnp.float32)
    p["w4"] = 0.05 * jax.random.normal(ks[14], (10, 128), jnp.float32)
    p["b4"] = 0.05 * jax.random.normal(ks[15], (10,), jnp.float32)
    return p


def reference_forward(x, p, eps=1e-5):
    """Pure-JAX reference reproducing the PyTorch forward (BN in inference mode)."""
    B = x.shape[0]
    h = x[:, 0, :]                                                     # (B, 128)
    y = jnp.zeros((B, 16, 128), jnp.float32)
    for t in range(15):                                                # circular conv1
        y = y + p["w1"][None, :, 0, t, None] * jnp.roll(h, 7 - t, axis=-1)[:, None, :]
    y = y + p["b1"][None, :, None]
    y = (y - p["m1"][None, :, None]) / jnp.sqrt(p["v1"] + eps)[None, :, None] \
        * p["g1"][None, :, None] + p["beta1"][None, :, None]
    y = jnp.where(y > 0, y, 0.01 * y)
    y = jnp.max(y.reshape(B, 16, 64, 2), axis=-1)                      # maxpool 2,2

    z = jnp.zeros((B, 32, 64), jnp.float32)
    for t in range(5):                                                 # circular conv2
        z = z + jnp.einsum("oi,bil->bol", p["w2"][:, :, t], jnp.roll(y, 2 - t, axis=-1))
    z = z + p["b2"][None, :, None]
    z = (z - p["m2"][None, :, None]) / jnp.sqrt(p["v2"] + eps)[None, :, None] \
        * p["g2"][None, :, None] + p["beta2"][None, :, None]
    z = jnp.where(z > 0, z, 0.01 * z)
    z = jnp.max(z.reshape(B, 32, 32, 2), axis=-1)                      # (B, 32, 32)

    flat = z.reshape(B, 32 * 32)
    l1 = flat @ p["w3"].T + p["b3"]
    l2 = l1 @ p["w4"].T + p["b4"]
    return jax.nn.softmax(l2, axis=1)


if __name__ == "__main__":
    key = jax.random.PRNGKey(0)
    kx, kp = jax.random.split(key)
    # (B, C_in, L) = (2, 1, 128): L=128 is implied by the Linear(32*32, 128) classifier.
    x = jax.random.normal(kx, (2, 1, 128), jnp.float32)
    params = init_params(kp)

    fwd = jax.jit(lambda xx: cnn1d_forward(xx, params))
    out = jax.block_until_ready(fwd(x))

    ref = reference_forward(x, params)
    assert out.shape == (2, 10)
    err = float(jnp.max(jnp.abs(out - ref)))
    assert err < 2e-3, f"kernel/reference mismatch: max abs err = {err}"
    print("KERNEL_OK")
</pallas_src>

<mosaic_0001>
module attributes {stable_mosaic.version = 11 : i64} {
  func.func @cnn1d_kernel(%arg0: i32, %arg1: memref<8x128xf32, #tpu.memory_space<vmem>>, %arg2: memref<128x120xf32, #tpu.memory_space<vmem>>, %arg3: memref<128x1xf32, #tpu.memory_space<vmem>>, %arg4: memref<128x1xf32, #tpu.memory_space<vmem>>, %arg5: memref<128x64xf32, #tpu.memory_space<vmem>>, %arg6: memref<256x640xf32, #tpu.memory_space<vmem>>, %arg7: memref<256x1xf32, #tpu.memory_space<vmem>>, %arg8: memref<256x1xf32, #tpu.memory_space<vmem>>, %arg9: memref<64x32xf32, #tpu.memory_space<vmem>>, %arg10: memref<1024x10xf32, #tpu.memory_space<vmem>>, %arg11: memref<1x10xf32, #tpu.memory_space<vmem>>, %arg12: memref<8x10xf32, #tpu.memory_space<vmem>>, %arg13: memref<8x1024xf32, #tpu.memory_space<vmem>>) attributes {dimension_semantics = [#tpu.dimension_semantics<parallel>], iteration_bounds = array<i64: 1>, scalar_prefetch = 0 : i64, scratch_operands = 1 : i64, tpu.core_type = #tpu.core_type<tc>, window_params = [{transform_indices = @transform_0, window_bounds = array<i64: 8, 128>}, {pipeline_mode = #tpu.pipeline_mode<synchronous>, transform_indices = @transform_1, window_bounds = array<i64: 128, 120>}, {pipeline_mode = #tpu.pipeline_mode<synchronous>, transform_indices = @transform_2, window_bounds = array<i64: 128, 1>}, {pipeline_mode = #tpu.pipeline_mode<synchronous>, transform_indices = @transform_3, window_bounds = array<i64: 128, 1>}, {pipeline_mode = #tpu.pipeline_mode<synchronous>, transform_indices = @transform_4, window_bounds = array<i64: 128, 64>}, {pipeline_mode = #tpu.pipeline_mode<synchronous>, transform_indices = @transform_5, window_bounds = array<i64: 256, 640>}, {pipeline_mode = #tpu.pipeline_mode<synchronous>, transform_indices = @transform_6, window_bounds = array<i64: 256, 1>}, {pipeline_mode = #tpu.pipeline_mode<synchronous>, transform_indices = @transform_7, window_bounds = array<i64: 256, 1>}, {pipeline_mode = #tpu.pipeline_mode<synchronous>, transform_indices = @transform_8, window_bounds = array<i64: 64, 32>}, {pipeline_mode = #tpu.pipeline_mode<synchronous>, transform_indices = @transform_9, window_bounds = array<i64: 1024, 10>}, {pipeline_mode = #tpu.pipeline_mode<synchronous>, transform_indices = @transform_10, window_bounds = array<i64: 1, 10>}, {transform_indices = @transform_11, window_bounds = array<i64: 8, 10>}]} {
    %c0 = arith.constant 0 : index
    %c0_0 = arith.constant 0 : index
    %0 = vector.load %arg1[%c0, %c0_0] : memref<8x128xf32, #tpu.memory_space<vmem>>, vector<8x128xf32>
    %1 = vector.extract_strided_slice %0 {offsets = [0, 121], sizes = [8, 7], strides = [1, 1]} : vector<8x128xf32> to vector<8x7xf32>
    %2 = vector.extract_strided_slice %0 {offsets = [0, 0], sizes = [8, 121], strides = [1, 1]} : vector<8x128xf32> to vector<8x121xf32>
    %3 = tpu.concatenate %1, %2 in 1 : vector<8x7xf32>, vector<8x121xf32> -> vector<8x128xf32>
    %4 = vector.extract_strided_slice %0 {offsets = [0, 122], sizes = [8, 6], strides = [1, 1]} : vector<8x128xf32> to vector<8x6xf32>
    %5 = vector.extract_strided_slice %0 {offsets = [0, 0], sizes = [8, 122], strides = [1, 1]} : vector<8x128xf32> to vector<8x122xf32>
    %6 = tpu.concatenate %4, %5 in 1 : vector<8x6xf32>, vector<8x122xf32> -> vector<8x128xf32>
    %7 = vector.extract_strided_slice %0 {offsets = [0, 123], sizes = [8, 5], strides = [1, 1]} : vector<8x128xf32> to vector<8x5xf32>
    %8 = vector.extract_strided_slice %0 {offsets = [0, 0], sizes = [8, 123], strides = [1, 1]} : vector<8x128xf32> to vector<8x123xf32>
    %9 = tpu.concatenate %7, %8 in 1 : vector<8x5xf32>, vector<8x123xf32> -> vector<8x128xf32>
    %10 = vector.extract_strided_slice %0 {offsets = [0, 124], sizes = [8, 4], strides = [1, 1]} : vector<8x128xf32> to vector<8x4xf32>
    %11 = vector.extract_strided_slice %0 {offsets = [0, 0], sizes = [8, 124], strides = [1, 1]} : vector<8x128xf32> to vector<8x124xf32>
    %12 = tpu.concatenate %10, %11 in 1 : vector<8x4xf32>, vector<8x124xf32> -> vector<8x128xf32>
    %13 = vector.extract_strided_slice %0 {offsets = [0, 125], sizes = [8, 3], strides = [1, 1]} : vector<8x128xf32> to vector<8x3xf32>
    %14 = vector.extract_strided_slice %0 {offsets = [0, 0], sizes = [8, 125], strides = [1, 1]} : vector<8x128xf32> to vector<8x125xf32>
    %15 = tpu.concatenate %13, %14 in 1 : vector<8x3xf32>, vector<8x125xf32> -> vector<8x128xf32>
    %16 = vector.extract_strided_slice %0 {offsets = [0, 126], sizes = [8, 2], strides = [1, 1]} : vector<8x128xf32> to vector<8x2xf32>
    %17 = vector.extract_strided_slice %0 {offsets = [0, 0], sizes = [8, 126], strides = [1, 1]} : vector<8x128xf32> to vector<8x126xf32>
    %18 = tpu.concatenate %16, %17 in 1 : vector<8x2xf32>, vector<8x126xf32> -> vector<8x128xf32>
    %19 = vector.extract_strided_slice %0 {offsets = [0, 127], sizes = [8, 1], strides = [1, 1]} : vector<8x128xf32> to vector<8x1xf32>
    %20 = vector.extract_strided_slice %0 {offsets = [0, 0], sizes = [8, 127], strides = [1, 1]} : vector<8x128xf32> to vector<8x127xf32>
    %21 = tpu.concatenate %19, %20 in 1 : vector<8x1xf32>, vector<8x127xf32> -> vector<8x128xf32>
    %22 = vector.extract_strided_slice %0 {offsets = [0, 1], sizes = [8, 127], strides = [1, 1]} : vector<8x128xf32> to vector<8x127xf32>
    %23 = vector.extract_strided_slice %0 {offsets = [0, 0], sizes = [8, 1], strides = [1, 1]} : vector<8x128xf32> to vector<8x1xf32>
    %24 = tpu.concatenate %22, %23 in 1 : vector<8x127xf32>, vector<8x1xf32> -> vector<8x128xf32>
    %25 = vector.extract_strided_slice %0 {offsets = [0, 2], sizes = [8, 126], strides = [1, 1]} : vector<8x128xf32> to vector<8x126xf32>
    %26 = vector.extract_strided_slice %0 {offsets = [0, 0], sizes = [8, 2], strides = [1, 1]} : vector<8x128xf32> to vector<8x2xf32>
    %27 = tpu.concatenate %25, %26 in 1 : vector<8x126xf32>, vector<8x2xf32> -> vector<8x128xf32>
    %28 = vector.extract_strided_slice %0 {offsets = [0, 3], sizes = [8, 125], strides = [1, 1]} : vector<8x128xf32> to vector<8x125xf32>
    %29 = vector.extract_strided_slice %0 {offsets = [0, 0], sizes = [8, 3], strides = [1, 1]} : vector<8x128xf32> to vector<8x3xf32>
    %30 = tpu.concatenate %28, %29 in 1 : vector<8x125xf32>, vector<8x3xf32> -> vector<8x128xf32>
    %31 = vector.extract_strided_slice %0 {offsets = [0, 4], sizes = [8, 124], strides = [1, 1]} : vector<8x128xf32> to vector<8x124xf32>
    %32 = vector.extract_strided_slice %0 {offsets = [0, 0], sizes = [8, 4], strides = [1, 1]} : vector<8x128xf32> to vector<8x4xf32>
    %33 = tpu.concatenate %31, %32 in 1 : vector<8x124xf32>, vector<8x4xf32> -> vector<8x128xf32>
    %34 = vector.extract_strided_slice %0 {offsets = [0, 5], sizes = [8, 123], strides = [1, 1]} : vector<8x128xf32> to vector<8x123xf32>
    %35 = vector.extract_strided_slice %0 {offsets = [0, 0], sizes = [8, 5], strides = [1, 1]} : vector<8x128xf32> to vector<8x5xf32>
    %36 = tpu.concatenate %34, %35 in 1 : vector<8x123xf32>, vector<8x5xf32> -> vector<8x128xf32>
    %37 = vector.extract_strided_slice %0 {offsets = [0, 6], sizes = [8, 122], strides = [1, 1]} : vector<8x128xf32> to vector<8x122xf32>
    %38 = vector.extract_strided_slice %0 {offsets = [0, 0], sizes = [8, 6], strides = [1, 1]} : vector<8x128xf32> to vector<8x6xf32>
    %39 = tpu.concatenate %37, %38 in 1 : vector<8x122xf32>, vector<8x6xf32> -> vector<8x128xf32>
    %40 = vector.extract_strided_slice %0 {offsets = [0, 7], sizes = [8, 121], strides = [1, 1]} : vector<8x128xf32> to vector<8x121xf32>
    %41 = vector.extract_strided_slice %0 {offsets = [0, 0], sizes = [8, 7], strides = [1, 1]} : vector<8x128xf32> to vector<8x7xf32>
    %42 = tpu.concatenate %40, %41 in 1 : vector<8x121xf32>, vector<8x7xf32> -> vector<8x128xf32>
    %43 = tpu.concatenate %3, %6, %9, %12, %15, %18, %21, %0, %24, %27, %30, %33, %36, %39, %42 in 0 : vector<8x128xf32>, vector<8x128xf32>, vector<8x128xf32>, vector<8x128xf32>, vector<8x128xf32>, vector<8x128xf32>, vector<8x128xf32>, vector<8x128xf32>, vector<8x128xf32>, vector<8x128xf32>, vector<8x128xf32>, vector<8x128xf32>, vector<8x128xf32>, vector<8x128xf32>, vector<8x128xf32> -> vector<120x128xf32>
    %c0_1 = arith.constant 0 : index
    %c0_2 = arith.constant 0 : index
    %44 = vector.load %arg2[%c0_1, %c0_2] : memref<128x120xf32, #tpu.memory_space<vmem>>, vector<128x120xf32>
    %cst = arith.constant dense<0.000000e+00> : vector<128x128xf32>
    %45 = tpu.matmul %44, %43, %cst {dimension_numbers = #tpu.dot_dimension_numbers<[1], [0], [0], [1], [0, 0, 1, 1], [], []>} : vector<128x120xf32>, vector<120x128xf32>, vector<128x128xf32> -> vector<128x128xf32>
    %c0_3 = arith.constant 0 : index
    %c0_4 = arith.constant 0 : index
    %46 = vector.load %arg3[%c0_3, %c0_4] : memref<128x1xf32, #tpu.memory_space<vmem>>, vector<128x1xf32>
    %47 = vector.broadcast %46 : vector<128x1xf32> to vector<128x128xf32>
    %48 = arith.mulf %45, %47 : vector<128x128xf32>
    %c0_5 = arith.constant 0 : index
    %c0_6 = arith.constant 0 : index
    %49 = vector.load %arg4[%c0_5, %c0_6] : memref<128x1xf32, #tpu.memory_space<vmem>>, vector<128x1xf32>
    %50 = vector.broadcast %49 : vector<128x1xf32> to vector<128x128xf32>
    %51 = arith.addf %48, %50 : vector<128x128xf32>
    %cst_7 = arith.constant 0.000000e+00 : f32
    %52 = vector.broadcast %cst_7 : f32 to vector<128x128xf32>
    %53 = arith.cmpf ogt, %51, %52 : vector<128x128xf32>
    %cst_8 = arith.constant 0.00999999977 : f32
    %54 = vector.broadcast %cst_8 : f32 to vector<128x128xf32>
    %55 = arith.mulf %54, %51 : vector<128x128xf32>
    %56 = arith.select %53, %51, %55 : vector<128x128xi1>, vector<128x128xf32>
    %57 = vector.extract_strided_slice %56 {offsets = [0, 1], sizes = [128, 127], strides = [1, 1]} : vector<128x128xf32> to vector<128x127xf32>
    %58 = vector.extract_strided_slice %56 {offsets = [0, 0], sizes = [128, 1], strides = [1, 1]} : vector<128x128xf32> to vector<128x1xf32>
    %59 = tpu.concatenate %57, %58 in 1 : vector<128x127xf32>, vector<128x1xf32> -> vector<128x128xf32>
    %60 = arith.maximumf %56, %59 : vector<128x128xf32>
    %c0_9 = arith.constant 0 : index
    %c0_10 = arith.constant 0 : index
    %61 = vector.load %arg5[%c0_9, %c0_10] : memref<128x64xf32, #tpu.memory_space<vmem>>, vector<128x64xf32>
    %cst_11 = arith.constant dense<0.000000e+00> : vector<128x64xf32>
    %62 = tpu.matmul %60, %61, %cst_11 {dimension_numbers = #tpu.dot_dimension_numbers<[1], [0], [0], [1], [0, 0, 1, 1], [], []>} : vector<128x128xf32>, vector<128x64xf32>, vector<128x64xf32> -> vector<128x64xf32>
    %63 = vector.extract_strided_slice %62 {offsets = [0, 62], sizes = [128, 2], strides = [1, 1]} : vector<128x64xf32> to vector<128x2xf32>
    %64 = vector.extract_strided_slice %62 {offsets = [0, 0], sizes = [128, 62], strides = [1, 1]} : vector<128x64xf32> to vector<128x62xf32>
    %65 = tpu.concatenate %63, %64 in 1 : vector<128x2xf32>, vector<128x62xf32> -> vector<128x64xf32>
    %66 = vector.extract_strided_slice %62 {offsets = [0, 63], sizes = [128, 1], strides = [1, 1]} : vector<128x64xf32> to vector<128x1xf32>
    %67 = vector.extract_strided_slice %62 {offsets = [0, 0], sizes = [128, 63], strides = [1, 1]} : vector<128x64xf32> to vector<128x63xf32>
    %68 = tpu.concatenate %66, %67 in 1 : vector<128x1xf32>, vector<128x63xf32> -> vector<128x64xf32>
    %69 = vector.extract_strided_slice %62 {offsets = [0, 1], sizes = [128, 63], strides = [1, 1]} : vector<128x64xf32> to vector<128x63xf32>
    %70 = vector.extract_strided_slice %62 {offsets = [0, 0], sizes = [128, 1], strides = [1, 1]} : vector<128x64xf32> to vector<128x1xf32>
    %71 = tpu.concatenate %69, %70 in 1 : vector<128x63xf32>, vector<128x1xf32> -> vector<128x64xf32>
    %72 = vector.extract_strided_slice %62 {offsets = [0, 2], sizes = [128, 62], strides = [1, 1]} : vector<128x64xf32> to vector<128x62xf32>
    %73 = vector.extract_strided_slice %62 {offsets = [0, 0], sizes = [128, 2], strides = [1, 1]} : vector<128x64xf32> to vector<128x2xf32>
    %74 = tpu.concatenate %72, %73 in 1 : vector<128x62xf32>, vector<128x2xf32> -> vector<128x64xf32>
    %75 = tpu.concatenate %65, %68, %62, %71, %74 in 0 : vector<128x64xf32>, vector<128x64xf32>, vector<128x64xf32>, vector<128x64xf32>, vector<128x64xf32> -> vector<640x64xf32>
    %c0_12 = arith.constant 0 : index
    %c0_13 = arith.constant 0 : index
    %76 = vector.load %arg6[%c0_12, %c0_13] : memref<256x640xf32, #tpu.memory_space<vmem>>, vector<256x640xf32>
    %cst_14 = arith.constant dense<0.000000e+00> : vector<256x64xf32>
    %77 = tpu.matmul %76, %75, %cst_14 {dimension_numbers = #tpu.dot_dimension_numbers<[1], [0], [0], [1], [0, 0, 1, 1], [], []>} : vector<256x640xf32>, vector<640x64xf32>, vector<256x64xf32> -> vector<256x64xf32>
    %c0_15 = arith.constant 0 : index
    %c0_16 = arith.constant 0 : index
    %78 = vector.load %arg7[%c0_15, %c0_16] : memref<256x1xf32, #tpu.memory_space<vmem>>, vector<256x1xf32>
    %79 = vector.broadcast %78 : vector<256x1xf32> to vector<256x64xf32>
    %80 = arith.mulf %77, %79 : vector<256x64xf32>
    %c0_17 = arith.constant 0 : index
    %c0_18 = arith.constant 0 : index
    %81 = vector.load %arg8[%c0_17, %c0_18] : memref<256x1xf32, #tpu.memory_space<vmem>>, vector<256x1xf32>
    %82 = vector.broadcast %81 : vector<256x1xf32> to vector<256x64xf32>
    %83 = arith.addf %80, %82 : vector<256x64xf32>
    %cst_19 = arith.constant 0.000000e+00 : f32
    %84 = vector.broadcast %cst_19 : f32 to vector<256x64xf32>
    %85 = arith.cmpf ogt, %83, %84 : vector<256x64xf32>
    %cst_20 = arith.constant 0.00999999977 : f32
    %86 = vector.broadcast %cst_20 : f32 to vector<256x64xf32>
    %87 = arith.mulf %86, %83 : vector<256x64xf32>
    %88 = arith.select %85, %83, %87 : vector<256x64xi1>, vector<256x64xf32>
    %89 = vector.extract_strided_slice %88 {offsets = [0, 1], sizes = [256, 63], strides = [1, 1]} : vector<256x64xf32> to vector<256x63xf32>
    %90 = vector.extract_strided_slice %88 {offsets = [0, 0], sizes = [256, 1], strides = [1, 1]} : vector<256x64xf32> to vector<256x1xf32>
    %91 = tpu.concatenate %89, %90 in 1 : vector<256x63xf32>, vector<256x1xf32> -> vector<256x64xf32>
    %92 = arith.maximumf %88, %91 : vector<256x64xf32>
    %c0_21 = arith.constant 0 : index
    %c0_22 = arith.constant 0 : index
    %93 = vector.load %arg9[%c0_21, %c0_22] : memref<64x32xf32, #tpu.memory_space<vmem>>, vector<64x32xf32>
    %cst_23 = arith.constant dense<0.000000e+00> : vector<256x32xf32>
    %94 = tpu.matmul %92, %93, %cst_23 {dimension_numbers = #tpu.dot_dimension_numbers<[1], [0], [0], [1], [0, 0, 1, 1], [], []>} : vector<256x64xf32>, vector<64x32xf32>, vector<256x32xf32> -> vector<256x32xf32>
    %95 = vector.extract_strided_slice %94 {offsets = [0, 0], sizes = [8, 32], strides = [1, 1]} : vector<256x32xf32> to vector<8x32xf32>
    %c0_24 = arith.constant 0 : index
    %c0_25 = arith.constant 0 : index
    %96 = vector.load %arg13[%c0_24, %c0_25] : memref<8x1024xf32, #tpu.memory_space<vmem>>, vector<8x32xf32>
    tpu.vector_store %arg13[%c0_24, %c0_25], %95 {strides = array<i32>} : memref<8x1024xf32, #tpu.memory_space<vmem>>, vector<8x32xf32>,
    %97 = vector.extract_strided_slice %94 {offsets = [8, 0], sizes = [8, 32], strides = [1, 1]} : vector<256x32xf32> to vector<8x32xf32>
    %c0_26 = arith.constant 0 : index
    %c32 = arith.constant 32 : index
    %98 = vector.load %arg13[%c0_26, %c32] : memref<8x1024xf32, #tpu.memory_space<vmem>>, vector<8x32xf32>
    tpu.vector_store %arg13[%c0_26, %c32], %97 {strides = array<i32>} : memref<8x1024xf32, #tpu.memory_space<vmem>>, vector<8x32xf32>,
    %99 = vector.extract_strided_slice %94 {offsets = [16, 0], sizes = [8, 32], strides = [1, 1]} : vector<256x32xf32> to vector<8x32xf32>
    %c0_27 = arith.constant 0 : index
    %c64 = arith.constant 64 : index
    %100 = vector.load %arg13[%c0_27, %c64] : memref<8x1024xf32, #tpu.memory_space<vmem>>, vector<8x32xf32>
    tpu.vector_store %arg13[%c0_27, %c64], %99 {strides = array<i32>} : memref<8x1024xf32, #tpu.memory_space<vmem>>, vector<8x32xf32>,
    %101 = vector.extract_strided_slice %94 {offsets = [24, 0], sizes = [8, 32], strides = [1, 1]} : vector<256x32xf32> to vector<8x32xf32>
    %c0_28 = arith.constant 0 : index
    %c96 = arith.constant 96 : index
    %102 = vector.load %arg13[%c0_28, %c96] : memref<8x1024xf32, #tpu.memory_space<vmem>>, vector<8x32xf32>
    tpu.vector_store %arg13[%c0_28, %c96], %101 {strides = array<i32>} : memref<8x1024xf32, #tpu.memory_space<vmem>>, vector<8x32xf32>,
    %103 = vector.extract_strided_slice %94 {offsets = [32, 0], sizes = [8, 32], strides = [1, 1]} : vector<256x32xf32> to vector<8x32xf32>
    %c0_29 = arith.constant 0 : index
    %c128 = arith.constant 128 : index
    %104 = vector.load %arg13[%c0_29, %c128] : memref<8x1024xf32, #tpu.memory_space<vmem>>, vector<8x32xf32>
    tpu.vector_store %arg13[%c0_29, %c128], %103 {strides = array<i32>} : memref<8x1024xf32, #tpu.memory_space<vmem>>, vector<8x32xf32>,
    %105 = vector.extract_strided_slice %94 {offsets = [40, 0], sizes = [8, 32], strides = [1, 1]} : vector<256x32xf32> to vector<8x32xf32>
    %c0_30 = arith.constant 0 : index
    %c160 = arith.constant 160 : index
    %106 = vector.load %arg13[%c0_30, %c160] : memref<8x1024xf32, #tpu.memory_space<vmem>>, vector<8x32xf32>
    tpu.vector_store %arg13[%c0_30, %c160], %105 {strides = array<i32>} : memref<8x1024xf32, #tpu.memory_space<vmem>>, vector<8x32xf32>,
    %107 = vector.extract_strided_slice %94 {offsets = [48, 0], sizes = [8, 32], strides = [1, 1]} : vector<256x32xf32> to vector<8x32xf32>
    %c0_31 = arith.constant 0 : index
    %c192 = arith.constant 192 : index
    %108 = vector.load %arg13[%c0_31, %c192] : memref<8x1024xf32, #tpu.memory_space<vmem>>, vector<8x32xf32>
    tpu.vector_store %arg13[%c0_31, %c192], %107 {strides = array<i32>} : memref<8x1024xf32, #tpu.memory_space<vmem>>, vector<8x32xf32>,
    %109 = vector.extract_strided_slice %94 {offsets = [56, 0], sizes = [8, 32], strides = [1, 1]} : vector<256x32xf32> to vector<8x32xf32>
    %c0_32 = arith.constant 0 : index
    %c224 = arith.constant 224 : index
    %110 = vector.load %arg13[%c0_32, %c224] : memref<8x1024xf32, #tpu.memory_space<vmem>>, vector<8x32xf32>
    tpu.vector_store %arg13[%c0_32, %c224], %109 {strides = array<i32>} : memref<8x1024xf32, #tpu.memory_space<vmem>>, vector<8x32xf32>,
    %111 = vector.extract_strided_slice %94 {offsets = [64, 0], sizes = [8, 32], strides = [1, 1]} : vector<256x32xf32> to vector<8x32xf32>
    %c0_33 = arith.constant 0 : index
    %c256 = arith.constant 256 : index
    %112 = vector.load %arg13[%c0_33, %c256] : memref<8x1024xf32, #tpu.memory_space<vmem>>, vector<8x32xf32>
    tpu.vector_store %arg13[%c0_33, %c256], %111 {strides = array<i32>} : memref<8x1024xf32, #tpu.memory_space<vmem>>, vector<8x32xf32>,
    %113 = vector.extract_strided_slice %94 {offsets = [72, 0], sizes = [8, 32], strides = [1, 1]} : vector<256x32xf32> to vector<8x32xf32>
    %c0_34 = arith.constant 0 : index
    %c288 = arith.constant 288 : index
    %114 = vector.load %arg13[%c0_34, %c288] : memref<8x1024xf32, #tpu.memory_space<vmem>>, vector<8x32xf32>
    tpu.vector_store %arg13[%c0_34, %c288], %113 {strides = array<i32>} : memref<8x1024xf32, #tpu.memory_space<vmem>>, vector<8x32xf32>,
    %115 = vector.extract_strided_slice %94 {offsets = [80, 0], sizes = [8, 32], strides = [1, 1]} : vector<256x32xf32> to vector<8x32xf32>
    %c0_35 = arith.constant 0 : index
    %c320 = arith.constant 320 : index
    %116 = vector.load %arg13[%c0_35, %c320] : memref<8x1024xf32, #tpu.memory_space<vmem>>, vector<8x32xf32>
    tpu.vector_store %arg13[%c0_35, %c320], %115 {strides = array<i32>} : memref<8x1024xf32, #tpu.memory_space<vmem>>, vector<8x32xf32>,
    %117 = vector.extract_strided_slice %94 {offsets = [88, 0], sizes = [8, 32], strides = [1, 1]} : vector<256x32xf32> to vector<8x32xf32>
    %c0_36 = arith.constant 0 : index
    %c352 = arith.constant 352 : index
    %118 = vector.load %arg13[%c0_36, %c352] : memref<8x1024xf32, #tpu.memory_space<vmem>>, vector<8x32xf32>
    tpu.vector_store %arg13[%c0_36, %c352], %117 {strides = array<i32>} : memref<8x1024xf32, #tpu.memory_space<vmem>>, vector<8x32xf32>,
    %119 = vector.extract_strided_slice %94 {offsets = [96, 0], sizes = [8, 32], strides = [1, 1]} : vector<256x32xf32> to vector<8x32xf32>
    %c0_37 = arith.constant 0 : index
    %c384 = arith.constant 384 : index
    %120 = vector.load %arg13[%c0_37, %c384] : memref<8x1024xf32, #tpu.memory_space<vmem>>, vector<8x32xf32>
    tpu.vector_store %arg13[%c0_37, %c384], %119 {strides = array<i32>} : memref<8x1024xf32, #tpu.memory_space<vmem>>, vector<8x32xf32>,
    %121 = vector.extract_strided_slice %94 {offsets = [104, 0], sizes = [8, 32], strides = [1, 1]} : vector<256x32xf32> to vector<8x32xf32>
    %c0_38 = arith.constant 0 : index
    %c416 = arith.constant 416 : index
    %122 = vector.load %arg13[%c0_38, %c416] : memref<8x1024xf32, #tpu.memory_space<vmem>>, vector<8x32xf32>
    tpu.vector_store %arg13[%c0_38, %c416], %121 {strides = array<i32>} : memref<8x1024xf32, #tpu.memory_space<vmem>>, vector<8x32xf32>,
    %123 = vector.extract_strided_slice %94 {offsets = [112, 0], sizes = [8, 32], strides = [1, 1]} : vector<256x32xf32> to vector<8x32xf32>
    %c0_39 = arith.constant 0 : index
    %c448 = arith.constant 448 : index
    %124 = vector.load %arg13[%c0_39, %c448] : memref<8x1024xf32, #tpu.memory_space<vmem>>, vector<8x32xf32>
    tpu.vector_store %arg13[%c0_39, %c448], %123 {strides = array<i32>} : memref<8x1024xf32, #tpu.memory_space<vmem>>, vector<8x32xf32>,
    %125 = vector.extract_strided_slice %94 {offsets = [120, 0], sizes = [8, 32], strides = [1, 1]} : vector<256x32xf32> to vector<8x32xf32>
    %c0_40 = arith.constant 0 : index
    %c480 = arith.constant 480 : index
    %126 = vector.load %arg13[%c0_40, %c480] : memref<8x1024xf32, #tpu.memory_space<vmem>>, vector<8x32xf32>
    tpu.vector_store %arg13[%c0_40, %c480], %125 {strides = array<i32>} : memref<8x1024xf32, #tpu.memory_space<vmem>>, vector<8x32xf32>,
    %127 = vector.extract_strided_slice %94 {offsets = [128, 0], sizes = [8, 32], strides = [1, 1]} : vector<256x32xf32> to vector<8x32xf32>
    %c0_41 = arith.constant 0 : index
    %c512 = arith.constant 512 : index
    %128 = vector.load %arg13[%c0_41, %c512] : memref<8x1024xf32, #tpu.memory_space<vmem>>, vector<8x32xf32>
    tpu.vector_store %arg13[%c0_41, %c512], %127 {strides = array<i32>} : memref<8x1024xf32, #tpu.memory_space<vmem>>, vector<8x32xf32>,
    %129 = vector.extract_strided_slice %94 {offsets = [136, 0], sizes = [8, 32], strides = [1, 1]} : vector<256x32xf32> to vector<8x32xf32>
    %c0_42 = arith.constant 0 : index
    %c544 = arith.constant 544 : index
    %130 = vector.load %arg13[%c0_42, %c544] : memref<8x1024xf32, #tpu.memory_space<vmem>>, vector<8x32xf32>
    tpu.vector_store %arg13[%c0_42, %c544], %129 {strides = array<i32>} : memref<8x1024xf32, #tpu.memory_space<vmem>>, vector<8x32xf32>,
    %131 = vector.extract_strided_slice %94 {offsets = [144, 0], sizes = [8, 32], strides = [1, 1]} : vector<256x32xf32> to vector<8x32xf32>
    %c0_43 = arith.constant 0 : index
    %c576 = arith.constant 576 : index
    %132 = vector.load %arg13[%c0_43, %c576] : memref<8x1024xf32, #tpu.memory_space<vmem>>, vector<8x32xf32>
    tpu.vector_store %arg13[%c0_43, %c576], %131 {strides = array<i32>} : memref<8x1024xf32, #tpu.memory_space<vmem>>, vector<8x32xf32>,
    %133 = vector.extract_strided_slice %94 {offsets = [152, 0], sizes = [8, 32], strides = [1, 1]} : vector<256x32xf32> to vector<8x32xf32>
    %c0_44 = arith.constant 0 : index
    %c608 = arith.constant 608 : index
    %134 = vector.load %arg13[%c0_44, %c608] : memref<8x1024xf32, #tpu.memory_space<vmem>>, vector<8x32xf32>
    tpu.vector_store %arg13[%c0_44, %c608], %133 {strides = array<i32>} : memref<8x1024xf32, #tpu.memory_space<vmem>>, vector<8x32xf32>,
    %135 = vector.extract_strided_slice %94 {offsets = [160, 0], sizes = [8, 32], strides = [1, 1]} : vector<256x32xf32> to vector<8x32xf32>
    %c0_45 = arith.constant 0 : index
    %c640 = arith.constant 640 : index
    %136 = vector.load %arg13[%c0_45, %c640] : memref<8x1024xf32, #tpu.memory_space<vmem>>, vector<8x32xf32>
    tpu.vector_store %arg13[%c0_45, %c640], %135 {strides = array<i32>} : memref<8x1024xf32, #tpu.memory_space<vmem>>, vector<8x32xf32>,
    %137 = vector.extract_strided_slice %94 {offsets = [168, 0], sizes = [8, 32], strides = [1, 1]} : vector<256x32xf32> to vector<8x32xf32>
    %c0_46 = arith.constant 0 : index
    %c672 = arith.constant 672 : index
    %138 = vector.load %arg13[%c0_46, %c672] : memref<8x1024xf32, #tpu.memory_space<vmem>>, vector<8x32xf32>
    tpu.vector_store %arg13[%c0_46, %c672], %137 {strides = array<i32>} : memref<8x1024xf32, #tpu.memory_space<vmem>>, vector<8x32xf32>,
    %139 = vector.extract_strided_slice %94 {offsets = [176, 0], sizes = [8, 32], strides = [1, 1]} : vector<256x32xf32> to vector<8x32xf32>
    %c0_47 = arith.constant 0 : index
    %c704 = arith.constant 704 : index
    %140 = vector.load %arg13[%c0_47, %c704] : memref<8x1024xf32, #tpu.memory_space<vmem>>, vector<8x32xf32>
    tpu.vector_store %arg13[%c0_47, %c704], %139 {strides = array<i32>} : memref<8x1024xf32, #tpu.memory_space<vmem>>, vector<8x32xf32>,
    %141 = vector.extract_strided_slice %94 {offsets = [184, 0], sizes = [8, 32], strides = [1, 1]} : vector<256x32xf32> to vector<8x32xf32>
    %c0_48 = arith.constant 0 : index
    %c736 = arith.constant 736 : index
    %142 = vector.load %arg13[%c0_48, %c736] : memref<8x1024xf32, #tpu.memory_space<vmem>>, vector<8x32xf32>
    tpu.vector_store %arg13[%c0_48, %c736], %141 {strides = array<i32>} : memref<8x1024xf32, #tpu.memory_space<vmem>>, vector<8x32xf32>,
    %143 = vector.extract_strided_slice %94 {offsets = [192, 0], sizes = [8, 32], strides = [1, 1]} : vector<256x32xf32> to vector<8x32xf32>
    %c0_49 = arith.constant 0 : index
    %c768 = arith.constant 768 : index
    %144 = vector.load %arg13[%c0_49, %c768] : memref<8x1024xf32, #tpu.memory_space<vmem>>, vector<8x32xf32>
    tpu.vector_store %arg13[%c0_49, %c768], %143 {strides = array<i32>} : memref<8x1024xf32, #tpu.memory_space<vmem>>, vector<8x32xf32>,
    %145 = vector.extract_strided_slice %94 {offsets = [200, 0], sizes = [8, 32], strides = [1, 1]} : vector<256x32xf32> to vector<8x32xf32>
    %c0_50 = arith.constant 0 : index
    %c800 = arith.constant 800 : index
    %146 = vector.load %arg13[%c0_50, %c800] : memref<8x1024xf32, #tpu.memory_space<vmem>>, vector<8x32xf32>
    tpu.vector_store %arg13[%c0_50, %c800], %145 {strides = array<i32>} : memref<8x1024xf32, #tpu.memory_space<vmem>>, vector<8x32xf32>,
    %147 = vector.extract_strided_slice %94 {offsets = [208, 0], sizes = [8, 32], strides = [1, 1]} : vector<256x32xf32> to vector<8x32xf32>
    %c0_51 = arith.constant 0 : index
    %c832 = arith.constant 832 : index
    %148 = vector.load %arg13[%c0_51, %c832] : memref<8x1024xf32, #tpu.memory_space<vmem>>, vector<8x32xf32>
    tpu.vector_store %arg13[%c0_51, %c832], %147 {strides = array<i32>} : memref<8x1024xf32, #tpu.memory_space<vmem>>, vector<8x32xf32>,
    %149 = vector.extract_strided_slice %94 {offsets = [216, 0], sizes = [8, 32], strides = [1, 1]} : vector<256x32xf32> to vector<8x32xf32>
    %c0_52 = arith.constant 0 : index
    %c864 = arith.constant 864 : index
    %150 = vector.load %arg13[%c0_52, %c864] : memref<8x1024xf32, #tpu.memory_space<vmem>>, vector<8x32xf32>
    tpu.vector_store %arg13[%c0_52, %c864], %149 {strides = array<i32>} : memref<8x1024xf32, #tpu.memory_space<vmem>>, vector<8x32xf32>,
    %151 = vector.extract_strided_slice %94 {offsets = [224, 0], sizes = [8, 32], strides = [1, 1]} : vector<256x32xf32> to vector<8x32xf32>
    %c0_53 = arith.constant 0 : index
    %c896 = arith.constant 896 : index
    %152 = vector.load %arg13[%c0_53, %c896] : memref<8x1024xf32, #tpu.memory_space<vmem>>, vector<8x32xf32>
    tpu.vector_store %arg13[%c0_53, %c896], %151 {strides = array<i32>} : memref<8x1024xf32, #tpu.memory_space<vmem>>, vector<8x32xf32>,
    %153 = vector.extract_strided_slice %94 {offsets = [232, 0], sizes = [8, 32], strides = [1, 1]} : vector<256x32xf32> to vector<8x32xf32>
    %c0_54 = arith.constant 0 : index
    %c928 = arith.constant 928 : index
    %154 = vector.load %arg13[%c0_54, %c928] : memref<8x1024xf32, #tpu.memory_space<vmem>>, vector<8x32xf32>
    tpu.vector_store %arg13[%c0_54, %c928], %153 {strides = array<i32>} : memref<8x1024xf32, #tpu.memory_space<vmem>>, vector<8x32xf32>,
    %155 = vector.extract_strided_slice %94 {offsets = [240, 0], sizes = [8, 32], strides = [1, 1]} : vector<256x32xf32> to vector<8x32xf32>
    %c0_55 = arith.constant 0 : index
    %c960 = arith.constant 960 : index
    %156 = vector.load %arg13[%c0_55, %c960] : memref<8x1024xf32, #tpu.memory_space<vmem>>, vector<8x32xf32>
    tpu.vector_store %arg13[%c0_55, %c960], %155 {strides = array<i32>} : memref<8x1024xf32, #tpu.memory_space<vmem>>, vector<8x32xf32>,
    %157 = vector.extract_strided_slice %94 {offsets = [248, 0], sizes = [8, 32], strides = [1, 1]} : vector<256x32xf32> to vector<8x32xf32>
    %c0_56 = arith.constant 0 : index
    %c992 = arith.constant 992 : index
    %158 = vector.load %arg13[%c0_56, %c992] : memref<8x1024xf32, #tpu.memory_space<vmem>>, vector<8x32xf32>
    tpu.vector_store %arg13[%c0_56, %c992], %157 {strides = array<i32>} : memref<8x1024xf32, #tpu.memory_space<vmem>>, vector<8x32xf32>,
    %c0_57 = arith.constant 0 : index
    %c0_58 = arith.constant 0 : index
    %159 = vector.load %arg13[%c0_57, %c0_58] : memref<8x1024xf32, #tpu.memory_space<vmem>>, vector<8x1024xf32>
    %c0_59 = arith.constant 0 : index
    %c0_60 = arith.constant 0 : index
    %160 = vector.load %arg10[%c0_59, %c0_60] : memref<1024x10xf32, #tpu.memory_space<vmem>>, vector<1024x10xf32>
    %cst_61 = arith.constant dense<0.000000e+00> : vector<8x10xf32>
    %161 = tpu.matmul %159, %160, %cst_61 {dimension_numbers = #tpu.dot_dimension_numbers<[1], [0], [0], [1], [0, 0, 1, 1], [], []>} : vector<8x1024xf32>, vector<1024x10xf32>, vector<8x10xf32> -> vector<8x10xf32>
    %c0_62 = arith.constant 0 : index
    %c0_63 = arith.constant 0 : index
    %162 = vector.load %arg11[%c0_62, %c0_63] : memref<1x10xf32, #tpu.memory_space<vmem>>, vector<1x10xf32>
    %163 = vector.broadcast %162 : vector<1x10xf32> to vector<8x10xf32>
    %164 = arith.addf %161, %163 : vector<8x10xf32>
    %cst_64 = arith.constant dense<0xFF800000> : vector<8xf32>
    %165 = vector.multi_reduction <maximumf>, %164, %cst_64 [1] : vector<8x10xf32> to vector<8xf32>
    %166 = vector.shape_cast %165 : vector<8xf32> to vector<8x1xf32>
    %167 = vector.broadcast %166 : vector<8x1xf32> to vector<8x10xf32>
    %168 = arith.subf %164, %167 : vector<8x10xf32>
    %169 = math.exp %168 : vector<8x10xf32>
    %cst_65 = arith.constant dense<0.000000e+00> : vector<8xf32>
    %170 = vector.multi_reduction <add>, %169, %cst_65 [1] : vector<8x10xf32> to vector<8xf32>
    %171 = vector.shape_cast %170 : vector<8xf32> to vector<8x1xf32>
    %172 = tpu.reciprocal %171 {approx = true} : vector<8x1xf32> -> vector<8x1xf32>
    %173 = vector.broadcast %172 : vector<8x1xf32> to vector<8x10xf32>
    %174 = arith.mulf %169, %173 : vector<8x10xf32>
    %c0_66 = arith.constant 0 : index
    %c0_67 = arith.constant 0 : index
    %175 = vector.load %arg12[%c0_66, %c0_67] : memref<8x10xf32, #tpu.memory_space<vmem>>, vector<8x10xf32>
    tpu.vector_store %arg12[%c0_66, %c0_67], %174 {strides = array<i32>} : memref<8x10xf32, #tpu.memory_space<vmem>>, vector<8x10xf32>,
    return
  }
  func.func @transform_0(%arg0: i32) -> (i32, i32) {
    %c0_i32 = arith.constant 0 : i32
    %c0_i32_0 = arith.constant 0 : i32
    return %arg0, %c0_i32 : i32, i32
  }
  func.func @transform_1(%arg0: i32) -> (i32, i32) {
    %c0_i32 = arith.constant 0 : i32
    %c0_i32_0 = arith.constant 0 : i32
    %c0_i32_1 = arith.constant 0 : i32
    return %c0_i32, %c0_i32_0 : i32, i32
  }
  func.func @transform_2(%arg0: i32) -> (i32, i32) {
    %c0_i32 = arith.constant 0 : i32
    %c0_i32_0 = arith.constant 0 : i32
    %c0_i32_1 = arith.constant 0 : i32
    return %c0_i32, %c0_i32_0 : i32, i32
  }
  func.func @transform_3(%arg0: i32) -> (i32, i32) {
    %c0_i32 = arith.constant 0 : i32
    %c0_i32_0 = arith.constant 0 : i32
    %c0_i32_1 = arith.constant 0 : i32
    return %c0_i32, %c0_i32_0 : i32, i32
  }
  func.func @transform_4(%arg0: i32) -> (i32, i32) {
    %c0_i32 = arith.constant 0 : i32
    %c0_i32_0 = arith.constant 0 : i32
    %c0_i32_1 = arith.constant 0 : i32
    return %c0_i32, %c0_i32_0 : i32, i32
  }
  func.func @transform_5(%arg0: i32) -> (i32, i32) {
    %c0_i32 = arith.constant 0 : i32
    %c0_i32_0 = arith.constant 0 : i32
    %c0_i32_1 = arith.constant 0 : i32
    return %c0_i32, %c0_i32_0 : i32, i32
  }
  func.func @transform_6(%arg0: i32) -> (i32, i32) {
    %c0_i32 = arith.constant 0 : i32
    %c0_i32_0 = arith.constant 0 : i32
    %c0_i32_1 = arith.constant 0 : i32
    return %c0_i32, %c0_i32_0 : i32, i32
  }
  func.func @transform_7(%arg0: i32) -> (i32, i32) {
    %c0_i32 = arith.constant 0 : i32
    %c0_i32_0 = arith.constant 0 : i32
    %c0_i32_1 = arith.constant 0 : i32
    return %c0_i32, %c0_i32_0 : i32, i32
  }
  func.func @transform_8(%arg0: i32) -> (i32, i32) {
    %c0_i32 = arith.constant 0 : i32
    %c0_i32_0 = arith.constant 0 : i32
    %c0_i32_1 = arith.constant 0 : i32
    return %c0_i32, %c0_i32_0 : i32, i32
  }
  func.func @transform_9(%arg0: i32) -> (i32, i32) {
    %c0_i32 = arith.constant 0 : i32
    %c0_i32_0 = arith.constant 0 : i32
    %c0_i32_1 = arith.constant 0 : i32
    return %c0_i32, %c0_i32_0 : i32, i32
  }
  func.func @transform_10(%arg0: i32) -> (i32, i32) {
    %c0_i32 = arith.constant 0 : i32
    %c0_i32_0 = arith.constant 0 : i32
    %c0_i32_1 = arith.constant 0 : i32
    return %c0_i32, %c0_i32_0 : i32, i32
  }
  func.func @transform_11(%arg0: i32) -> (i32, i32) {
    %c0_i32 = arith.constant 0 : i32
    %c0_i32_0 = arith.constant 0 : i32
    return %arg0, %c0_i32 : i32, i32
  }
}

</mosaic_0001>

<llo_original>
// kernel: _lambda_.1
$region0: #{_lambda_.1}
  #allocation0 [shape = 'u32[]', space=smem, size = 0x4, offset = 0x4, fixed_abs, tag = 'smem constant byte address 0x4 - core index']
  #allocation1 [shape = 'u32[144,128]{1,0:T(1,128)}', space=vmem, size = 0x12000, scoped, tag = 'internal scratch']
  #allocation2 [shape = 'f32[8,1024]{1,0:T(8,128)}', space=vmem, size = 0x8000, scoped, tag = 'scratch operand']
  %s0 = inlined_call_operand.vmem [shape: f32[8,128], index: 0, kind: input, shape index: {}]
  %s1 = inlined_call_operand.vmem [shape: f32[128,120], index: 1, kind: input, shape index: {}]
  %s2 = inlined_call_operand.vmem [shape: f32[128,1], index: 2, kind: input, shape index: {}]
  %s3 = inlined_call_operand.vmem [shape: f32[128,1], index: 3, kind: input, shape index: {}]
  %s4 = inlined_call_operand.vmem [shape: f32[128,64], index: 4, kind: input, shape index: {}]
  %s5 = inlined_call_operand.vmem [shape: f32[256,640], index: 5, kind: input, shape index: {}]
  %s6 = inlined_call_operand.vmem [shape: f32[256,1], index: 6, kind: input, shape index: {}]
  %s7 = inlined_call_operand.vmem [shape: f32[256,1], index: 7, kind: input, shape index: {}]
  %s8 = inlined_call_operand.vmem [shape: f32[64,32], index: 8, kind: input, shape index: {}]
  %s9 = inlined_call_operand.vmem [shape: f32[1024,10], index: 9, kind: input, shape index: {}]
  %s10 = inlined_call_operand.vmem [shape: f32[1,10], index: 10, kind: input, shape index: {}]
  %s11 = inlined_call_operand.vmem [shape: f32[8,10], index: 11, kind: output, shape index: {}]
  %s12 = sld [smem:[#allocation0]]
  $region54: #{_lambda_.1} parent=0
    _
  %s14 = ssub.s32 1, %s12
  %s15 = scalar_select 0, %s14, %s12
  // Predicated region
  $region2: #{_lambda_.1} parent=0 // pred_check
    _
  $region3: #{_lambda_.1} parent=0 // pred_check_branch
    %17 = sbr.rel (0) target = $region5
  $region4: #{_lambda_.1} parent=0 // pred_region
    _
  $region5: #{_lambda_.1} parent=0 // pred_fallthru
    _
  // Predicated region
  $region6: #{_lambda_.1} parent=0 // pred_check
    _
  $region7: #{_lambda_.1} parent=0 // pred_check_branch
    %19 = sbr.rel (0) target = $region9
  $region8: #{_lambda_.1} parent=0 // pred_region
    _
  $region9: #{_lambda_.1} parent=0 // pred_fallthru
    _
  // Predicated region
  $region10: #{_lambda_.1} parent=0 // pred_check
    _
  $region11: #{_lambda_.1} parent=0 // pred_check_branch
    %21 = sbr.rel (0) target = $region13
  $region12: #{_lambda_.1} parent=0 // pred_region
    _
  $region13: #{_lambda_.1} parent=0 // pred_fallthru
    _
  // Predicated region
  $region14: #{_lambda_.1} parent=0 // pred_check
    _
  $region15: #{_lambda_.1} parent=0 // pred_check_branch
    %23 = sbr.rel (0) target = $region17
  $region16: #{_lambda_.1} parent=0 // pred_region
    _
  $region17: #{_lambda_.1} parent=0 // pred_fallthru
    _
  // Predicated region
  $region18: #{_lambda_.1} parent=0 // pred_check
    _
  $region19: #{_lambda_.1} parent=0 // pred_check_branch
    %25 = sbr.rel (0) target = $region21
  $region20: #{_lambda_.1} parent=0 // pred_region
    _
  $region21: #{_lambda_.1} parent=0 // pred_fallthru
    _
  // Predicated region
  $region22: #{_lambda_.1} parent=0 // pred_check
    _
  $region23: #{_lambda_.1} parent=0 // pred_check_branch
    %27 = sbr.rel (0) target = $region25
  $region24: #{_lambda_.1} parent=0 // pred_region
    _
  $region25: #{_lambda_.1} parent=0 // pred_fallthru
    _
  // Predicated region
  $region26: #{_lambda_.1} parent=0 // pred_check
    _
  $region27: #{_lambda_.1} parent=0 // pred_check_branch
    %29 = sbr.rel (0) target = $region29
  $region28: #{_lambda_.1} parent=0 // pred_region
    _
  $region29: #{_lambda_.1} parent=0 // pred_fallthru
    _
  // Predicated region
  $region30: #{_lambda_.1} parent=0 // pred_check
    _
  $region31: #{_lambda_.1} parent=0 // pred_check_branch
    %31 = sbr.rel (0) target = $region33
  $region32: #{_lambda_.1} parent=0 // pred_region
    _
  $region33: #{_lambda_.1} parent=0 // pred_fallthru
    _
  // Predicated region
  $region34: #{_lambda_.1} parent=0 // pred_check
    _
  $region35: #{_lambda_.1} parent=0 // pred_check_branch
    %33 = sbr.rel (0) target = $region37
  $region36: #{_lambda_.1} parent=0 // pred_region
    _
  $region37: #{_lambda_.1} parent=0 // pred_fallthru
    _
  // Predicated region
  $region38: #{_lambda_.1} parent=0 // pred_check
    _
  $region39: #{_lambda_.1} parent=0 // pred_check_branch
    %35 = sbr.rel (0) target = $region41
  $region40: #{_lambda_.1} parent=0 // pred_region
    _
  $region41: #{_lambda_.1} parent=0 // pred_fallthru
    _
  // Predicated region
  $region42: #{_lambda_.1} parent=0 // pred_check
    _
  $region43: #{_lambda_.1} parent=0 // pred_check_branch
    %37 = sbr.rel (0) target = $region45
  $region44: #{_lambda_.1} parent=0 // pred_region
    _
  $region45: #{_lambda_.1} parent=0 // pred_fallthru
    _
  %v38 = vld [vmem:[%s0] sm:$0xff]
  %40 = vrot.lane.b32.xlu0 %v38, 7
  %v41 = vpop.permute.xlu0 %40
  %43 = vrot.lane.b32.xlu0 %v38, 6
  %v44 = vpop.permute.xlu0 %43
  %46 = vrot.lane.b32.xlu0 %v38, 5
  %v47 = vpop.permute.xlu0 %46
  %49 = vrot.lane.b32.xlu0 %v38, 4
  %v50 = vpop.permute.xlu0 %49
  %52 = vrot.lane.b32.xlu0 %v38, 3
  %v53 = vpop.permute.xlu0 %52
  %55 = vrot.lane.b32.xlu0 %v38, 2
  %v56 = vpop.permute.xlu0 %55
  %vm58 = vcmask 15360
  %59 = vrot.lane.b32.xlu0 %v38, 1
  %v60 = vpop.permute.xlu0 %59
  %vm62 = vcmask 7168
  %63 = vrot.lane.b32.xlu0 %v38, 127
  %v64 = vpop.permute.xlu0 %63
  %66 = vrot.lane.b32.xlu0 %v38, 126
  %v67 = vpop.permute.xlu0 %66
  %69 = vrot.lane.b32.xlu0 %v38, 125
  %v70 = vpop.permute.xlu0 %69
  %72 = vrot.lane.b32.xlu0 %v38, 124
  %v73 = vpop.permute.xlu0 %72
  %75 = vrot.lane.b32.xlu0 %v38, 123
  %v76 = vpop.permute.xlu0 %75
  %78 = vrot.lane.b32.xlu0 %v38, 122
  %v79 = vpop.permute.xlu0 %78
  %81 = vrot.lane.b32.xlu0 %v38, 121
  %v82 = vpop.permute.xlu0 %81
  %v84 = vld [vmem:[%s1] sm:$0xff]
  %v85 = vld [vmem:[%s1 + $0x8] sm:$0xff]
  %v86 = vld [vmem:[%s1 + $0x10] sm:$0xff]
  %v87 = vld [vmem:[%s1 + $0x18] sm:$0xff]
  %v88 = vld [vmem:[%s1 + $0x20] sm:$0xff]
  %v89 = vld [vmem:[%s1 + $0x28] sm:$0xff]
  %v90 = vld [vmem:[%s1 + $0x30] sm:$0xff]
  %v91 = vld [vmem:[%s1 + $0x38] sm:$0xff]
  %v92 = vld [vmem:[%s1 + $0x40] sm:$0xff]
  %v93 = vld [vmem:[%s1 + $0x48] sm:$0xff]
  %v94 = vld [vmem:[%s1 + $0x50] sm:$0xff]
  %v95 = vld [vmem:[%s1 + $0x58] sm:$0xff]
  %v96 = vld [vmem:[%s1 + $0x60] sm:$0xff]
  %v97 = vld [vmem:[%s1 + $0x68] sm:$0xff]
  %v98 = vld [vmem:[%s1 + $0x70] sm:$0xff]
  %v99 = vld [vmem:[%s1 + $0x78] sm:$0xff]
  %vm100 = vcmask 982016
  %v102 = vsel %vm100, %v84, 0
  %v105 = vsel %vm100, %v85, 0
  %v108 = vsel %vm100, %v86, 0
  %v111 = vsel %vm100, %v87, 0
  %v114 = vsel %vm100, %v88, 0
  %v117 = vsel %vm100, %v89, 0
  %v120 = vsel %vm100, %v90, 0
  %v123 = vsel %vm100, %v91, 0
  %v126 = vsel %vm100, %v92, 0
  %v129 = vsel %vm100, %v93, 0
  %v132 = vsel %vm100, %v94, 0
  %v135 = vsel %vm100, %v95, 0
  %v138 = vsel %vm100, %v96, 0
  %v141 = vsel %vm100, %v97, 0
  %v144 = vsel %vm100, %v98, 0
  %v147 = vsel %vm100, %v99, 0
  %149 = vmatprep.subr.mxu0 0.0
  %150 = vmatpush1.msra.mxu0 %v41
  %151 = vmatprep.subr.mxu0 0.0
  %152 = vmatpush1.msra.mxu0 %v44
  %153 = vmatprep.subr.mxu0 0.0
  %154 = vmatpush1.msra.mxu0 %v47
  %155 = vmatprep.subr.mxu0 0.0
  %156 = vmatpush1.msra.mxu0 %v50
  %157 = vmatprep.subr.mxu0 0.0
  %158 = vmatpush1.msra.mxu0 %v53
  %159 = vmatprep.subr.mxu0 0.0
  %160 = vmatpush1.msra.mxu0 %v56
  %161 = vmatprep.subr.mxu0 0.0
  %162 = vmatpush1.msra.mxu0 %v60
  %163 = vmatprep.subr.mxu0 0.0
  %164 = vmatpush1.msra.mxu0 %v38
  %165 = vmatprep.subr.mxu0 0.0
  %166 = vmatpush1.msra.mxu0 %v64
  %167 = vmatprep.subr.mxu0 0.0
  %168 = vmatpush1.msra.mxu0 %v67
  %169 = vmatprep.subr.mxu0 0.0
  %170 = vmatpush1.msra.mxu0 %v70
  %171 = vmatprep.subr.mxu0 0.0
  %172 = vmatpush1.msra.mxu0 %v73
  %173 = vmatprep.subr.mxu0 0.0
  %174 = vmatpush1.msra.mxu0 %v76
  %175 = vmatprep.subr.mxu0 0.0
  %176 = vmatpush1.msra.mxu0 %v79
  %177 = vmatprep.subr.mxu0 0.0
  %178 = vmatpush1.msra.mxu0 %v82
  %179 = vmatprep.subr.mxu0 0.0
  %180 = vmatpush1.msra.mxu0 0.0
  %181 = vmatprep.subr.mxu0 0.0
  %182 = vmatpush1.msra.mxu0 0.0
  %183 = vmatprep.subr.mxu0 0.0
  %184 = vmatpush1.msra.mxu0 0.0
  %185 = vmatprep.subr.mxu0 0.0
  %186 = vmatpush1.msra.mxu0 0.0
  %187 = vmatprep.subr.mxu0 0.0
  %188 = vmatpush1.msra.mxu0 0.0
  %189 = vmatprep.subr.mxu0 0.0
  %190 = vmatpush1.msra.mxu0 0.0
  %191 = vmatprep.subr.mxu0 0.0
  %192 = vmatpush1.msra.mxu0 0.0
  %193 = vmatprep.subr.mxu0 0.0
  %194 = vmatpush1.msra.mxu0 0.0
  %195 = vmatprep.subr.mxu0 0.0
  %196 = vmatpush1.msra.mxu0 0.0
  %197 = vmatprep.subr.mxu0 0.0
  %198 = vmatpush1.msra.mxu0 0.0
  %199 = vmatprep.subr.mxu0 0.0
  %200 = vmatpush1.msra.mxu0 0.0
  %201 = vmatprep.subr.mxu0 0.0
  %202 = vmatpush1.msra.mxu0 0.0
  %203 = vmatprep.subr.mxu0 0.0
  %204 = vmatpush1.msra.mxu0 0.0
  %205 = vmatprep.subr.mxu0 0.0
  %206 = vmatpush1.msra.mxu0 0.0
  %207 = vmatprep.subr.mxu0 0.0
  %208 = vmatpush1.msra.mxu0 0.0
  %209 = vmatprep.subr.mxu0 0.0
  %210 = vmatpush1.msra.mxu0 0.0
  %211 = vmatprep.subr.mxu0 0.0
  %212 = vmatpush1.msra.mxu0 0.0
  %213 = vmatprep.mubr.f32.mxu0 0.0
  %214 = vmatmul.mubr.f32.gmra.mrb[0].mxu0 %v102
  %v215 = vpop.f32.mrb[0].mxu0
  %v216 = vadd.f32 0.0, %v215
  %v217 = vpop.f32.mrb[0].mxu0
  %218 = vmatprep.mubr.f32.mxu0 0.0
  %219 = vmatmul.mubr.f32.gmra.mrb[0].mxu0 %v105
  %v220 = vpop.f32.mrb[0].mxu0
  %v221 = vadd.f32 0.0, %v220
  %v222 = vpop.f32.mrb[0].mxu0
  %223 = vmatprep.mubr.f32.mxu0 0.0
  %224 = vmatmul.mubr.f32.gmra.mrb[0].mxu0 %v108
  %v225 = vpop.f32.mrb[0].mxu0
  %v226 = vadd.f32 0.0, %v225
  %v227 = vpop.f32.mrb[0].mxu0
  %228 = vmatprep.mubr.f32.mxu0 0.0
  %229 = vmatmul.mubr.f32.gmra.mrb[0].mxu0 %v111
  %v230 = vpop.f32.mrb[0].mxu0
  %v231 = vadd.f32 0.0, %v230
  %v232 = vpop.f32.mrb[0].mxu0
  %233 = vmatprep.mubr.f32.mxu0 0.0
  %234 = vmatmul.mubr.f32.gmra.mrb[0].mxu0 %v114
  %v235 = vpop.f32.mrb[0].mxu0
  %v236 = vadd.f32 0.0, %v235
  %v237 = vpop.f32.mrb[0].mxu0
  %238 = vmatprep.mubr.f32.mxu0 0.0
  %239 = vmatmul.mubr.f32.gmra.mrb[0].mxu0 %v117
  %v240 = vpop.f32.mrb[0].mxu0
  %v241 = vadd.f32 0.0, %v240
  %v242 = vpop.f32.mrb[0].mxu0
  %243 = vmatprep.mubr.f32.mxu0 0.0
  %244 = vmatmul.mubr.f32.gmra.mrb[0].mxu0 %v120
  %v245 = vpop.f32.mrb[0].mxu0
  %v246 = vadd.f32 0.0, %v245
  %v247 = vpop.f32.mrb[0].mxu0
  %248 = vmatprep.mubr.f32.mxu0 0.0
  %249 = vmatmul.mubr.f32.gmra.mrb[0].mxu0 %v123
  %v250 = vpop.f32.mrb[0].mxu0
  %v251 = vadd.f32 0.0, %v250
  %v252 = vpop.f32.mrb[0].mxu0
  %253 = vmatprep.mubr.f32.mxu0 0.0
  %254 = vmatmul.mubr.f32.gmra.mrb[0].mxu0 %v126
  %v255 = vpop.f32.mrb[0].mxu0
  %v256 = vadd.f32 0.0, %v255
  %v257 = vpop.f32.mrb[0].mxu0
  %258 = vmatprep.mubr.f32.mxu0 0.0
  %259 = vmatmul.mubr.f32.gmra.mrb[0].mxu0 %v129
  %v260 = vpop.f32.mrb[0].mxu0
  %v261 = vadd.f32 0.0, %v260
  %v262 = vpop.f32.mrb[0].mxu0
  %263 = vmatprep.mubr.f32.mxu0 0.0
  %264 = vmatmul.mubr.f32.gmra.mrb[0].mxu0 %v132
  %v265 = vpop.f32.mrb[0].mxu0
  %v266 = vadd.f32 0.0, %v265
  %v267 = vpop.f32.mrb[0].mxu0
  %268 = vmatprep.mubr.f32.mxu0 0.0
  %269 = vmatmul.mubr.f32.gmra.mrb[0].mxu0 %v135
  %v270 = vpop.f32.mrb[0].mxu0
  %v271 = vadd.f32 0.0, %v270
  %v272 = vpop.f32.mrb[0].mxu0
  %273 = vmatprep.mubr.f32.mxu0 0.0
  %274 = vmatmul.mubr.f32.gmra.mrb[0].mxu0 %v138
  %v275 = vpop.f32.mrb[0].mxu0
  %v276 = vadd.f32 0.0, %v275
  %v277 = vpop.f32.mrb[0].mxu0
  %278 = vmatprep.mubr.f32.mxu0 0.0
  %279 = vmatmul.mubr.f32.gmra.mrb[0].mxu0 %v141
  %v280 = vpop.f32.mrb[0].mxu0
  %v281 = vadd.f32 0.0, %v280
  %v282 = vpop.f32.mrb[0].mxu0
  %283 = vmatprep.mubr.f32.mxu0 0.0
  %284 = vmatmul.mubr.f32.gmra.mrb[0].mxu0 %v144
  %v285 = vpop.f32.mrb[0].mxu0
  %v286 = vadd.f32 0.0, %v285
  %v287 = vpop.f32.mrb[0].mxu0
  %288 = vmatprep.mubr.f32.mxu0 0.0
  %289 = vmatmul.mubr.f32.gmra.mrb[0].mxu0 %v147
  %v290 = vpop.f32.mrb[0].mxu0
  %v291 = vadd.f32 0.0, %v290
  %v292 = vpop.f32.mrb[0].mxu0
  %293 = vdwg.mxu0
  %v294 = vld [vmem:[%s2] sm:$0xff]
  %v295 = vld [vmem:[%s2 + $0x8] sm:$0xff]
  %v296 = vld [vmem:[%s2 + $0x10] sm:$0xff]
  %v297 = vld [vmem:[%s2 + $0x18] sm:$0xff]
  %v298 = vld [vmem:[%s2 + $0x20] sm:$0xff]
  %v299 = vld [vmem:[%s2 + $0x28] sm:$0xff]
  %v300 = vld [vmem:[%s2 + $0x30] sm:$0xff]
  %v301 = vld [vmem:[%s2 + $0x38] sm:$0xff]
  %v302 = vld [vmem:[%s2 + $0x40] sm:$0xff]
  %v303 = vld [vmem:[%s2 + $0x48] sm:$0xff]
  %v304 = vld [vmem:[%s2 + $0x50] sm:$0xff]
  %v305 = vld [vmem:[%s2 + $0x58] sm:$0xff]
  %v306 = vld [vmem:[%s2 + $0x60] sm:$0xff]
  %v307 = vld [vmem:[%s2 + $0x68] sm:$0xff]
  %v308 = vld [vmem:[%s2 + $0x70] sm:$0xff]
  %v309 = vld [vmem:[%s2 + $0x78] sm:$0xff]
  %311 = vset.pattern.permute.xlu0 0
  %312 = vperm.xlu0 %311, %v294
  %v313 = vpop.permute.xlu0 %312
  %316 = vset.pattern.permute.xlu0 0
  %317 = vperm.xlu0 %316, %v295
  %v318 = vpop.permute.xlu0 %317
  %321 = vset.pattern.permute.xlu0 0
  %322 = vperm.xlu0 %321, %v296
  %v323 = vpop.permute.xlu0 %322
  %326 = vset.pattern.permute.xlu0 0
  %327 = vperm.xlu0 %326, %v297
  %v328 = vpop.permute.xlu0 %327
  %331 = vset.pattern.permute.xlu0 0
  %332 = vperm.xlu0 %331, %v298
  %v333 = vpop.permute.xlu0 %332
  %336 = vset.pattern.permute.xlu0 0
  %337 = vperm.xlu0 %336, %v299
  %v338 = vpop.permute.xlu0 %337
  %341 = vset.pattern.permute.xlu0 0
  %342 = vperm.xlu0 %341, %v300
  %v343 = vpop.permute.xlu0 %342
  %346 = vset.pattern.permute.xlu0 0
  %347 = vperm.xlu0 %346, %v301
  %v348 = vpop.permute.xlu0 %347
  %351 = vset.pattern.permute.xlu0 0
  %352 = vperm.xlu0 %351, %v302
  %v353 = vpop.permute.xlu0 %352
  %356 = vset.pattern.permute.xlu0 0
  %357 = vperm.xlu0 %356, %v303
  %v358 = vpop.permute.xlu0 %357
  %361 = vset.pattern.permute.xlu0 0
  %362 = vperm.xlu0 %361, %v304
  %v363 = vpop.permute.xlu0 %362
  %366 = vset.pattern.permute.xlu0 0
  %367 = vperm.xlu0 %366, %v305
  %v368 = vpop.permute.xlu0 %367
  %371 = vset.pattern.permute.xlu0 0
  %372 = vperm.xlu0 %371, %v306
  %v373 = vpop.permute.xlu0 %372
  %376 = vset.pattern.permute.xlu0 0
  %377 = vperm.xlu0 %376, %v307
  %v378 = vpop.permute.xlu0 %377
  %381 = vset.pattern.permute.xlu0 0
  %382 = vperm.xlu0 %381, %v308
  %v383 = vpop.permute.xlu0 %382
  %386 = vset.pattern.permute.xlu0 0
  %387 = vperm.xlu0 %386, %v309
  %v388 = vpop.permute.xlu0 %387
  %v390 = vmul.f32 %v216, %v313
  %v391 = vmul.f32 %v221, %v318
  %v392 = vmul.f32 %v226, %v323
  %v393 = vmul.f32 %v231, %v328
  %v394 = vmul.f32 %v236, %v333
  %v395 = vmul.f32 %v241, %v338
  %v396 = vmul.f32 %v246, %v343
  %v397 = vmul.f32 %v251, %v348
  %v398 = vmul.f32 %v256, %v353
  %v399 = vmul.f32 %v261, %v358
  %v400 = vmul.f32 %v266, %v363
  %v401 = vmul.f32 %v271, %v368
  %v402 = vmul.f32 %v276, %v373
  %v403 = vmul.f32 %v281, %v378
  %v404 = vmul.f32 %v286, %v383
  %v405 = vmul.f32 %v291, %v388
  %v406 = vld [vmem:[%s3] sm:$0xff]
  %v407 = vld [vmem:[%s3 + $0x8] sm:$0xff]
  %v408 = vld [vmem:[%s3 + $0x10] sm:$0xff]
  %v409 = vld [vmem:[%s3 + $0x18] sm:$0xff]
  %v410 = vld [vmem:[%s3 + $0x20] sm:$0xff]
  %v411 = vld [vmem:[%s3 + $0x28] sm:$0xff]
  %v412 = vld [vmem:[%s3 + $0x30] sm:$0xff]
  %v413 = vld [vmem:[%s3 + $0x38] sm:$0xff]
  %v414 = vld [vmem:[%s3 + $0x40] sm:$0xff]
  %v415 = vld [vmem:[%s3 + $0x48] sm:$0xff]
  %v416 = vld [vmem:[%s3 + $0x50] sm:$0xff]
  %v417 = vld [vmem:[%s3 + $0x58] sm:$0xff]
  %v418 = vld [vmem:[%s3 + $0x60] sm:$0xff]
  %v419 = vld [vmem:[%s3 + $0x68] sm:$0xff]
  %v420 = vld [vmem:[%s3 + $0x70] sm:$0xff]
  %v421 = vld [vmem:[%s3 + $0x78] sm:$0xff]
  %423 = vset.pattern.permute.xlu0 0
  %424 = vperm.xlu0 %423, %v406
  %v425 = vpop.permute.xlu0 %424
  %428 = vset.pattern.permute.xlu0 0
  %429 = vperm.xlu0 %428, %v407
  %v430 = vpop.permute.xlu0 %429
  %433 = vset.pattern.permute.xlu0 0
  %434 = vperm.xlu0 %433, %v408
  %v435 = vpop.permute.xlu0 %434
  %438 = vset.pattern.permute.xlu0 0
  %439 = vperm.xlu0 %438, %v409
  %v440 = vpop.permute.xlu0 %439
  %443 = vset.pattern.permute.xlu0 0
  %444 = vperm.xlu0 %443, %v410
  %v445 = vpop.permute.xlu0 %444
  %448 = vset.pattern.permute.xlu0 0
  %449 = vperm.xlu0 %448, %v411
  %v450 = vpop.permute.xlu0 %449
  %453 = vset.pattern.permute.xlu0 0
  %454 = vperm.xlu0 %453, %v412
  %v455 = vpop.permute.xlu0 %454
  %458 = vset.pattern.permute.xlu0 0
  %459 = vperm.xlu0 %458, %v413
  %v460 = vpop.permute.xlu0 %459
  %463 = vset.pattern.permute.xlu0 0
  %464 = vperm.xlu0 %463, %v414
  %v465 = vpop.permute.xlu0 %464
  %468 = vset.pattern.permute.xlu0 0
  %469 = vperm.xlu0 %468, %v415
  %v470 = vpop.permute.xlu0 %469
  %473 = vset.pattern.permute.xlu0 0
  %474 = vperm.xlu0 %473, %v416
  %v475 = vpop.permute.xlu0 %474
  %478 = vset.pattern.permute.xlu0 0
  %479 = vperm.xlu0 %478, %v417
  %v480 = vpop.permute.xlu0 %479
  %483 = vset.pattern.permute.xlu0 0
  %484 = vperm.xlu0 %483, %v418
  %v485 = vpop.permute.xlu0 %484
  %488 = vset.pattern.permute.xlu0 0
  %489 = vperm.xlu0 %488, %v419
  %v490 = vpop.permute.xlu0 %489
  %493 = vset.pattern.permute.xlu0 0
  %494 = vperm.xlu0 %493, %v420
  %v495 = vpop.permute.xlu0 %494
  %498 = vset.pattern.permute.xlu0 0
  %499 = vperm.xlu0 %498, %v421
  %v500 = vpop.permute.xlu0 %499
  %v502 = vadd.f32 %v390, %v425
  %v503 = vadd.f32 %v391, %v430
  %v504 = vadd.f32 %v392, %v435
  %v505 = vadd.f32 %v393, %v440
  %v506 = vadd.f32 %v394, %v445
  %v507 = vadd.f32 %v395, %v450
  %v508 = vadd.f32 %v396, %v455
  %v509 = vadd.f32 %v397, %v460
  %v510 = vadd.f32 %v398, %v465
  %v511 = vadd.f32 %v399, %v470
  %v512 = vadd.f32 %v400, %v475
  %v513 = vadd.f32 %v401, %v480
  %v514 = vadd.f32 %v402, %v485
  %v515 = vadd.f32 %v403, %v490
  %v516 = vadd.f32 %v404, %v495
  %v517 = vadd.f32 %v405, %v500
  %vm518 = vcmp.gt.f32.partialorder %v502, 0.0
  %vm519 = vcmp.gt.f32.partialorder %v503, 0.0
  %vm520 = vcmp.gt.f32.partialorder %v504, 0.0
  %vm521 = vcmp.gt.f32.partialorder %v505, 0.0
  %vm522 = vcmp.gt.f32.partialorder %v506, 0.0
  %vm523 = vcmp.gt.f32.partialorder %v507, 0.0
  %vm524 = vcmp.gt.f32.partialorder %v508, 0.0
  %vm525 = vcmp.gt.f32.partialorder %v509, 0.0
  %vm526 = vcmp.gt.f32.partialorder %v510, 0.0
  %vm527 = vcmp.gt.f32.partialorder %v511, 0.0
  %vm528 = vcmp.gt.f32.partialorder %v512, 0.0
  %vm529 = vcmp.gt.f32.partialorder %v513, 0.0
  %vm530 = vcmp.gt.f32.partialorder %v514, 0.0
  %vm531 = vcmp.gt.f32.partialorder %v515, 0.0
  %vm532 = vcmp.gt.f32.partialorder %v516, 0.0
  %vm533 = vcmp.gt.f32.partialorder %v517, 0.0
  %v534 = vmul.f32 %v502, 0.01
  %v535 = vmul.f32 %v503, 0.01
  %v536 = vmul.f32 %v504, 0.01
  %v537 = vmul.f32 %v505, 0.01
  %v538 = vmul.f32 %v506, 0.01
  %v539 = vmul.f32 %v507, 0.01
  %v540 = vmul.f32 %v508, 0.01
  %v541 = vmul.f32 %v509, 0.01
  %v542 = vmul.f32 %v510, 0.01
  %v543 = vmul.f32 %v511, 0.01
  %v544 = vmul.f32 %v512, 0.01
  %v545 = vmul.f32 %v513, 0.01
  %v546 = vmul.f32 %v514, 0.01
  %v547 = vmul.f32 %v515, 0.01
  %v548 = vmul.f32 %v516, 0.01
  %v549 = vmul.f32 %v517, 0.01
  %v550 = vsel %vm518, %v502, %v534
  %v551 = vsel %vm519, %v503, %v535
  %v552 = vsel %vm520, %v504, %v536
  %v553 = vsel %vm521, %v505, %v537
  %v554 = vsel %vm522, %v506, %v538
  %v555 = vsel %vm523, %v507, %v539
  %v556 = vsel %vm524, %v508, %v540
  %v557 = vsel %vm525, %v509, %v541
  %v558 = vsel %vm526, %v510, %v542
  %v559 = vsel %vm527, %v511, %v543
  %v560 = vsel %vm528, %v512, %v544
  %v561 = vsel %vm529, %v513, %v545
  %v562 = vsel %vm530, %v514, %v546
  %v563 = vsel %vm531, %v515, %v547
  %v564 = vsel %vm532, %v516, %v548
  %v565 = vsel %vm533, %v517, %v549
  %582 = vrot.lane.b32.xlu0 %v550, 127
  %v583 = vpop.permute.xlu0 %582
  %584 = vrot.lane.b32.xlu0 %v551, 127
  %v585 = vpop.permute.xlu0 %584
  %586 = vrot.lane.b32.xlu0 %v552, 127
  %v587 = vpop.permute.xlu0 %586
  %588 = vrot.lane.b32.xlu0 %v553, 127
  %v589 = vpop.permute.xlu0 %588
  %590 = vrot.lane.b32.xlu0 %v554, 127
  %v591 = vpop.permute.xlu0 %590
  %592 = vrot.lane.b32.xlu0 %v555, 127
  %v593 = vpop.permute.xlu0 %592
  %594 = vrot.lane.b32.xlu0 %v556, 127
  %v595 = vpop.permute.xlu0 %594
  %596 = vrot.lane.b32.xlu0 %v557, 127
  %v597 = vpop.permute.xlu0 %596
  %598 = vrot.lane.b32.xlu0 %v558, 127
  %v599 = vpop.permute.xlu0 %598
  %600 = vrot.lane.b32.xlu0 %v559, 127
  %v601 = vpop.permute.xlu0 %600
  %602 = vrot.lane.b32.xlu0 %v560, 127
  %v603 = vpop.permute.xlu0 %602
  %604 = vrot.lane.b32.xlu0 %v561, 127
  %v605 = vpop.permute.xlu0 %604
  %606 = vrot.lane.b32.xlu0 %v562, 127
  %v607 = vpop.permute.xlu0 %606
  %608 = vrot.lane.b32.xlu0 %v563, 127
  %v609 = vpop.permute.xlu0 %608
  %610 = vrot.lane.b32.xlu0 %v564, 127
  %v611 = vpop.permute.xlu0 %610
  %612 = vrot.lane.b32.xlu0 %v565, 127
  %v613 = vpop.permute.xlu0 %612
  %v630 = vmax.f32 %v550, %v583
  %v631 = vmax.f32 %v551, %v585
  %v632 = vmax.f32 %v552, %v587
  %v633 = vmax.f32 %v553, %v589
  %v634 = vmax.f32 %v554, %v591
  %v635 = vmax.f32 %v555, %v593
  %v636 = vmax.f32 %v556, %v595
  %v637 = vmax.f32 %v557, %v597
  %v638 = vmax.f32 %v558, %v599
  %v639 = vmax.f32 %v559, %v601
  %v640 = vmax.f32 %v560, %v603
  %v641 = vmax.f32 %v561, %v605
  %v642 = vmax.f32 %v562, %v607
  %v643 = vmax.f32 %v563, %v609
  %v644 = vmax.f32 %v564, %v611
  %v645 = vmax.f32 %v565, %v613
  %v646 = vld [vmem:[%s4] sm:$0xff]
  %v647 = vld [vmem:[%s4 + $0x8] sm:$0xff]
  %v648 = vld [vmem:[%s4 + $0x10] sm:$0xff]
  %v649 = vld [vmem:[%s4 + $0x18] sm:$0xff]
  %v650 = vld [vmem:[%s4 + $0x20] sm:$0xff]
  %v651 = vld [vmem:[%s4 + $0x28] sm:$0xff]
  %v652 = vld [vmem:[%s4 + $0x30] sm:$0xff]
  %v653 = vld [vmem:[%s4 + $0x38] sm:$0xff]
  %v654 = vld [vmem:[%s4 + $0x40] sm:$0xff]
  %v655 = vld [vmem:[%s4 + $0x48] sm:$0xff]
  %v656 = vld [vmem:[%s4 + $0x50] sm:$0xff]
  %v657 = vld [vmem:[%s4 + $0x58] sm:$0xff]
  %v658 = vld [vmem:[%s4 + $0x60] sm:$0xff]
  %v659 = vld [vmem:[%s4 + $0x68] sm:$0xff]
  %v660 = vld [vmem:[%s4 + $0x70] sm:$0xff]
  %v661 = vld [vmem:[%s4 + $0x78] sm:$0xff]
  %662 = vmatprep.subr.mxu0 0.0
  %663 = vmatpush1.msra.mxu0 %v646
  %664 = vmatprep.subr.mxu0 0.0
  %665 = vmatpush1.msra.mxu0 %v647
  %666 = vmatprep.subr.mxu0 0.0
  %667 = vmatpush1.msra.mxu0 %v648
  %668 = vmatprep.subr.mxu0 0.0
  %669 = vmatpush1.msra.mxu0 %v649
  %670 = vmatprep.subr.mxu0 0.0
  %671 = vmatpush1.msra.mxu0 %v650
  %672 = vmatprep.subr.mxu0 0.0
  %673 = vmatpush1.msra.mxu0 %v651
  %674 = vmatprep.subr.mxu0 0.0
  %675 = vmatpush1.msra.mxu0 %v652
  %676 = vmatprep.subr.mxu0 0.0
  %677 = vmatpush1.msra.mxu0 %v653
  %678 = vmatprep.subr.mxu0 0.0
  %679 = vmatpush1.msra.mxu0 %v654
  %680 = vmatprep.subr.mxu0 0.0
  %681 = vmatpush1.msra.mxu0 %v655
  %682 = vmatprep.subr.mxu0 0.0
  %683 = vmatpush1.msra.mxu0 %v656
  %684 = vmatprep.subr.mxu0 0.0
  %685 = vmatpush1.msra.mxu0 %v657
  %686 = vmatprep.subr.mxu0 0.0
  %687 = vmatpush1.msra.mxu0 %v658
  %688 = vmatprep.subr.mxu0 0.0
  %689 = vmatpush1.msra.mxu0 %v659
  %690 = vmatprep.subr.mxu0 0.0
  %691 = vmatpush1.msra.mxu0 %v660
  %692 = vmatprep.subr.mxu0 0.0
  %693 = vmatpush1.msra.mxu0 %v661
  %694 = vmatprep.subr.mxu0 0.0
  %695 = vmatpush1.msra.mxu0 0.0
  %696 = vmatprep.subr.mxu0 0.0
  %697 = vmatpush1.msra.mxu0 0.0
  %698 = vmatprep.subr.mxu0 0.0
  %699 = vmatpush1.msra.mxu0 0.0
  %700 = vmatprep.subr.mxu0 0.0
  %701 = vmatpush1.msra.mxu0 0.0
  %702 = vmatprep.subr.mxu0 0.0
  %703 = vmatpush1.msra.mxu0 0.0
  %704 = vmatprep.subr.mxu0 0.0
  %705 = vmatpush1.msra.mxu0 0.0
  %706 = vmatprep.subr.mxu0 0.0
  %707 = vmatpush1.msra.mxu0 0.0
  %708 = vmatprep.subr.mxu0 0.0
  %709 = vmatpush1.msra.mxu0 0.0
  %710 = vmatprep.subr.mxu0 0.0
  %711 = vmatpush1.msra.mxu0 0.0
  %712 = vmatprep.subr.mxu0 0.0
  %713 = vmatpush1.msra.mxu0 0.0
  %714 = vmatprep.subr.mxu0 0.0
  %715 = vmatpush1.msra.mxu0 0.0
  %716 = vmatprep.subr.mxu0 0.0
  %717 = vmatpush1.msra.mxu0 0.0
  %718 = vmatprep.subr.mxu0 0.0
  %719 = vmatpush1.msra.mxu0 0.0
  %720 = vmatprep.subr.mxu0 0.0
  %721 = vmatpush1.msra.mxu0 0.0
  %722 = vmatprep.subr.mxu0 0.0
  %723 = vmatpush1.msra.mxu0 0.0
  %724 = vmatprep.subr.mxu0 0.0
  %725 = vmatpush1.msra.mxu0 0.0
  %726 = vmatprep.mubr.f32.mxu0 0.0
  %727 = vmatmul.mubr.f32.gmra.mrb[0].mxu0 %v630
  %v728 = vpop.f32.mrb[0].mxu0
  %v729 = vadd.f32 0.0, %v728
  %v730 = vpop.f32.mrb[0].mxu0
  %731 = vmatprep.mubr.f32.mxu0 0.0
  %732 = vmatmul.mubr.f32.gmra.mrb[0].mxu0 %v631
  %v733 = vpop.f32.mrb[0].mxu0
  %v734 = vadd.f32 0.0, %v733
  %v735 = vpop.f32.mrb[0].mxu0
  %736 = vmatprep.mubr.f32.mxu0 0.0
  %737 = vmatmul.mubr.f32.gmra.mrb[0].mxu0 %v632
  %v738 = vpop.f32.mrb[0].mxu0
  %v739 = vadd.f32 0.0, %v738
  %v740 = vpop.f32.mrb[0].mxu0
  %741 = vmatprep.mubr.f32.mxu0 0.0
  %742 = vmatmul.mubr.f32.gmra.mrb[0].mxu0 %v633
  %v743 = vpop.f32.mrb[0].mxu0
  %v744 = vadd.f32 0.0, %v743
  %v745 = vpop.f32.mrb[0].mxu0
  %746 = vmatprep.mubr.f32.mxu0 0.0
  %747 = vmatmul.mubr.f32.gmra.mrb[0].mxu0 %v634
  %v748 = vpop.f32.mrb[0].mxu0
  %v749 = vadd.f32 0.0, %v748
  %v750 = vpop.f32.mrb[0].mxu0
  %751 = vmatprep.mubr.f32.mxu0 0.0
  %752 = vmatmul.mubr.f32.gmra.mrb[0].mxu0 %v635
  %v753 = vpop.f32.mrb[0].mxu0
  %v754 = vadd.f32 0.0, %v753
  %v755 = vpop.f32.mrb[0].mxu0
  %756 = vmatprep.mubr.f32.mxu0 0.0
  %757 = vmatmul.mubr.f32.gmra.mrb[0].mxu0 %v636
  %v758 = vpop.f32.mrb[0].mxu0
  %v759 = vadd.f32 0.0, %v758
  %v760 = vpop.f32.mrb[0].mxu0
  %761 = vmatprep.mubr.f32.mxu0 0.0
  %762 = vmatmul.mubr.f32.gmra.mrb[0].mxu0 %v637
  %v763 = vpop.f32.mrb[0].mxu0
  %v764 = vadd.f32 0.0, %v763
  %v765 = vpop.f32.mrb[0].mxu0
  %766 = vmatprep.mubr.f32.mxu0 0.0
  %767 = vmatmul.mubr.f32.gmra.mrb[0].mxu0 %v638
  %v768 = vpop.f32.mrb[0].mxu0
  %v769 = vadd.f32 0.0, %v768
  %v770 = vpop.f32.mrb[0].mxu0
  %771 = vmatprep.mubr.f32.mxu0 0.0
  %772 = vmatmul.mubr.f32.gmra.mrb[0].mxu0 %v639
  %v773 = vpop.f32.mrb[0].mxu0
  %v774 = vadd.f32 0.0, %v773
  %v775 = vpop.f32.mrb[0].mxu0
  %776 = vmatprep.mubr.f32.mxu0 0.0
  %777 = vmatmul.mubr.f32.gmra.mrb[0].mxu0 %v640
  %v778 = vpop.f32.mrb[0].mxu0
  %v779 = vadd.f32 0.0, %v778
  %v780 = vpop.f32.mrb[0].mxu0
  %781 = vmatprep.mubr.f32.mxu0 0.0
  %782 = vmatmul.mubr.f32.gmra.mrb[0].mxu0 %v641
  %v783 = vpop.f32.mrb[0].mxu0
  %v784 = vadd.f32 0.0, %v783
  %v785 = vpop.f32.mrb[0].mxu0
  %786 = vmatprep.mubr.f32.mxu0 0.0
  %787 = vmatmul.mubr.f32.gmra.mrb[0].mxu0 %v642
  %v788 = vpop.f32.mrb[0].mxu0
  %v789 = vadd.f32 0.0, %v788
  %v790 = vpop.f32.mrb[0].mxu0
  %791 = vmatprep.mubr.f32.mxu0 0.0
  %792 = vmatmul.mubr.f32.gmra.mrb[0].mxu0 %v643
  %v793 = vpop.f32.mrb[0].mxu0
  %v794 = vadd.f32 0.0, %v793
  %v795 = vpop.f32.mrb[0].mxu0
  %796 = vmatprep.mubr.f32.mxu0 0.0
  %797 = vmatmul.mubr.f32.gmra.mrb[0].mxu0 %v644
  %v798 = vpop.f32.mrb[0].mxu0
  %v799 = vadd.f32 0.0, %v798
  %v800 = vpop.f32.mrb[0].mxu0
  %801 = vmatprep.mubr.f32.mxu0 0.0
  %802 = vmatmul.mubr.f32.gmra.mrb[0].mxu0 %v645
  %v803 = vpop.f32.mrb[0].mxu0
  %v804 = vadd.f32 0.0, %v803
  %v805 = vpop.f32.mrb[0].mxu0
  %806 = vdwg.mxu0
  %823 = vrot.lane.b32.xlu0 %v729, 66
  %v824 = vpop.permute.xlu0 %823
  %825 = vrot.lane.b32.xlu0 %v734, 66
  %v826 = vpop.permute.xlu0 %825
  %827 = vrot.lane.b32.xlu0 %v739, 66
  %v828 = vpop.permute.xlu0 %827
  %829 = vrot.lane.b32.xlu0 %v744, 66
  %v830 = vpop.permute.xlu0 %829
  %831 = vrot.lane.b32.xlu0 %v749, 66
  %v832 = vpop.permute.xlu0 %831
  %833 = vrot.lane.b32.xlu0 %v754, 66
  %v834 = vpop.permute.xlu0 %833
  %835 = vrot.lane.b32.xlu0 %v759, 66
  %v836 = vpop.permute.xlu0 %835
  %837 = vrot.lane.b32.xlu0 %v764, 66
  %v838 = vpop.permute.xlu0 %837
  %839 = vrot.lane.b32.xlu0 %v769, 66
  %v840 = vpop.permute.xlu0 %839
  %841 = vrot.lane.b32.xlu0 %v774, 66
  %v842 = vpop.permute.xlu0 %841
  %843 = vrot.lane.b32.xlu0 %v779, 66
  %v844 = vpop.permute.xlu0 %843
  %845 = vrot.lane.b32.xlu0 %v784, 66
  %v846 = vpop.permute.xlu0 %845
  %847 = vrot.lane.b32.xlu0 %v789, 66
  %v848 = vpop.permute.xlu0 %847
  %849 = vrot.lane.b32.xlu0 %v794, 66
  %v850 = vpop.permute.xlu0 %849
  %851 = vrot.lane.b32.xlu0 %v799, 66
  %v852 = vpop.permute.xlu0 %851
  %853 = vrot.lane.b32.xlu0 %v804, 66
  %v854 = vpop.permute.xlu0 %853
  %871 = vrot.lane.b32.xlu0 %v729, 2
  %v872 = vpop.permute.xlu0 %871
  %873 = vrot.lane.b32.xlu0 %v734, 2
  %v874 = vpop.permute.xlu0 %873
  %875 = vrot.lane.b32.xlu0 %v739, 2
  %v876 = vpop.permute.xlu0 %875
  %877 = vrot.lane.b32.xlu0 %v744, 2
  %v878 = vpop.permute.xlu0 %877
  %879 = vrot.lane.b32.xlu0 %v749, 2
  %v880 = vpop.permute.xlu0 %879
  %881 = vrot.lane.b32.xlu0 %v754, 2
  %v882 = vpop.permute.xlu0 %881
  %883 = vrot.lane.b32.xlu0 %v759, 2
  %v884 = vpop.permute.xlu0 %883
  %885 = vrot.lane.b32.xlu0 %v764, 2
  %v886 = vpop.permute.xlu0 %885
  %887 = vrot.lane.b32.xlu0 %v769, 2
  %v888 = vpop.permute.xlu0 %887
  %889 = vrot.lane.b32.xlu0 %v774, 2
  %v890 = vpop.permute.xlu0 %889
  %891 = vrot.lane.b32.xlu0 %v779, 2
  %v892 = vpop.permute.xlu0 %891
  %893 = vrot.lane.b32.xlu0 %v784, 2
  %v894 = vpop.permute.xlu0 %893
  %895 = vrot.lane.b32.xlu0 %v789, 2
  %v896 = vpop.permute.xlu0 %895
  %897 = vrot.lane.b32.xlu0 %v794, 2
  %v898 = vpop.permute.xlu0 %897
  %899 = vrot.lane.b32.xlu0 %v799, 2
  %v900 = vpop.permute.xlu0 %899
  %901 = vrot.lane.b32.xlu0 %v804, 2
  %v902 = vpop.permute.xlu0 %901
  %v919 = vsel %vm58, %v824, %v872
  %v920 = vsel %vm58, %v826, %v874
  %v921 = vsel %vm58, %v828, %v876
  %v922 = vsel %vm58, %v830, %v878
  %v923 = vsel %vm58, %v832, %v880
  %v924 = vsel %vm58, %v834, %v882
  %v925 = vsel %vm58, %v836, %v884
  %v926 = vsel %vm58, %v838, %v886
  %v927 = vsel %vm58, %v840, %v888
  %v928 = vsel %vm58, %v842, %v890
  %v929 = vsel %vm58, %v844, %v892
  %v930 = vsel %vm58, %v846, %v894
  %v931 = vsel %vm58, %v848, %v896
  %v932 = vsel %vm58, %v850, %v898
  %v933 = vsel %vm58, %v852, %v900
  %v934 = vsel %vm58, %v854, %v902
  %935 = vrot.lane.b32.xlu0 %v729, 65
  %v936 = vpop.permute.xlu0 %935
  %937 = vrot.lane.b32.xlu0 %v734, 65
  %v938 = vpop.permute.xlu0 %937
  %939 = vrot.lane.b32.xlu0 %v739, 65
  %v940 = vpop.permute.xlu0 %939
  %941 = vrot.lane.b32.xlu0 %v744, 65
  %v942 = vpop.permute.xlu0 %941
  %943 = vrot.lane.b32.xlu0 %v749, 65
  %v944 = vpop.permute.xlu0 %943
  %945 = vrot.lane.b32.xlu0 %v754, 65
  %v946 = vpop.permute.xlu0 %945
  %947 = vrot.lane.b32.xlu0 %v759, 65
  %v948 = vpop.permute.xlu0 %947
  %949 = vrot.lane.b32.xlu0 %v764, 65
  %v950 = vpop.permute.xlu0 %949
  %951 = vrot.lane.b32.xlu0 %v769, 65
  %v952 = vpop.permute.xlu0 %951
  %953 = vrot.lane.b32.xlu0 %v774, 65
  %v954 = vpop.permute.xlu0 %953
  %955 = vrot.lane.b32.xlu0 %v779, 65
  %v956 = vpop.permute.xlu0 %955
  %957 = vrot.lane.b32.xlu0 %v784, 65
  %v958 = vpop.permute.xlu0 %957
  %959 = vrot.lane.b32.xlu0 %v789, 65
  %v960 = vpop.permute.xlu0 %959
  %961 = vrot.lane.b32.xlu0 %v794, 65
  %v962 = vpop.permute.xlu0 %961
  %963 = vrot.lane.b32.xlu0 %v799, 65
  %v964 = vpop.permute.xlu0 %963
  %965 = vrot.lane.b32.xlu0 %v804, 65
  %v966 = vpop.permute.xlu0 %965
  %983 = vrot.lane.b32.xlu0 %v729, 1
  %v984 = vpop.permute.xlu0 %983
  %985 = vrot.lane.b32.xlu0 %v734, 1
  %v986 = vpop.permute.xlu0 %985
  %987 = vrot.lane.b32.xlu0 %v739, 1
  %v988 = vpop.permute.xlu0 %987
  %989 = vrot.lane.b32.xlu0 %v744, 1
  %v990 = vpop.permute.xlu0 %989
  %991 = vrot.lane.b32.xlu0 %v749, 1
  %v992 = vpop.permute.xlu0 %991
  %993 = vrot.lane.b32.xlu0 %v754, 1
  %v994 = vpop.permute.xlu0 %993
  %995 = vrot.lane.b32.xlu0 %v759, 1
  %v996 = vpop.permute.xlu0 %995
  %997 = vrot.lane.b32.xlu0 %v764, 1
  %v998 = vpop.permute.xlu0 %997
  %999 = vrot.lane.b32.xlu0 %v769, 1
  %v1000 = vpop.permute.xlu0 %999
  %1001 = vrot.lane.b32.xlu0 %v774, 1
  %v1002 = vpop.permute.xlu0 %1001
  %1003 = vrot.lane.b32.xlu0 %v779, 1
  %v1004 = vpop.permute.xlu0 %1003
  %1005 = vrot.lane.b32.xlu0 %v784, 1
  %v1006 = vpop.permute.xlu0 %1005
  %1007 = vrot.lane.b32.xlu0 %v789, 1
  %v1008 = vpop.permute.xlu0 %1007
  %1009 = vrot.lane.b32.xlu0 %v794, 1
  %v1010 = vpop.permute.xlu0 %1009
  %1011 = vrot.lane.b32.xlu0 %v799, 1
  %v1012 = vpop.permute.xlu0 %1011
  %1013 = vrot.lane.b32.xlu0 %v804, 1
  %v1014 = vpop.permute.xlu0 %1013
  %v1031 = vsel %vm62, %v936, %v984
  %v1032 = vsel %vm62, %v938, %v986
  %v1033 = vsel %vm62, %v940, %v988
  %v1034 = vsel %vm62, %v942, %v990
  %v1035 = vsel %vm62, %v944, %v992
  %v1036 = vsel %vm62, %v946, %v994
  %v1037 = vsel %vm62, %v948, %v996
  %v1038 = vsel %vm62, %v950, %v998
  %v1039 = vsel %vm62, %v952, %v1000
  %v1040 = vsel %vm62, %v954, %v1002
  %v1041 = vsel %vm62, %v956, %v1004
  %v1042 = vsel %vm62, %v958, %v1006
  %v1043 = vsel %vm62, %v960, %v1008
  %v1044 = vsel %vm62, %v962, %v1010
  %v1045 = vsel %vm62, %v964, %v1012
  %v1046 = vsel %vm62, %v966, %v1014
  %1047 = vrot.lane.b32.xlu0 %v729, 127
  %v1048 = vpop.permute.xlu0 %1047
  %1049 = vrot.lane.b32.xlu0 %v734, 127
  %v1050 = vpop.permute.xlu0 %1049
  %1051 = vrot.lane.b32.xlu0 %v739, 127
  %v1052 = vpop.permute.xlu0 %1051
  %1053 = vrot.lane.b32.xlu0 %v744, 127
  %v1054 = vpop.permute.xlu0 %1053
  %1055 = vrot.lane.b32.xlu0 %v749, 127
  %v1056 = vpop.permute.xlu0 %1055
  %1057 = vrot.lane.b32.xlu0 %v754, 127
  %v1058 = vpop.permute.xlu0 %1057
  %1059 = vrot.lane.b32.xlu0 %v759, 127
  %v1060 = vpop.permute.xlu0 %1059
  %1061 = vrot.lane.b32.xlu0 %v764, 127
  %v1062 = vpop.permute.xlu0 %1061
  %1063 = vrot.lane.b32.xlu0 %v769, 127
  %v1064 = vpop.permute.xlu0 %1063
  %1065 = vrot.lane.b32.xlu0 %v774, 127
  %v1066 = vpop.permute.xlu0 %1065
  %1067 = vrot.lane.b32.xlu0 %v779, 127
  %v1068 = vpop.permute.xlu0 %1067
  %1069 = vrot.lane.b32.xlu0 %v784, 127
  %v1070 = vpop.permute.xlu0 %1069
  %1071 = vrot.lane.b32.xlu0 %v789, 127
  %v1072 = vpop.permute.xlu0 %1071
  %1073 = vrot.lane.b32.xlu0 %v794, 127
  %v1074 = vpop.permute.xlu0 %1073
  %1075 = vrot.lane.b32.xlu0 %v799, 127
  %v1076 = vpop.permute.xlu0 %1075
  %1077 = vrot.lane.b32.xlu0 %v804, 127
  %v1078 = vpop.permute.xlu0 %1077
  %1095 = vrot.lane.b32.xlu0 %v729, 63
  %v1096 = vpop.permute.xlu0 %1095
  %1097 = vrot.lane.b32.xlu0 %v734, 63
  %v1098 = vpop.permute.xlu0 %1097
  %1099 = vrot.lane.b32.xlu0 %v739, 63
  %v1100 = vpop.permute.xlu0 %1099
  %1101 = vrot.lane.b32.xlu0 %v744, 63
  %v1102 = vpop.permute.xlu0 %1101
  %1103 = vrot.lane.b32.xlu0 %v749, 63
  %v1104 = vpop.permute.xlu0 %1103
  %1105 = vrot.lane.b32.xlu0 %v754, 63
  %v1106 = vpop.permute.xlu0 %1105
  %1107 = vrot.lane.b32.xlu0 %v759, 63
  %v1108 = vpop.permute.xlu0 %1107
  %1109 = vrot.lane.b32.xlu0 %v764, 63
  %v1110 = vpop.permute.xlu0 %1109
  %1111 = vrot.lane.b32.xlu0 %v769, 63
  %v1112 = vpop.permute.xlu0 %1111
  %1113 = vrot.lane.b32.xlu0 %v774, 63
  %v1114 = vpop.permute.xlu0 %1113
  %1115 = vrot.lane.b32.xlu0 %v779, 63
  %v1116 = vpop.permute.xlu0 %1115
  %1117 = vrot.lane.b32.xlu0 %v784, 63
  %v1118 = vpop.permute.xlu0 %1117
  %1119 = vrot.lane.b32.xlu0 %v789, 63
  %v1120 = vpop.permute.xlu0 %1119
  %1121 = vrot.lane.b32.xlu0 %v794, 63
  %v1122 = vpop.permute.xlu0 %1121
  %1123 = vrot.lane.b32.xlu0 %v799, 63
  %v1124 = vpop.permute.xlu0 %1123
  %1125 = vrot.lane.b32.xlu0 %v804, 63
  %v1126 = vpop.permute.xlu0 %1125
  %vm1143 = vcmask 515072
  %v1144 = vsel %vm1143, %v1048, %v1096
  %v1145 = vsel %vm1143, %v1050, %v1098
  %v1146 = vsel %vm1143, %v1052, %v1100
  %v1147 = vsel %vm1143, %v1054, %v1102
  %v1148 = vsel %vm1143, %v1056, %v1104
  %v1149 = vsel %vm1143, %v1058, %v1106
  %v1150 = vsel %vm1143, %v1060, %v1108
  %v1151 = vsel %vm1143, %v1062, %v1110
  %v1152 = vsel %vm1143, %v1064, %v1112
  %v1153 = vsel %vm1143, %v1066, %v1114
  %v1154 = vsel %vm1143, %v1068, %v1116
  %v1155 = vsel %vm1143, %v1070, %v1118
  %v1156 = vsel %vm1143, %v1072, %v1120
  %v1157 = vsel %vm1143, %v1074, %v1122
  %v1158 = vsel %vm1143, %v1076, %v1124
  %v1159 = vsel %vm1143, %v1078, %v1126
  %1160 = vrot.lane.b32.xlu0 %v729, 126
  %v1161 = vpop.permute.xlu0 %1160
  %1162 = vrot.lane.b32.xlu0 %v734, 126
  %v1163 = vpop.permute.xlu0 %1162
  %1164 = vrot.lane.b32.xlu0 %v739, 126
  %v1165 = vpop.permute.xlu0 %1164
  %1166 = vrot.lane.b32.xlu0 %v744, 126
  %v1167 = vpop.permute.xlu0 %1166
  %1168 = vrot.lane.b32.xlu0 %v749, 126
  %v1169 = vpop.permute.xlu0 %1168
  %1170 = vrot.lane.b32.xlu0 %v754, 126
  %v1171 = vpop.permute.xlu0 %1170
  %1172 = vrot.lane.b32.xlu0 %v759, 126
  %v1173 = vpop.permute.xlu0 %1172
  %1174 = vrot.lane.b32.xlu0 %v764, 126
  %v1175 = vpop.permute.xlu0 %1174
  %1176 = vrot.lane.b32.xlu0 %v769, 126
  %v1177 = vpop.permute.xlu0 %1176
  %1178 = vrot.lane.b32.xlu0 %v774, 126
  %v1179 = vpop.permute.xlu0 %1178
  %1180 = vrot.lane.b32.xlu0 %v779, 126
  %v1181 = vpop.permute.xlu0 %1180
  %1182 = vrot.lane.b32.xlu0 %v784, 126
  %v1183 = vpop.permute.xlu0 %1182
  %1184 = vrot.lane.b32.xlu0 %v789, 126
  %v1185 = vpop.permute.xlu0 %1184
  %1186 = vrot.lane.b32.xlu0 %v794, 126
  %v1187 = vpop.permute.xlu0 %1186
  %1188 = vrot.lane.b32.xlu0 %v799, 126
  %v1189 = vpop.permute.xlu0 %1188
  %1190 = vrot.lane.b32.xlu0 %v804, 126
  %v1191 = vpop.permute.xlu0 %1190
  %1208 = vrot.lane.b32.xlu0 %v729, 62
  %v1209 = vpop.permute.xlu0 %1208
  %1210 = vrot.lane.b32.xlu0 %v734, 62
  %v1211 = vpop.permute.xlu0 %1210
  %1212 = vrot.lane.b32.xlu0 %v739, 62
  %v1213 = vpop.permute.xlu0 %1212
  %1214 = vrot.lane.b32.xlu0 %v744, 62
  %v1215 = vpop.permute.xlu0 %1214
  %1216 = vrot.lane.b32.xlu0 %v749, 62
  %v1217 = vpop.permute.xlu0 %1216
  %1218 = vrot.lane.b32.xlu0 %v754, 62
  %v1219 = vpop.permute.xlu0 %1218
  %1220 = vrot.lane.b32.xlu0 %v759, 62
  %v1221 = vpop.permute.xlu0 %1220
  %1222 = vrot.lane.b32.xlu0 %v764, 62
  %v1223 = vpop.permute.xlu0 %1222
  %1224 = vrot.lane.b32.xlu0 %v769, 62
  %v1225 = vpop.permute.xlu0 %1224
  %1226 = vrot.lane.b32.xlu0 %v774, 62
  %v1227 = vpop.permute.xlu0 %1226
  %1228 = vrot.lane.b32.xlu0 %v779, 62
  %v1229 = vpop.permute.xlu0 %1228
  %1230 = vrot.lane.b32.xlu0 %v784, 62
  %v1231 = vpop.permute.xlu0 %1230
  %1232 = vrot.lane.b32.xlu0 %v789, 62
  %v1233 = vpop.permute.xlu0 %1232
  %1234 = vrot.lane.b32.xlu0 %v794, 62
  %v1235 = vpop.permute.xlu0 %1234
  %1236 = vrot.lane.b32.xlu0 %v799, 62
  %v1237 = vpop.permute.xlu0 %1236
  %1238 = vrot.lane.b32.xlu0 %v804, 62
  %v1239 = vpop.permute.xlu0 %1238
  %vm1256 = vcmask 506880
  %v1257 = vsel %vm1256, %v1161, %v1209
  %v1258 = vsel %vm1256, %v1163, %v1211
  %v1259 = vsel %vm1256, %v1165, %v1213
  %v1260 = vsel %vm1256, %v1167, %v1215
  %v1261 = vsel %vm1256, %v1169, %v1217
  %v1262 = vsel %vm1256, %v1171, %v1219
  %v1263 = vsel %vm1256, %v1173, %v1221
  %v1264 = vsel %vm1256, %v1175, %v1223
  %v1265 = vsel %vm1256, %v1177, %v1225
  %v1266 = vsel %vm1256, %v1179, %v1227
  %v1267 = vsel %vm1256, %v1181, %v1229
  %v1268 = vsel %vm1256, %v1183, %v1231
  %v1269 = vsel %vm1256, %v1185, %v1233
  %v1270 = vsel %vm1256, %v1187, %v1235
  %v1271 = vsel %vm1256, %v1189, %v1237
  %v1272 = vsel %vm1256, %v1191, %v1239
  %v1273 = vld [vmem:[%s5] sm:$0xff]
  %v1274 = vld [vmem:[%s5 + $0x8] sm:$0xff]
  %v1275 = vld [vmem:[%s5 + $0x10] sm:$0xff]
  %v1276 = vld [vmem:[%s5 + $0x18] sm:$0xff]
  %v1277 = vld [vmem:[%s5 + $0x20] sm:$0xff]
  %v1278 = vld [vmem:[%s5 + $0x28] sm:$0xff]
  %v1279 = vld [vmem:[%s5 + $0x30] sm:$0xff]
  %v1280 = vld [vmem:[%s5 + $0x38] sm:$0xff]
  %v1281 = vld [vmem:[%s5 + $0x40] sm:$0xff]
  %v1282 = vld [vmem:[%s5 + $0x48] sm:$0xff]
  %v1283 = vld [vmem:[%s5 + $0x50] sm:$0xff]
  %v1284 = vld [vmem:[%s5 + $0x58] sm:$0xff]
  %v1285 = vld [vmem:[%s5 + $0x60] sm:$0xff]
  %v1286 = vld [vmem:[%s5 + $0x68] sm:$0xff]
  %v1287 = vld [vmem:[%s5 + $0x70] sm:$0xff]
  %v1288 = vld [vmem:[%s5 + $0x78] sm:$0xff]
  %v1289 = vld [vmem:[%s5 + $0x80] sm:$0xff]
  %v1290 = vld [vmem:[%s5 + $0x88] sm:$0xff]
  %v1291 = vld [vmem:[%s5 + $0x90] sm:$0xff]
  %v1292 = vld [vmem:[%s5 + $0x98] sm:$0xff]
  %v1293 = vld [vmem:[%s5 + $0xa0] sm:$0xff]
  %v1294 = vld [vmem:[%s5 + $0xa8] sm:$0xff]
  %v1295 = vld [vmem:[%s5 + $0xb0] sm:$0xff]
  %v1296 = vld [vmem:[%s5 + $0xb8] sm:$0xff]
  %v1297 = vld [vmem:[%s5 + $0xc0] sm:$0xff]
  %v1298 = vld [vmem:[%s5 + $0xc8] sm:$0xff]
  %v1299 = vld [vmem:[%s5 + $0xd0] sm:$0xff]
  %v1300 = vld [vmem:[%s5 + $0xd8] sm:$0xff]
  %v1301 = vld [vmem:[%s5 + $0xe0] sm:$0xff]
  %v1302 = vld [vmem:[%s5 + $0xe8] sm:$0xff]
  %v1303 = vld [vmem:[%s5 + $0xf0] sm:$0xff]
  %v1304 = vld [vmem:[%s5 + $0xf8] sm:$0xff]
  %v1305 = vld [vmem:[%s5 + $0x100] sm:$0xff]
  %v1306 = vld [vmem:[%s5 + $0x108] sm:$0xff]
  %v1307 = vld [vmem:[%s5 + $0x110] sm:$0xff]
  %v1308 = vld [vmem:[%s5 + $0x118] sm:$0xff]
  %v1309 = vld [vmem:[%s5 + $0x120] sm:$0xff]
  %v1310 = vld [vmem:[%s5 + $0x128] sm:$0xff]
  %v1311 = vld [vmem:[%s5 + $0x130] sm:$0xff]
  %v1312 = vld [vmem:[%s5 + $0x138] sm:$0xff]
  %v1313 = vld [vmem:[%s5 + $0x140] sm:$0xff]
  %v1314 = vld [vmem:[%s5 + $0x148] sm:$0xff]
  %v1315 = vld [vmem:[%s5 + $0x150] sm:$0xff]
  %v1316 = vld [vmem:[%s5 + $0x158] sm:$0xff]
  %v1317 = vld [vmem:[%s5 + $0x160] sm:$0xff]
  %v1318 = vld [vmem:[%s5 + $0x168] sm:$0xff]
  %v1319 = vld [vmem:[%s5 + $0x170] sm:$0xff]
  %v1320 = vld [vmem:[%s5 + $0x178] sm:$0xff]
  %v1321 = vld [vmem:[%s5 + $0x180] sm:$0xff]
  %v1322 = vld [vmem:[%s5 + $0x188] sm:$0xff]
  %v1323 = vld [vmem:[%s5 + $0x190] sm:$0xff]
  %v1324 = vld [vmem:[%s5 + $0x198] sm:$0xff]
  %v1325 = vld [vmem:[%s5 + $0x1a0] sm:$0xff]
  %v1326 = vld [vmem:[%s5 + $0x1a8] sm:$0xff]
  %v1327 = vld [vmem:[%s5 + $0x1b0] sm:$0xff]
  %v1328 = vld [vmem:[%s5 + $0x1b8] sm:$0xff]
  %v1329 = vld [vmem:[%s5 + $0x1c0] sm:$0xff]
  %v1330 = vld [vmem:[%s5 + $0x1c8] sm:$0xff]
  %v1331 = vld [vmem:[%s5 + $0x1d0] sm:$0xff]
  %v1332 = vld [vmem:[%s5 + $0x1d8] sm:$0xff]
  %v1333 = vld [vmem:[%s5 + $0x1e0] sm:$0xff]
  %v1334 = vld [vmem:[%s5 + $0x1e8] sm:$0xff]
  %v1335 = vld [vmem:[%s5 + $0x1f0] sm:$0xff]
  %v1336 = vld [vmem:[%s5 + $0x1f8] sm:$0xff]
  %v1337 = vld [vmem:[%s5 + $0x200] sm:$0xff]
  %v1338 = vld [vmem:[%s5 + $0x208] sm:$0xff]
  %v1339 = vld [vmem:[%s5 + $0x210] sm:$0xff]
  %v1340 = vld [vmem:[%s5 + $0x218] sm:$0xff]
  %v1341 = vld [vmem:[%s5 + $0x220] sm:$0xff]
  %v1342 = vld [vmem:[%s5 + $0x228] sm:$0xff]
  %v1343 = vld [vmem:[%s5 + $0x230] sm:$0xff]
  %v1344 = vld [vmem:[%s5 + $0x238] sm:$0xff]
  %v1345 = vld [vmem:[%s5 + $0x240] sm:$0xff]
  %v1346 = vld [vmem:[%s5 + $0x248] sm:$0xff]
  %v1347 = vld [vmem:[%s5 + $0x250] sm:$0xff]
  %v1348 = vld [vmem:[%s5 + $0x258] sm:$0xff]
  %v1349 = vld [vmem:[%s5 + $0x260] sm:$0xff]
  %v1350 = vld [vmem:[%s5 + $0x268] sm:$0xff]
  %v1351 = vld [vmem:[%s5 + $0x270] sm:$0xff]
  %v1352 = vld [vmem:[%s5 + $0x278] sm:$0xff]
  %v1353 = vld [vmem:[%s5 + $0x280] sm:$0xff]
  %v1354 = vld [vmem:[%s5 + $0x288] sm:$0xff]
  %v1355 = vld [vmem:[%s5 + $0x290] sm:$0xff]
  %v1356 = vld [vmem:[%s5 + $0x298] sm:$0xff]
  %v1357 = vld [vmem:[%s5 + $0x2a0] sm:$0xff]
  %v1358 = vld [vmem:[%s5 + $0x2a8] sm:$0xff]
  %v1359 = vld [vmem:[%s5 + $0x2b0] sm:$0xff]
  %v1360 = vld [vmem:[%s5 + $0x2b8] sm:$0xff]
  %v1361 = vld [vmem:[%s5 + $0x2c0] sm:$0xff]
  %v1362 = vld [vmem:[%s5 + $0x2c8] sm:$0xff]
  %v1363 = vld [vmem:[%s5 + $0x2d0] sm:$0xff]
  %v1364 = vld [vmem:[%s5 + $0x2d8] sm:$0xff]
  %v1365 = vld [vmem:[%s5 + $0x2e0] sm:$0xff]
  %v1366 = vld [vmem:[%s5 + $0x2e8] sm:$0xff]
  %v1367 = vld [vmem:[%s5 + $0x2f0] sm:$0xff]
  %v1368 = vld [vmem:[%s5 + $0x2f8] sm:$0xff]
  %v1369 = vld [vmem:[%s5 + $0x300] sm:$0xff]
  %v1370 = vld [vmem:[%s5 + $0x308] sm:$0xff]
  %v1371 = vld [vmem:[%s5 + $0x310] sm:$0xff]
  %v1372 = vld [vmem:[%s5 + $0x318] sm:$0xff]
  %v1373 = vld [vmem:[%s5 + $0x320] sm:$0xff]
  %v1374 = vld [vmem:[%s5 + $0x328] sm:$0xff]
  %v1375 = vld [vmem:[%s5 + $0x330] sm:$0xff]
  %v1376 = vld [vmem:[%s5 + $0x338] sm:$0xff]
  %v1377 = vld [vmem:[%s5 + $0x340] sm:$0xff]
  %v1378 = vld [vmem:[%s5 + $0x348] sm:$0xff]
  %v1379 = vld [vmem:[%s5 + $0x350] sm:$0xff]
  %v1380 = vld [vmem:[%s5 + $0x358] sm:$0xff]
  %v1381 = vld [vmem:[%s5 + $0x360] sm:$0xff]
  %v1382 = vld [vmem:[%s5 + $0x368] sm:$0xff]
  %v1383 = vld [vmem:[%s5 + $0x370] sm:$0xff]
  %v1384 = vld [vmem:[%s5 + $0x378] sm:$0xff]
  %v1385 = vld [vmem:[%s5 + $0x380] sm:$0xff]
  %v1386 = vld [vmem:[%s5 + $0x388] sm:$0xff]
  %v1387 = vld [vmem:[%s5 + $0x390] sm:$0xff]
  %v1388 = vld [vmem:[%s5 + $0x398] sm:$0xff]
  %v1389 = vld [vmem:[%s5 + $0x3a0] sm:$0xff]
  %v1390 = vld [vmem:[%s5 + $0x3a8] sm:$0xff]
  %v1391 = vld [vmem:[%s5 + $0x3b0] sm:$0xff]
  %v1392 = vld [vmem:[%s5 + $0x3b8] sm:$0xff]
  %v1393 = vld [vmem:[%s5 + $0x3c0] sm:$0xff]
  %v1394 = vld [vmem:[%s5 + $0x3c8] sm:$0xff]
  %v1395 = vld [vmem:[%s5 + $0x3d0] sm:$0xff]
  %v1396 = vld [vmem:[%s5 + $0x3d8] sm:$0xff]
  %v1397 = vld [vmem:[%s5 + $0x3e0] sm:$0xff]
  %v1398 = vld [vmem:[%s5 + $0x3e8] sm:$0xff]
  %v1399 = vld [vmem:[%s5 + $0x3f0] sm:$0xff]
  %v1400 = vld [vmem:[%s5 + $0x3f8] sm:$0xff]
  %v1401 = vld [vmem:[%s5 + $0x400] sm:$0xff]
  %v1402 = vld [vmem:[%s5 + $0x408] sm:$0xff]
  %v1403 = vld [vmem:[%s5 + $0x410] sm:$0xff]
  %v1404 = vld [vmem:[%s5 + $0x418] sm:$0xff]
  %v1405 = vld [vmem:[%s5 + $0x420] sm:$0xff]
  %v1406 = vld [vmem:[%s5 + $0x428] sm:$0xff]
  %v1407 = vld [vmem:[%s5 + $0x430] sm:$0xff]
  %v1408 = vld [vmem:[%s5 + $0x438] sm:$0xff]
  %v1409 = vld [vmem:[%s5 + $0x440] sm:$0xff]
  %v1410 = vld [vmem:[%s5 + $0x448] sm:$0xff]
  %v1411 = vld [vmem:[%s5 + $0x450] sm:$0xff]
  %v1412 = vld [vmem:[%s5 + $0x458] sm:$0xff]
  %v1413 = vld [vmem:[%s5 + $0x460] sm:$0xff]
  %v1414 = vld [vmem:[%s5 + $0x468] sm:$0xff]
  %v1415 = vld [vmem:[%s5 + $0x470] sm:$0xff]
  %v1416 = vld [vmem:[%s5 + $0x478] sm:$0xff]
  %v1417 = vld [vmem:[%s5 + $0x480] sm:$0xff]
  %v1418 = vld [vmem:[%s5 + $0x488] sm:$0xff]
  %v1419 = vld [vmem:[%s5 + $0x490] sm:$0xff]
  %v1420 = vld [vmem:[%s5 + $0x498] sm:$0xff]
  %v1421 = vld [vmem:[%s5 + $0x4a0] sm:$0xff]
  %v1422 = vld [vmem:[%s5 + $0x4a8] sm:$0xff]
  %v1423 = vld [vmem:[%s5 + $0x4b0] sm:$0xff]
  %v1424 = vld [vmem:[%s5 + $0x4b8] sm:$0xff]
  %v1425 = vld [vmem:[%s5 + $0x4c0] sm:$0xff]
  %v1426 = vld [vmem:[%s5 + $0x4c8] sm:$0xff]
  %v1427 = vld [vmem:[%s5 + $0x4d0] sm:$0xff]
  %v1428 = vld [vmem:[%s5 + $0x4d8] sm:$0xff]
  %v1429 = vld [vmem:[%s5 + $0x4e0] sm:$0xff]
  %v1430 = vld [vmem:[%s5 + $0x4e8] sm:$0xff]
  %v1431 = vld [vmem:[%s5 + $0x4f0] sm:$0xff]
  %v1432 = vld [vmem:[%s5 + $0x4f8] sm:$0xff]
  %1433 = vmatprep.subr.mxu0 0.0
  %1434 = vmatpush1.msra.mxu0 %v919
  %1435 = vmatprep.subr.mxu0 0.0
  %1436 = vmatpush1.msra.mxu0 %v920
  %1437 = vmatprep.subr.mxu0 0.0
  %1438 = vmatpush1.msra.mxu0 %v921
  %1439 = vmatprep.subr.mxu0 0.0
  %1440 = vmatpush1.msra.mxu0 %v922
  %1441 = vmatprep.subr.mxu0 0.0
  %1442 = vmatpush1.msra.mxu0 %v923
  %1443 = vmatprep.subr.mxu0 0.0
  %1444 = vmatpush1.msra.mxu0 %v924
  %1445 = vmatprep.subr.mxu0 0.0
  %1446 = vmatpush1.msra.mxu0 %v925
  %1447 = vmatprep.subr.mxu0 0.0
  %1448 = vmatpush1.msra.mxu0 %v926
  %1449 = vmatprep.subr.mxu0 0.0
  %1450 = vmatpush1.msra.mxu0 %v927
  %1451 = vmatprep.subr.mxu0 0.0
  %1452 = vmatpush1.msra.mxu0 %v928
  %1453 = vmatprep.subr.mxu0 0.0
  %1454 = vmatpush1.msra.mxu0 %v929
  %1455 = vmatprep.subr.mxu0 0.0
  %1456 = vmatpush1.msra.mxu0 %v930
  %1457 = vmatprep.subr.mxu0 0.0
  %1458 = vmatpush1.msra.mxu0 %v931
  %1459 = vmatprep.subr.mxu0 0.0
  %1460 = vmatpush1.msra.mxu0 %v932
  %1461 = vmatprep.subr.mxu0 0.0
  %1462 = vmatpush1.msra.mxu0 %v933
  %1463 = vmatprep.subr.mxu0 0.0
  %1464 = vmatpush1.msra.mxu0 %v934
  %1465 = vmatprep.subr.mxu0 0.0
  %1466 = vmatpush1.msra.mxu0 %v1031
  %1467 = vmatprep.subr.mxu0 0.0
  %1468 = vmatpush1.msra.mxu0 %v1032
  %1469 = vmatprep.subr.mxu0 0.0
  %1470 = vmatpush1.msra.mxu0 %v1033
  %1471 = vmatprep.subr.mxu0 0.0
  %1472 = vmatpush1.msra.mxu0 %v1034
  %1473 = vmatprep.subr.mxu0 0.0
  %1474 = vmatpush1.msra.mxu0 %v1035
  %1475 = vmatprep.subr.mxu0 0.0
  %1476 = vmatpush1.msra.mxu0 %v1036
  %1477 = vmatprep.subr.mxu0 0.0
  %1478 = vmatpush1.msra.mxu0 %v1037
  %1479 = vmatprep.subr.mxu0 0.0
  %1480 = vmatpush1.msra.mxu0 %v1038
  %1481 = vmatprep.subr.mxu0 0.0
  %1482 = vmatpush1.msra.mxu0 %v1039
  %1483 = vmatprep.subr.mxu0 0.0
  %1484 = vmatpush1.msra.mxu0 %v1040
  %1485 = vmatprep.subr.mxu0 0.0
  %1486 = vmatpush1.msra.mxu0 %v1041
  %1487 = vmatprep.subr.mxu0 0.0
  %1488 = vmatpush1.msra.mxu0 %v1042
  %1489 = vmatprep.subr.mxu0 0.0
  %1490 = vmatpush1.msra.mxu0 %v1043
  %1491 = vmatprep.subr.mxu0 0.0
  %1492 = vmatpush1.msra.mxu0 %v1044
  %1493 = vmatprep.subr.mxu0 0.0
  %1494 = vmatpush1.msra.mxu0 %v1045
  %1495 = vmatprep.subr.mxu0 0.0
  %1496 = vmatpush1.msra.mxu0 %v1046
  %1497 = vmatprep.mubr.f32.mxu0 %v1274
  %1498 = vmatmul.mubr.f32.gmra.mrb[0].mxu0 %v1273
  %v1499 = vpop.f32.mrb[0].mxu0
  %v1500 = vadd.f32 0.0, %v1499
  %v1501 = vpop.f32.mrb[0].mxu0
  %1502 = vmatprep.mubr.f32.mxu0 %v1279
  %1503 = vmatmul.mubr.f32.gmra.mrb[0].mxu0 %v1278
  %v1504 = vpop.f32.mrb[0].mxu0
  %v1505 = vadd.f32 0.0, %v1504
  %v1506 = vpop.f32.mrb[0].mxu0
  %1507 = vmatprep.mubr.f32.mxu0 %v1284
  %1508 = vmatmul.mubr.f32.gmra.mrb[0].mxu0 %v1283
  %v1509 = vpop.f32.mrb[0].mxu0
  %v1510 = vadd.f32 0.0, %v1509
  %v1511 = vpop.f32.mrb[0].mxu0
  %1512 = vmatprep.mubr.f32.mxu0 %v1289
  %1513 = vmatmul.mubr.f32.gmra.mrb[0].mxu0 %v1288
  %v1514 = vpop.f32.mrb[0].mxu0
  %v1515 = vadd.f32 0.0, %v1514
  %v1516 = vpop.f32.mrb[0].mxu0
  %1517 = vmatprep.mubr.f32.mxu0 %v1294
  %1518 = vmatmul.mubr.f32.gmra.mrb[0].mxu0 %v1293
  %v1519 = vpop.f32.mrb[0].mxu0
  %v1520 = vadd.f32 0.0, %v1519
  %v1521 = vpop.f32.mrb[0].mxu0
  %1522 = vmatprep.mubr.f32.mxu0 %v1299
  %1523 = vmatmul.mubr.f32.gmra.mrb[0].mxu0 %v1298
  %v1524 = vpop.f32.mrb[0].mxu0
  %v1525 = vadd.f32 0.0, %v1524
  %v1526 = vpop.f32.mrb[0].mxu0
  %1527 = vmatprep.mubr.f32.mxu0 %v1304
  %1528 = vmatmul.mubr.f32.gmra.mrb[0].mxu0 %v1303
  %v1529 = vpop.f32.mrb[0].mxu0
  %v1530 = vadd.f32 0.0, %v1529
  %v1531 = vpop.f32.mrb[0].mxu0
  %1532 = vmatprep.mubr.f32.mxu0 %v1309
  %1533 = vmatmul.mubr.f32.gmra.mrb[0].mxu0 %v1308
  %v1534 = vpop.f32.mrb[0].mxu0
  %v1535 = vadd.f32 0.0, %v1534
  %v1536 = vpop.f32.mrb[0].mxu0
  %1537 = vmatprep.mubr.f32.mxu0 %v1314
  %1538 = vmatmul.mubr.f32.gmra.mrb[0].mxu0 %v1313
  %v1539 = vpop.f32.mrb[0].mxu0
  %v1540 = vadd.f32 0.0, %v1539
  %v1541 = vpop.f32.mrb[0].mxu0
  %1542 = vmatprep.mubr.f32.mxu0 %v1319
  %1543 = vmatmul.mubr.f32.gmra.mrb[0].mxu0 %v1318
  %v1544 = vpop.f32.mrb[0].mxu0
  %v1545 = vadd.f32 0.0, %v1544
  %v1546 = vpop.f32.mrb[0].mxu0
  %1547 = vmatprep.mubr.f32.mxu0 %v1324
  %1548 = vmatmul.mubr.f32.gmra.mrb[0].mxu0 %v1323
  %v1549 = vpop.f32.mrb[0].mxu0
  %v1550 = vadd.f32 0.0, %v1549
  %v1551 = vpop.f32.mrb[0].mxu0
  %1552 = vmatprep.mubr.f32.mxu0 %v1329
  %1553 = vmatmul.mubr.f32.gmra.mrb[0].mxu0 %v1328
  %v1554 = vpop.f32.mrb[0].mxu0
  %v1555 = vadd.f32 0.0, %v1554
  %v1556 = vpop.f32.mrb[0].mxu0
  %1557 = vmatprep.mubr.f32.mxu0 %v1334
  %1558 = vmatmul.mubr.f32.gmra.mrb[0].mxu0 %v1333
  %v1559 = vpop.f32.mrb[0].mxu0
  %v1560 = vadd.f32 0.0, %v1559
  %v1561 = vpop.f32.mrb[0].mxu0
  %1562 = vmatprep.mubr.f32.mxu0 %v1339
  %1563 = vmatmul.mubr.f32.gmra.mrb[0].mxu0 %v1338
  %v1564 = vpop.f32.mrb[0].mxu0
  %v1565 = vadd.f32 0.0, %v1564
  %v1566 = vpop.f32.mrb[0].mxu0
  %1567 = vmatprep.mubr.f32.mxu0 %v1344
  %1568 = vmatmul.mubr.f32.gmra.mrb[0].mxu0 %v1343
  %v1569 = vpop.f32.mrb[0].mxu0
  %v1570 = vadd.f32 0.0, %v1569
  %v1571 = vpop.f32.mrb[0].mxu0
  %1572 = vmatprep.mubr.f32.mxu0 %v1349
  %1573 = vmatmul.mubr.f32.gmra.mrb[0].mxu0 %v1348
  %v1574 = vpop.f32.mrb[0].mxu0
  %v1575 = vadd.f32 0.0, %v1574
  %v1576 = vpop.f32.mrb[0].mxu0
  %1577 = vmatprep.mubr.f32.mxu0 %v1354
  %1578 = vmatmul.mubr.f32.gmra.mrb[0].mxu0 %v1353
  %v1579 = vpop.f32.mrb[0].mxu0
  %v1580 = vadd.f32 0.0, %v1579
  %v1581 = vpop.f32.mrb[0].mxu0
  %1582 = vmatprep.mubr.f32.mxu0 %v1359
  %1583 = vmatmul.mubr.f32.gmra.mrb[0].mxu0 %v1358
  %v1584 = vpop.f32.mrb[0].mxu0
  %v1585 = vadd.f32 0.0, %v1584
  %v1586 = vpop.f32.mrb[0].mxu0
  %1587 = vmatprep.mubr.f32.mxu0 %v1364
  %1588 = vmatmul.mubr.f32.gmra.mrb[0].mxu0 %v1363
  %v1589 = vpop.f32.mrb[0].mxu0
  %v1590 = vadd.f32 0.0, %v1589
  %v1591 = vpop.f32.mrb[0].mxu0
  %1592 = vmatprep.mubr.f32.mxu0 %v1369
  %1593 = vmatmul.mubr.f32.gmra.mrb[0].mxu0 %v1368
  %v1594 = vpop.f32.mrb[0].mxu0
  %v1595 = vadd.f32 0.0, %v1594
  %v1596 = vpop.f32.mrb[0].mxu0
  %1597 = vmatprep.mubr.f32.mxu0 %v1374
  %1598 = vmatmul.mubr.f32.gmra.mrb[0].mxu0 %v1373
  %v1599 = vpop.f32.mrb[0].mxu0
  %v1600 = vadd.f32 0.0, %v1599
  %v1601 = vpop.f32.mrb[0].mxu0
  %1602 = vmatprep.mubr.f32.mxu0 %v1379
  %1603 = vmatmul.mubr.f32.gmra.mrb[0].mxu0 %v1378
  %v1604 = vpop.f32.mrb[0].mxu0
  %v1605 = vadd.f32 0.0, %v1604
  %v1606 = vpop.f32.mrb[0].mxu0
  %1607 = vmatprep.mubr.f32.mxu0 %v1384
  %1608 = vmatmul.mubr.f32.gmra.mrb[0].mxu0 %v1383
  %v1609 = vpop.f32.mrb[0].mxu0
  %v1610 = vadd.f32 0.0, %v1609
  %v1611 = vpop.f32.mrb[0].mxu0
  %1612 = vmatprep.mubr.f32.mxu0 %v1389
  %1613 = vmatmul.mubr.f32.gmra.mrb[0].mxu0 %v1388
  %v1614 = vpop.f32.mrb[0].mxu0
  %v1615 = vadd.f32 0.0, %v1614
  %v1616 = vpop.f32.mrb[0].mxu0
  %1617 = vmatprep.mubr.f32.mxu0 %v1394
  %1618 = vmatmul.mubr.f32.gmra.mrb[0].mxu0 %v1393
  %v1619 = vpop.f32.mrb[0].mxu0
  %v1620 = vadd.f32 0.0, %v1619
  %v1621 = vpop.f32.mrb[0].mxu0
  %1622 = vmatprep.mubr.f32.mxu0 %v1399
  %1623 = vmatmul.mubr.f32.gmra.mrb[0].mxu0 %v1398
  %v1624 = vpop.f32.mrb[0].mxu0
  %v1625 = vadd.f32 0.0, %v1624
  %v1626 = vpop.f32.mrb[0].mxu0
  %1627 = vmatprep.mubr.f32.mxu0 %v1404
  %1628 = vmatmul.mubr.f32.gmra.mrb[0].mxu0 %v1403
  %v1629 = vpop.f32.mrb[0].mxu0
  %v1630 = vadd.f32 0.0, %v1629
  %v1631 = vpop.f32.mrb[0].mxu0
  %1632 = vmatprep.mubr.f32.mxu0 %v1409
  %1633 = vmatmul.mubr.f32.gmra.mrb[0].mxu0 %v1408
  %v1634 = vpop.f32.mrb[0].mxu0
  %v1635 = vadd.f32 0.0, %v1634
  %v1636 = vpop.f32.mrb[0].mxu0
  %1637 = vmatprep.mubr.f32.mxu0 %v1414
  %1638 = vmatmul.mubr.f32.gmra.mrb[0].mxu0 %v1413
  %v1639 = vpop.f32.mrb[0].mxu0
  %v1640 = vadd.f32 0.0, %v1639
  %v1641 = vpop.f32.mrb[0].mxu0
  %1642 = vmatprep.mubr.f32.mxu0 %v1419
  %1643 = vmatmul.mubr.f32.gmra.mrb[0].mxu0 %v1418
  %v1644 = vpop.f32.mrb[0].mxu0
  %v1645 = vadd.f32 0.0, %v1644
  %v1646 = vpop.f32.mrb[0].mxu0
  %1647 = vmatprep.mubr.f32.mxu0 %v1424
  %1648 = vmatmul.mubr.f32.gmra.mrb[0].mxu0 %v1423
  %v1649 = vpop.f32.mrb[0].mxu0
  %v1650 = vadd.f32 0.0, %v1649
  %v1651 = vpop.f32.mrb[0].mxu0
  %1652 = vmatprep.mubr.f32.mxu0 %v1429
  %1653 = vmatmul.mubr.f32.gmra.mrb[0].mxu0 %v1428
  %v1654 = vpop.f32.mrb[0].mxu0
  %v1655 = vadd.f32 0.0, %v1654
  %v1656 = vpop.f32.mrb[0].mxu0
  %1657 = vdwg.mxu0
  %1658 = vmatprep.subr.mxu0 0.0
  %1659 = vmatpush1.msra.mxu0 %v729
  %1660 = vmatprep.subr.mxu0 0.0
  %1661 = vmatpush1.msra.mxu0 %v734
  %1662 = vmatprep.subr.mxu0 0.0
  %1663 = vmatpush1.msra.mxu0 %v739
  %1664 = vmatprep.subr.mxu0 0.0
  %1665 = vmatpush1.msra.mxu0 %v744
  %1666 = vmatprep.subr.mxu0 0.0
  %1667 = vmatpush1.msra.mxu0 %v749
  %1668 = vmatprep.subr.mxu0 0.0
  %1669 = vmatpush1.msra.mxu0 %v754
  %1670 = vmatprep.subr.mxu0 0.0
  %1671 = vmatpush1.msra.mxu0 %v759
  %1672 = vmatprep.subr.mxu0 0.0
  %1673 = vmatpush1.msra.mxu0 %v764
  %1674 = vmatprep.subr.mxu0 0.0
  %1675 = vmatpush1.msra.mxu0 %v769
  %1676 = vmatprep.subr.mxu0 0.0
  %1677 = vmatpush1.msra.mxu0 %v774
  %1678 = vmatprep.subr.mxu0 0.0
  %1679 = vmatpush1.msra.mxu0 %v779
  %1680 = vmatprep.subr.mxu0 0.0
  %1681 = vmatpush1.msra.mxu0 %v784
  %1682 = vmatprep.subr.mxu0 0.0
  %1683 = vmatpush1.msra.mxu0 %v789
  %1684 = vmatprep.subr.mxu0 0.0
  %1685 = vmatpush1.msra.mxu0 %v794
  %1686 = vmatprep.subr.mxu0 0.0
  %1687 = vmatpush1.msra.mxu0 %v799
  %1688 = vmatprep.subr.mxu0 0.0
  %1689 = vmatpush1.msra.mxu0 %v804
  %1690 = vmatprep.subr.mxu0 0.0
  %1691 = vmatpush1.msra.mxu0 %v1144
  %1692 = vmatprep.subr.mxu0 0.0
  %1693 = vmatpush1.msra.mxu0 %v1145
  %1694 = vmatprep.subr.mxu0 0.0
  %1695 = vmatpush1.msra.mxu0 %v1146
  %1696 = vmatprep.subr.mxu0 0.0
  %1697 = vmatpush1.msra.mxu0 %v1147
  %1698 = vmatprep.subr.mxu0 0.0
  %1699 = vmatpush1.msra.mxu0 %v1148
  %1700 = vmatprep.subr.mxu0 0.0
  %1701 = vmatpush1.msra.mxu0 %v1149
  %1702 = vmatprep.subr.mxu0 0.0
  %1703 = vmatpush1.msra.mxu0 %v1150
  %1704 = vmatprep.subr.mxu0 0.0
  %1705 = vmatpush1.msra.mxu0 %v1151
  %1706 = vmatprep.subr.mxu0 0.0
  %1707 = vmatpush1.msra.mxu0 %v1152
  %1708 = vmatprep.subr.mxu0 0.0
  %1709 = vmatpush1.msra.mxu0 %v1153
  %1710 = vmatprep.subr.mxu0 0.0
  %1711 = vmatpush1.msra.mxu0 %v1154
  %1712 = vmatprep.subr.mxu0 0.0
  %1713 = vmatpush1.msra.mxu0 %v1155
  %1714 = vmatprep.subr.mxu0 0.0
  %1715 = vmatpush1.msra.mxu0 %v1156
  %1716 = vmatprep.subr.mxu0 0.0
  %1717 = vmatpush1.msra.mxu0 %v1157
  %1718 = vmatprep.subr.mxu0 0.0
  %1719 = vmatpush1.msra.mxu0 %v1158
  %1720 = vmatprep.subr.mxu0 0.0
  %1721 = vmatpush1.msra.mxu0 %v1159
  %1722 = vmatprep.mubr.f32.mxu0 %v1276
  %1723 = vmatmul.mubr.f32.gmra.mrb[0].mxu0 %v1275
  %v1724 = vpop.f32.mrb[0].mxu0
  %v1725 = vadd.f32 %v1500, %v1724
  %v1726 = vpop.f32.mrb[0].mxu0
  %1727 = vmatprep.mubr.f32.mxu0 %v1281
  %1728 = vmatmul.mubr.f32.gmra.mrb[0].mxu0 %v1280
  %v1729 = vpop.f32.mrb[0].mxu0
  %v1730 = vadd.f32 %v1505, %v1729
  %v1731 = vpop.f32.mrb[0].mxu0
  %1732 = vmatprep.mubr.f32.mxu0 %v1286
  %1733 = vmatmul.mubr.f32.gmra.mrb[0].mxu0 %v1285
  %v1734 = vpop.f32.mrb[0].mxu0
  %v1735 = vadd.f32 %v1510, %v1734
  %v1736 = vpop.f32.mrb[0].mxu0
  %1737 = vmatprep.mubr.f32.mxu0 %v1291
  %1738 = vmatmul.mubr.f32.gmra.mrb[0].mxu0 %v1290
  %v1739 = vpop.f32.mrb[0].mxu0
  %v1740 = vadd.f32 %v1515, %v1739
  %v1741 = vpop.f32.mrb[0].mxu0
  %1742 = vmatprep.mubr.f32.mxu0 %v1296
  %1743 = vmatmul.mubr.f32.gmra.mrb[0].mxu0 %v1295
  %v1744 = vpop.f32.mrb[0].mxu0
  %v1745 = vadd.f32 %v1520, %v1744
  %v1746 = vpop.f32.mrb[0].mxu0
  %1747 = vmatprep.mubr.f32.mxu0 %v1301
  %1748 = vmatmul.mubr.f32.gmra.mrb[0].mxu0 %v1300
  %v1749 = vpop.f32.mrb[0].mxu0
  %v1750 = vadd.f32 %v1525, %v1749
  %v1751 = vpop.f32.mrb[0].mxu0
  %1752 = vmatprep.mubr.f32.mxu0 %v1306
  %1753 = vmatmul.mubr.f32.gmra.mrb[0].mxu0 %v1305
  %v1754 = vpop.f32.mrb[0].mxu0
  %v1755 = vadd.f32 %v1530, %v1754
  %v1756 = vpop.f32.mrb[0].mxu0
  %1757 = vmatprep.mubr.f32.mxu0 %v1311
  %1758 = vmatmul.mubr.f32.gmra.mrb[0].mxu0 %v1310
  %v1759 = vpop.f32.mrb[0].mxu0
  %v1760 = vadd.f32 %v1535, %v1759
  %v1761 = vpop.f32.mrb[0].mxu0
  %1762 = vmatprep.mubr.f32.mxu0 %v1316
  %1763 = vmatmul.mubr.f32.gmra.mrb[0].mxu0 %v1315
  %v1764 = vpop.f32.mrb[0].mxu0
  %v1765 = vadd.f32 %v1540, %v1764
  %v1766 = vpop.f32.mrb[0].mxu0
  %1767 = vmatprep.mubr.f32.mxu0 %v1321
  %1768 = vmatmul.mubr.f32.gmra.mrb[0].mxu0 %v1320
  %v1769 = vpop.f32.mrb[0].mxu0
  %v1770 = vadd.f32 %v1545, %v1769
  %v1771 = vpop.f32.mrb[0].mxu0
  %1772 = vmatprep.mubr.f32.mxu0 %v1326
  %1773 = vmatmul.mubr.f32.gmra.mrb[0].mxu0 %v1325
  %v1774 = vpop.f32.mrb[0].mxu0
  %v1775 = vadd.f32 %v1550, %v1774
  %v1776 = vpop.f32.mrb[0].mxu0
  %1777 = vmatprep.mubr.f32.mxu0 %v1331
  %1778 = vmatmul.mubr.f32.gmra.mrb[0].mxu0 %v1330
  %v1779 = vpop.f32.mrb[0].mxu0
  %v1780 = vadd.f32 %v1555, %v1779
  %v1781 = vpop.f32.mrb[0].mxu0
  %1782 = vmatprep.mubr.f32.mxu0 %v1336
  %1783 = vmatmul.mubr.f32.gmra.mrb[0].mxu0 %v1335
  %v1784 = vpop.f32.mrb[0].mxu0
  %v1785 = vadd.f32 %v1560, %v1784
  %v1786 = vpop.f32.mrb[0].mxu0
  %1787 = vmatprep.mubr.f32.mxu0 %v1341
  %1788 = vmatmul.mubr.f32.gmra.mrb[0].mxu0 %v1340
  %v1789 = vpop.f32.mrb[0].mxu0
  %v1790 = vadd.f32 %v1565, %v1789
  %v1791 = vpop.f32.mrb[0].mxu0
  %1792 = vmatprep.mubr.f32.mxu0 %v1346
  %1793 = vmatmul.mubr.f32.gmra.mrb[0].mxu0 %v1345
  %v1794 = vpop.f32.mrb[0].mxu0
  %v1795 = vadd.f32 %v1570, %v1794
  %v1796 = vpop.f32.mrb[0].mxu0
  %1797 = vmatprep.mubr.f32.mxu0 %v1351
  %1798 = vmatmul.mubr.f32.gmra.mrb[0].mxu0 %v1350
  %v1799 = vpop.f32.mrb[0].mxu0
  %v1800 = vadd.f32 %v1575, %v1799
  %v1801 = vpop.f32.mrb[0].mxu0
  %1802 = vmatprep.mubr.f32.mxu0 %v1356
  %1803 = vmatmul.mubr.f32.gmra.mrb[0].mxu0 %v1355
  %v1804 = vpop.f32.mrb[0].mxu0
  %v1805 = vadd.f32 %v1580, %v1804
  %v1806 = vpop.f32.mrb[0].mxu0
  %1807 = vmatprep.mubr.f32.mxu0 %v1361
  %1808 = vmatmul.mubr.f32.gmra.mrb[0].mxu0 %v1360
  %v1809 = vpop.f32.mrb[0].mxu0
  %v1810 = vadd.f32 %v1585, %v1809
  %v1811 = vpop.f32.mrb[0].mxu0
  %1812 = vmatprep.mubr.f32.mxu0 %v1366
  %1813 = vmatmul.mubr.f32.gmra.mrb[0].mxu0 %v1365
  %v1814 = vpop.f32.mrb[0].mxu0
  %v1815 = vadd.f32 %v1590, %v1814
  %v1816 = vpop.f32.mrb[0].mxu0
  %1817 = vmatprep.mubr.f32.mxu0 %v1371
  %1818 = vmatmul.mubr.f32.gmra.mrb[0].mxu0 %v1370
  %v1819 = vpop.f32.mrb[0].mxu0
  %v1820 = vadd.f32 %v1595, %v1819
  %v1821 = vpop.f32.mrb[0].mxu0
  %1822 = vmatprep.mubr.f32.mxu0 %v1376
  %1823 = vmatmul.mubr.f32.gmra.mrb[0].mxu0 %v1375
  %v1824 = vpop.f32.mrb[0].mxu0
  %v1825 = vadd.f32 %v1600, %v1824
  %v1826 = vpop.f32.mrb[0].mxu0
  %1827 = vmatprep.mubr.f32.mxu0 %v1381
  %1828 = vmatmul.mubr.f32.gmra.mrb[0].mxu0 %v1380
  %v1829 = vpop.f32.mrb[0].mxu0
  %v1830 = vadd.f32 %v1605, %v1829
  %v1831 = vpop.f32.mrb[0].mxu0
  %1832 = vmatprep.mubr.f32.mxu0 %v1386
  %1833 = vmatmul.mubr.f32.gmra.mrb[0].mxu0 %v1385
  %v1834 = vpop.f32.mrb[0].mxu0
  %v1835 = vadd.f32 %v1610, %v1834
  %v1836 = vpop.f32.mrb[0].mxu0
  %1837 = vmatprep.mubr.f32.mxu0 %v1391
  %1838 = vmatmul.mubr.f32.gmra.mrb[0].mxu0 %v1390
  %v1839 = vpop.f32.mrb[0].mxu0
  %v1840 = vadd.f32 %v1615, %v1839
  %v1841 = vpop.f32.mrb[0].mxu0
  %1842 = vmatprep.mubr.f32.mxu0 %v1396
  %1843 = vmatmul.mubr.f32.gmra.mrb[0].mxu0 %v1395
  %v1844 = vpop.f32.mrb[0].mxu0
  %v1845 = vadd.f32 %v1620, %v1844
  %v1846 = vpop.f32.mrb[0].mxu0
  %1847 = vmatprep.mubr.f32.mxu0 %v1401
  %1848 = vmatmul.mubr.f32.gmra.mrb[0].mxu0 %v1400
  %v1849 = vpop.f32.mrb[0].mxu0
  %v1850 = vadd.f32 %v1625, %v1849
  %v1851 = vpop.f32.mrb[0].mxu0
  %1852 = vmatprep.mubr.f32.mxu0 %v1406
  %1853 = vmatmul.mubr.f32.gmra.mrb[0].mxu0 %v1405
  %v1854 = vpop.f32.mrb[0].mxu0
  %v1855 = vadd.f32 %v1630, %v1854
  %v1856 = vpop.f32.mrb[0].mxu0
  %1857 = vmatprep.mubr.f32.mxu0 %v1411
  %1858 = vmatmul.mubr.f32.gmra.mrb[0].mxu0 %v1410
  %v1859 = vpop.f32.mrb[0].mxu0
  %v1860 = vadd.f32 %v1635, %v1859
  %v1861 = vpop.f32.mrb[0].mxu0
  %1862 = vmatprep.mubr.f32.mxu0 %v1416
  %1863 = vmatmul.mubr.f32.gmra.mrb[0].mxu0 %v1415
  %v1864 = vpop.f32.mrb[0].mxu0
  %v1865 = vadd.f32 %v1640, %v1864
  %v1866 = vpop.f32.mrb[0].mxu0
  %1867 = vmatprep.mubr.f32.mxu0 %v1421
  %1868 = vmatmul.mubr.f32.gmra.mrb[0].mxu0 %v1420
  %v1869 = vpop.f32.mrb[0].mxu0
  %v1870 = vadd.f32 %v1645, %v1869
  %v1871 = vpop.f32.mrb[0].mxu0
  %1872 = vmatprep.mubr.f32.mxu0 %v1426
  %1873 = vmatmul.mubr.f32.gmra.mrb[0].mxu0 %v1425
  %v1874 = vpop.f32.mrb[0].mxu0
  %v1875 = vadd.f32 %v1650, %v1874
  %v1876 = vpop.f32.mrb[0].mxu0
  %1877 = vmatprep.mubr.f32.mxu0 %v1431
  %1878 = vmatmul.mubr.f32.gmra.mrb[0].mxu0 %v1430
  %v1879 = vpop.f32.mrb[0].mxu0
  %v1880 = vadd.f32 %v1655, %v1879
  %v1881 = vpop.f32.mrb[0].mxu0
  %1882 = vdwg.mxu0
  %1883 = vmatprep.subr.mxu0 0.0
  %1884 = vmatpush1.msra.mxu0 %v1257
  %1885 = vmatprep.subr.mxu0 0.0
  %1886 = vmatpush1.msra.mxu0 %v1258
  %1887 = vmatprep.subr.mxu0 0.0
  %1888 = vmatpush1.msra.mxu0 %v1259
  %1889 = vmatprep.subr.mxu0 0.0
  %1890 = vmatpush1.msra.mxu0 %v1260
  %1891 = vmatprep.subr.mxu0 0.0
  %1892 = vmatpush1.msra.mxu0 %v1261
  %1893 = vmatprep.subr.mxu0 0.0
  %1894 = vmatpush1.msra.mxu0 %v1262
  %1895 = vmatprep.subr.mxu0 0.0
  %1896 = vmatpush1.msra.mxu0 %v1263
  %1897 = vmatprep.subr.mxu0 0.0
  %1898 = vmatpush1.msra.mxu0 %v1264
  %1899 = vmatprep.subr.mxu0 0.0
  %1900 = vmatpush1.msra.mxu0 %v1265
  %1901 = vmatprep.subr.mxu0 0.0
  %1902 = vmatpush1.msra.mxu0 %v1266
  %1903 = vmatprep.subr.mxu0 0.0
  %1904 = vmatpush1.msra.mxu0 %v1267
  %1905 = vmatprep.subr.mxu0 0.0
  %1906 = vmatpush1.msra.mxu0 %v1268
  %1907 = vmatprep.subr.mxu0 0.0
  %1908 = vmatpush1.msra.mxu0 %v1269
  %1909 = vmatprep.subr.mxu0 0.0
  %1910 = vmatpush1.msra.mxu0 %v1270
  %1911 = vmatprep.subr.mxu0 0.0
  %1912 = vmatpush1.msra.mxu0 %v1271
  %1913 = vmatprep.subr.mxu0 0.0
  %1914 = vmatpush1.msra.mxu0 %v1272
  %1915 = vmatprep.subr.mxu0 0.0
  %1916 = vmatpush1.msra.mxu0 0.0
  %1917 = vmatprep.subr.mxu0 0.0
  %1918 = vmatpush1.msra.mxu0 0.0
  %1919 = vmatprep.subr.mxu0 0.0
  %1920 = vmatpush1.msra.mxu0 0.0
  %1921 = vmatprep.subr.mxu0 0.0
  %1922 = vmatpush1.msra.mxu0 0.0
  %1923 = vmatprep.subr.mxu0 0.0
  %1924 = vmatpush1.msra.mxu0 0.0
  %1925 = vmatprep.subr.mxu0 0.0
  %1926 = vmatpush1.msra.mxu0 0.0
  %1927 = vmatprep.subr.mxu0 0.0
  %1928 = vmatpush1.msra.mxu0 0.0
  %1929 = vmatprep.subr.mxu0 0.0
  %1930 = vmatpush1.msra.mxu0 0.0
  %1931 = vmatprep.subr.mxu0 0.0
  %1932 = vmatpush1.msra.mxu0 0.0
  %1933 = vmatprep.subr.mxu0 0.0
  %1934 = vmatpush1.msra.mxu0 0.0
  %1935 = vmatprep.subr.mxu0 0.0
  %1936 = vmatpush1.msra.mxu0 0.0
  %1937 = vmatprep.subr.mxu0 0.0
  %1938 = vmatpush1.msra.mxu0 0.0
  %1939 = vmatprep.subr.mxu0 0.0
  %1940 = vmatpush1.msra.mxu0 0.0
  %1941 = vmatprep.subr.mxu0 0.0
  %1942 = vmatpush1.msra.mxu0 0.0
  %1943 = vmatprep.subr.mxu0 0.0
  %1944 = vmatpush1.msra.mxu0 0.0
  %1945 = vmatprep.subr.mxu0 0.0
  %1946 = vmatpush1.msra.mxu0 0.0
  %1947 = vmatprep.mubr.f32.mxu0 0.0
  %1948 = vmatmul.mubr.f32.gmra.mrb[0].mxu0 %v1277
  %v1949 = vpop.f32.mrb[0].mxu0
  %v1950 = vadd.f32 %v1725, %v1949
  %v1951 = vpop.f32.mrb[0].mxu0
  %1952 = vmatprep.mubr.f32.mxu0 0.0
  %1953 = vmatmul.mubr.f32.gmra.mrb[0].mxu0 %v1282
  %v1954 = vpop.f32.mrb[0].mxu0
  %v1955 = vadd.f32 %v1730, %v1954
  %v1956 = vpop.f32.mrb[0].mxu0
  %1957 = vmatprep.mubr.f32.mxu0 0.0
  %1958 = vmatmul.mubr.f32.gmra.mrb[0].mxu0 %v1287
  %v1959 = vpop.f32.mrb[0].mxu0
  %v1960 = vadd.f32 %v1735, %v1959
  %v1961 = vpop.f32.mrb[0].mxu0
  %1962 = vmatprep.mubr.f32.mxu0 0.0
  %1963 = vmatmul.mubr.f32.gmra.mrb[0].mxu0 %v1292
  %v1964 = vpop.f32.mrb[0].mxu0
  %v1965 = vadd.f32 %v1740, %v1964
  %v1966 = vpop.f32.mrb[0].mxu0
  %1967 = vmatprep.mubr.f32.mxu0 0.0
  %1968 = vmatmul.mubr.f32.gmra.mrb[0].mxu0 %v1297
  %v1969 = vpop.f32.mrb[0].mxu0
  %v1970 = vadd.f32 %v1745, %v1969
  %v1971 = vpop.f32.mrb[0].mxu0
  %1972 = vmatprep.mubr.f32.mxu0 0.0
  %1973 = vmatmul.mubr.f32.gmra.mrb[0].mxu0 %v1302
  %v1974 = vpop.f32.mrb[0].mxu0
  %v1975 = vadd.f32 %v1750, %v1974
  %v1976 = vpop.f32.mrb[0].mxu0
  %1977 = vmatprep.mubr.f32.mxu0 0.0
  %1978 = vmatmul.mubr.f32.gmra.mrb[0].mxu0 %v1307
  %v1979 = vpop.f32.mrb[0].mxu0
  %v1980 = vadd.f32 %v1755, %v1979
  %v1981 = vpop.f32.mrb[0].mxu0
  %1982 = vmatprep.mubr.f32.mxu0 0.0
  %1983 = vmatmul.mubr.f32.gmra.mrb[0].mxu0 %v1312
  %v1984 = vpop.f32.mrb[0].mxu0
  %v1985 = vadd.f32 %v1760, %v1984
  %v1986 = vpop.f32.mrb[0].mxu0
  %1987 = vmatprep.mubr.f32.mxu0 0.0
  %1988 = vmatmul.mubr.f32.gmra.mrb[0].mxu0 %v1317
  %v1989 = vpop.f32.mrb[0].mxu0
  %v1990 = vadd.f32 %v1765, %v1989
  %v1991 = vpop.f32.mrb[0].mxu0
  %1992 = vmatprep.mubr.f32.mxu0 0.0
  %1993 = vmatmul.mubr.f32.gmra.mrb[0].mxu0 %v1322
  %v1994 = vpop.f32.mrb[0].mxu0
  %v1995 = vadd.f32 %v1770, %v1994
  %v1996 = vpop.f32.mrb[0].mxu0
  %1997 = vmatprep.mubr.f32.mxu0 0.0
  %1998 = vmatmul.mubr.f32.gmra.mrb[0].mxu0 %v1327
  %v1999 = vpop.f32.mrb[0].mxu0
  %v2000 = vadd.f32 %v1775, %v1999
  %v2001 = vpop.f32.mrb[0].mxu0
  %2002 = vmatprep.mubr.f32.mxu0 0.0
  %2003 = vmatmul.mubr.f32.gmra.mrb[0].mxu0 %v1332
  %v2004 = vpop.f32.mrb[0].mxu0
  %v2005 = vadd.f32 %v1780, %v2004
  %v2006 = vpop.f32.mrb[0].mxu0
  %2007 = vmatprep.mubr.f32.mxu0 0.0
  %2008 = vmatmul.mubr.f32.gmra.mrb[0].mxu0 %v1337
  %v2009 = vpop.f32.mrb[0].mxu0
  %v2010 = vadd.f32 %v1785, %v2009
  %v2011 = vpop.f32.mrb[0].mxu0
  %2012 = vmatprep.mubr.f32.mxu0 0.0
  %2013 = vmatmul.mubr.f32.gmra.mrb[0].mxu0 %v1342
  %v2014 = vpop.f32.mrb[0].mxu0
  %v2015 = vadd.f32 %v1790, %v2014
  %v2016 = vpop.f32.mrb[0].mxu0
  %2017 = vmatprep.mubr.f32.mxu0 0.0
  %2018 = vmatmul.mubr.f32.gmra.mrb[0].mxu0 %v1347
  %v2019 = vpop.f32.mrb[0].mxu0
  %v2020 = vadd.f32 %v1795, %v2019
  %v2021 = vpop.f32.mrb[0].mxu0
  %2022 = vmatprep.mubr.f32.mxu0 0.0
  %2023 = vmatmul.mubr.f32.gmra.mrb[0].mxu0 %v1352
  %v2024 = vpop.f32.mrb[0].mxu0
  %v2025 = vadd.f32 %v1800, %v2024
  %v2026 = vpop.f32.mrb[0].mxu0
  %2027 = vmatprep.mubr.f32.mxu0 0.0
  %2028 = vmatmul.mubr.f32.gmra.mrb[0].mxu0 %v1357
  %v2029 = vpop.f32.mrb[0].mxu0
  %v2030 = vadd.f32 %v1805, %v2029
  %v2031 = vpop.f32.mrb[0].mxu0
  %2032 = vmatprep.mubr.f32.mxu0 0.0
  %2033 = vmatmul.mubr.f32.gmra.mrb[0].mxu0 %v1362
  %v2034 = vpop.f32.mrb[0].mxu0
  %v2035 = vadd.f32 %v1810, %v2034
  %v2036 = vpop.f32.mrb[0].mxu0
  %2037 = vmatprep.mubr.f32.mxu0 0.0
  %2038 = vmatmul.mubr.f32.gmra.mrb[0].mxu0 %v1367
  %v2039 = vpop.f32.mrb[0].mxu0
  %v2040 = vadd.f32 %v1815, %v2039
  %v2041 = vpop.f32.mrb[0].mxu0
  %2042 = vmatprep.mubr.f32.mxu0 0.0
  %2043 = vmatmul.mubr.f32.gmra.mrb[0].mxu0 %v1372
  %v2044 = vpop.f32.mrb[0].mxu0
  %v2045 = vadd.f32 %v1820, %v2044
  %v2046 = vpop.f32.mrb[0].mxu0
  %2047 = vmatprep.mubr.f32.mxu0 0.0
  %2048 = vmatmul.mubr.f32.gmra.mrb[0].mxu0 %v1377
  %v2049 = vpop.f32.mrb[0].mxu0
  %v2050 = vadd.f32 %v1825, %v2049
  %v2051 = vpop.f32.mrb[0].mxu0
  %2052 = vmatprep.mubr.f32.mxu0 0.0
  %2053 = vmatmul.mubr.f32.gmra.mrb[0].mxu0 %v1382
  %v2054 = vpop.f32.mrb[0].mxu0
  %v2055 = vadd.f32 %v1830, %v2054
  %v2056 = vpop.f32.mrb[0].mxu0
  %2057 = vmatprep.mubr.f32.mxu0 0.0
  %2058 = vmatmul.mubr.f32.gmra.mrb[0].mxu0 %v1387
  %v2059 = vpop.f32.mrb[0].mxu0
  %v2060 = vadd.f32 %v1835, %v2059
  %v2061 = vpop.f32.mrb[0].mxu0
  %2062 = vmatprep.mubr.f32.mxu0 0.0
  %2063 = vmatmul.mubr.f32.gmra.mrb[0].mxu0 %v1392
  %v2064 = vpop.f32.mrb[0].mxu0
  %v2065 = vadd.f32 %v1840, %v2064
  %v2066 = vpop.f32.mrb[0].mxu0
  %2067 = vmatprep.mubr.f32.mxu0 0.0
  %2068 = vmatmul.mubr.f32.gmra.mrb[0].mxu0 %v1397
  %v2069 = vpop.f32.mrb[0].mxu0
  %v2070 = vadd.f32 %v1845, %v2069
  %v2071 = vpop.f32.mrb[0].mxu0
  %2072 = vmatprep.mubr.f32.mxu0 0.0
  %2073 = vmatmul.mubr.f32.gmra.mrb[0].mxu0 %v1402
  %v2074 = vpop.f32.mrb[0].mxu0
  %v2075 = vadd.f32 %v1850, %v2074
  %v2076 = vpop.f32.mrb[0].mxu0
  %2077 = vmatprep.mubr.f32.mxu0 0.0
  %2078 = vmatmul.mubr.f32.gmra.mrb[0].mxu0 %v1407
  %v2079 = vpop.f32.mrb[0].mxu0
  %v2080 = vadd.f32 %v1855, %v2079
  %v2081 = vpop.f32.mrb[0].mxu0
  %2082 = vmatprep.mubr.f32.mxu0 0.0
  %2083 = vmatmul.mubr.f32.gmra.mrb[0].mxu0 %v1412
  %v2084 = vpop.f32.mrb[0].mxu0
  %v2085 = vadd.f32 %v1860, %v2084
  %v2086 = vpop.f32.mrb[0].mxu0
  %2087 = vmatprep.mubr.f32.mxu0 0.0
  %2088 = vmatmul.mubr.f32.gmra.mrb[0].mxu0 %v1417
  %v2089 = vpop.f32.mrb[0].mxu0
  %v2090 = vadd.f32 %v1865, %v2089
  %v2091 = vpop.f32.mrb[0].mxu0
  %2092 = vmatprep.mubr.f32.mxu0 0.0
  %2093 = vmatmul.mubr.f32.gmra.mrb[0].mxu0 %v1422
  %v2094 = vpop.f32.mrb[0].mxu0
  %v2095 = vadd.f32 %v1870, %v2094
  %v2096 = vpop.f32.mrb[0].mxu0
  %2097 = vmatprep.mubr.f32.mxu0 0.0
  %2098 = vmatmul.mubr.f32.gmra.mrb[0].mxu0 %v1427
  %v2099 = vpop.f32.mrb[0].mxu0
  %v2100 = vadd.f32 %v1875, %v2099
  %v2101 = vpop.f32.mrb[0].mxu0
  %2102 = vmatprep.mubr.f32.mxu0 0.0
  %2103 = vmatmul.mubr.f32.gmra.mrb[0].mxu0 %v1432
  %v2104 = vpop.f32.mrb[0].mxu0
  %v2105 = vadd.f32 %v1880, %v2104
  %v2106 = vpop.f32.mrb[0].mxu0
  %2107 = vdwg.mxu0
  %v2108 = vld [vmem:[%s6] sm:$0xff]
  %v2109 = vld [vmem:[%s6 + $0x8] sm:$0xff]
  %v2110 = vld [vmem:[%s6 + $0x10] sm:$0xff]
  %v2111 = vld [vmem:[%s6 + $0x18] sm:$0xff]
  %v2112 = vld [vmem:[%s6 + $0x20] sm:$0xff]
  %v2113 = vld [vmem:[%s6 + $0x28] sm:$0xff]
  %v2114 = vld [vmem:[%s6 + $0x30] sm:$0xff]
  %v2115 = vld [vmem:[%s6 + $0x38] sm:$0xff]
  %v2116 = vld [vmem:[%s6 + $0x40] sm:$0xff]
  %v2117 = vld [vmem:[%s6 + $0x48] sm:$0xff]
  %v2118 = vld [vmem:[%s6 + $0x50] sm:$0xff]
  %v2119 = vld [vmem:[%s6 + $0x58] sm:$0xff]
  %v2120 = vld [vmem:[%s6 + $0x60] sm:$0xff]
  %v2121 = vld [vmem:[%s6 + $0x68] sm:$0xff]
  %v2122 = vld [vmem:[%s6 + $0x70] sm:$0xff]
  %v2123 = vld [vmem:[%s6 + $0x78] sm:$0xff]
  %v2124 = vld [vmem:[%s6 + $0x80] sm:$0xff]
  %v2125 = vld [vmem:[%s6 + $0x88] sm:$0xff]
  %v2126 = vld [vmem:[%s6 + $0x90] sm:$0xff]
  %v2127 = vld [vmem:[%s6 + $0x98] sm:$0xff]
  %v2128 = vld [vmem:[%s6 + $0xa0] sm:$0xff]
  %v2129 = vld [vmem:[%s6 + $0xa8] sm:$0xff]
  %v2130 = vld [vmem:[%s6 + $0xb0] sm:$0xff]
  %v2131 = vld [vmem:[%s6 + $0xb8] sm:$0xff]
  %v2132 = vld [vmem:[%s6 + $0xc0] sm:$0xff]
  %v2133 = vld [vmem:[%s6 + $0xc8] sm:$0xff]
  %v2134 = vld [vmem:[%s6 + $0xd0] sm:$0xff]
  %v2135 = vld [vmem:[%s6 + $0xd8] sm:$0xff]
  %v2136 = vld [vmem:[%s6 + $0xe0] sm:$0xff]
  %v2137 = vld [vmem:[%s6 + $0xe8] sm:$0xff]
  %v2138 = vld [vmem:[%s6 + $0xf0] sm:$0xff]
  %v2139 = vld [vmem:[%s6 + $0xf8] sm:$0xff]
  %2141 = vset.pattern.permute.xlu0 0
  %2142 = vperm.xlu0 %2141, %v2108
  %v2143 = vpop.permute.xlu0 %2142
  %2146 = vset.pattern.permute.xlu0 0
  %2147 = vperm.xlu0 %2146, %v2109
  %v2148 = vpop.permute.xlu0 %2147
  %2151 = vset.pattern.permute.xlu0 0
  %2152 = vperm.xlu0 %2151, %v2110
  %v2153 = vpop.permute.xlu0 %2152
  %2156 = vset.pattern.permute.xlu0 0
  %2157 = vperm.xlu0 %2156, %v2111
  %v2158 = vpop.permute.xlu0 %2157
  %2161 = vset.pattern.permute.xlu0 0
  %2162 = vperm.xlu0 %2161, %v2112
  %v2163 = vpop.permute.xlu0 %2162
  %2166 = vset.pattern.permute.xlu0 0
  %2167 = vperm.xlu0 %2166, %v2113
  %v2168 = vpop.permute.xlu0 %2167
  %2171 = vset.pattern.permute.xlu0 0
  %2172 = vperm.xlu0 %2171, %v2114
  %v2173 = vpop.permute.xlu0 %2172
  %2176 = vset.pattern.permute.xlu0 0
  %2177 = vperm.xlu0 %2176, %v2115
  %v2178 = vpop.permute.xlu0 %2177
  %2181 = vset.pattern.permute.xlu0 0
  %2182 = vperm.xlu0 %2181, %v2116
  %v2183 = vpop.permute.xlu0 %2182
  %2186 = vset.pattern.permute.xlu0 0
  %2187 = vperm.xlu0 %2186, %v2117
  %v2188 = vpop.permute.xlu0 %2187
  %2191 = vset.pattern.permute.xlu0 0
  %2192 = vperm.xlu0 %2191, %v2118
  %v2193 = vpop.permute.xlu0 %2192
  %2196 = vset.pattern.permute.xlu0 0
  %2197 = vperm.xlu0 %2196, %v2119
  %v2198 = vpop.permute.xlu0 %2197
  %2201 = vset.pattern.permute.xlu0 0
  %2202 = vperm.xlu0 %2201, %v2120
  %v2203 = vpop.permute.xlu0 %2202
  %2206 = vset.pattern.permute.xlu0 0
  %2207 = vperm.xlu0 %2206, %v2121
  %v2208 = vpop.permute.xlu0 %2207
  %2211 = vset.pattern.permute.xlu0 0
  %2212 = vperm.xlu0 %2211, %v2122
  %v2213 = vpop.permute.xlu0 %2212
  %2216 = vset.pattern.permute.xlu0 0
  %2217 = vperm.xlu0 %2216, %v2123
  %v2218 = vpop.permute.xlu0 %2217
  %2221 = vset.pattern.permute.xlu0 0
  %2222 = vperm.xlu0 %2221, %v2124
  %v2223 = vpop.permute.xlu0 %2222
  %2226 = vset.pattern.permute.xlu0 0
  %2227 = vperm.xlu0 %2226, %v2125
  %v2228 = vpop.permute.xlu0 %2227
  %2231 = vset.pattern.permute.xlu0 0
  %2232 = vperm.xlu0 %2231, %v2126
  %v2233 = vpop.permute.xlu0 %2232
  %2236 = vset.pattern.permute.xlu0 0
  %2237 = vperm.xlu0 %2236, %v2127
  %v2238 = vpop.permute.xlu0 %2237
  %2241 = vset.pattern.permute.xlu0 0
  %2242 = vperm.xlu0 %2241, %v2128
  %v2243 = vpop.permute.xlu0 %2242
  %2246 = vset.pattern.permute.xlu0 0
  %2247 = vperm.xlu0 %2246, %v2129
  %v2248 = vpop.permute.xlu0 %2247
  %2251 = vset.pattern.permute.xlu0 0
  %2252 = vperm.xlu0 %2251, %v2130
  %v2253 = vpop.permute.xlu0 %2252
  %2256 = vset.pattern.permute.xlu0 0
  %2257 = vperm.xlu0 %2256, %v2131
  %v2258 = vpop.permute.xlu0 %2257
  %2261 = vset.pattern.permute.xlu0 0
  %2262 = vperm.xlu0 %2261, %v2132
  %v2263 = vpop.permute.xlu0 %2262
  %2266 = vset.pattern.permute.xlu0 0
  %2267 = vperm.xlu0 %2266, %v2133
  %v2268 = vpop.permute.xlu0 %2267
  %2271 = vset.pattern.permute.xlu0 0
  %2272 = vperm.xlu0 %2271, %v2134
  %v2273 = vpop.permute.xlu0 %2272
  %2276 = vset.pattern.permute.xlu0 0
  %2277 = vperm.xlu0 %2276, %v2135
  %v2278 = vpop.permute.xlu0 %2277
  %2281 = vset.pattern.permute.xlu0 0
  %2282 = vperm.xlu0 %2281, %v2136
  %v2283 = vpop.permute.xlu0 %2282
  %2286 = vset.pattern.permute.xlu0 0
  %2287 = vperm.xlu0 %2286, %v2137
  %v2288 = vpop.permute.xlu0 %2287
  %2291 = vset.pattern.permute.xlu0 0
  %2292 = vperm.xlu0 %2291, %v2138
  %v2293 = vpop.permute.xlu0 %2292
  %2296 = vset.pattern.permute.xlu0 0
  %2297 = vperm.xlu0 %2296, %v2139
  %v2298 = vpop.permute.xlu0 %2297
  %v2300 = vmul.f32 %v1950, %v2143
  %v2301 = vmul.f32 %v1955, %v2148
  %v2302 = vmul.f32 %v1960, %v2153
  %v2303 = vmul.f32 %v1965, %v2158
  %v2304 = vmul.f32 %v1970, %v2163
  %v2305 = vmul.f32 %v1975, %v2168
  %v2306 = vmul.f32 %v1980, %v2173
  %v2307 = vmul.f32 %v1985, %v2178
  %v2308 = vmul.f32 %v1990, %v2183
  %v2309 = vmul.f32 %v1995, %v2188
  %v2310 = vmul.f32 %v2000, %v2193
  %v2311 = vmul.f32 %v2005, %v2198
  %v2312 = vmul.f32 %v2010, %v2203
  %v2313 = vmul.f32 %v2015, %v2208
  %v2314 = vmul.f32 %v2020, %v2213
  %v2315 = vmul.f32 %v2025, %v2218
  %v2316 = vmul.f32 %v2030, %v2223
  %v2317 = vmul.f32 %v2035, %v2228
  %v2318 = vmul.f32 %v2040, %v2233
  %v2319 = vmul.f32 %v2045, %v2238
  %v2320 = vmul.f32 %v2050, %v2243
  %v2321 = vmul.f32 %v2055, %v2248
  %v2322 = vmul.f32 %v2060, %v2253
  %v2323 = vmul.f32 %v2065, %v2258
  %v2324 = vmul.f32 %v2070, %v2263
  %v2325 = vmul.f32 %v2075, %v2268
  %v2326 = vmul.f32 %v2080, %v2273
  %v2327 = vmul.f32 %v2085, %v2278
  %v2328 = vmul.f32 %v2090, %v2283
  %v2329 = vmul.f32 %v2095, %v2288
  %v2330 = vmul.f32 %v2100, %v2293
  %v2331 = vmul.f32 %v2105, %v2298
  %v2332 = vld [vmem:[%s7] sm:$0xff]
  %v2333 = vld [vmem:[%s7 + $0x8] sm:$0xff]
  %v2334 = vld [vmem:[%s7 + $0x10] sm:$0xff]
  %v2335 = vld [vmem:[%s7 + $0x18] sm:$0xff]
  %v2336 = vld [vmem:[%s7 + $0x20] sm:$0xff]
  %v2337 = vld [vmem:[%s7 + $0x28] sm:$0xff]
  %v2338 = vld [vmem:[%s7 + $0x30] sm:$0xff]
  %v2339 = vld [vmem:[%s7 + $0x38] sm:$0xff]
  %v2340 = vld [vmem:[%s7 + $0x40] sm:$0xff]
  %v2341 = vld [vmem:[%s7 + $0x48] sm:$0xff]
  %v2342 = vld [vmem:[%s7 + $0x50] sm:$0xff]
  %v2343 = vld [vmem:[%s7 + $0x58] sm:$0xff]
  %v2344 = vld [vmem:[%s7 + $0x60] sm:$0xff]
  %v2345 = vld [vmem:[%s7 + $0x68] sm:$0xff]
  %v2346 = vld [vmem:[%s7 + $0x70] sm:$0xff]
  %v2347 = vld [vmem:[%s7 + $0x78] sm:$0xff]
  %v2348 = vld [vmem:[%s7 + $0x80] sm:$0xff]
  %v2349 = vld [vmem:[%s7 + $0x88] sm:$0xff]
  %v2350 = vld [vmem:[%s7 + $0x90] sm:$0xff]
  %v2351 = vld [vmem:[%s7 + $0x98] sm:$0xff]
  %v2352 = vld [vmem:[%s7 + $0xa0] sm:$0xff]
  %v2353 = vld [vmem:[%s7 + $0xa8] sm:$0xff]
  %v2354 = vld [vmem:[%s7 + $0xb0] sm:$0xff]
  %v2355 = vld [vmem:[%s7 + $0xb8] sm:$0xff]
  %v2356 = vld [vmem:[%s7 + $0xc0] sm:$0xff]
  %v2357 = vld [vmem:[%s7 + $0xc8] sm:$0xff]
  %v2358 = vld [vmem:[%s7 + $0xd0] sm:$0xff]
  %v2359 = vld [vmem:[%s7 + $0xd8] sm:$0xff]
  %v2360 = vld [vmem:[%s7 + $0xe0] sm:$0xff]
  %v2361 = vld [vmem:[%s7 + $0xe8] sm:$0xff]
  %v2362 = vld [vmem:[%s7 + $0xf0] sm:$0xff]
  %v2363 = vld [vmem:[%s7 + $0xf8] sm:$0xff]
  %2365 = vset.pattern.permute.xlu0 0
  %2366 = vperm.xlu0 %2365, %v2332
  %v2367 = vpop.permute.xlu0 %2366
  %2370 = vset.pattern.permute.xlu0 0
  %2371 = vperm.xlu0 %2370, %v2333
  %v2372 = vpop.permute.xlu0 %2371
  %2375 = vset.pattern.permute.xlu0 0
  %2376 = vperm.xlu0 %2375, %v2334
  %v2377 = vpop.permute.xlu0 %2376
  %2380 = vset.pattern.permute.xlu0 0
  %2381 = vperm.xlu0 %2380, %v2335
  %v2382 = vpop.permute.xlu0 %2381
  %2385 = vset.pattern.permute.xlu0 0
  %2386 = vperm.xlu0 %2385, %v2336
  %v2387 = vpop.permute.xlu0 %2386
  %2390 = vset.pattern.permute.xlu0 0
  %2391 = vperm.xlu0 %2390, %v2337
  %v2392 = vpop.permute.xlu0 %2391
  %2395 = vset.pattern.permute.xlu0 0
  %2396 = vperm.xlu0 %2395, %v2338
  %v2397 = vpop.permute.xlu0 %2396
  %2400 = vset.pattern.permute.xlu0 0
  %2401 = vperm.xlu0 %2400, %v2339
  %v2402 = vpop.permute.xlu0 %2401
  %2405 = vset.pattern.permute.xlu0 0
  %2406 = vperm.xlu0 %2405, %v2340
  %v2407 = vpop.permute.xlu0 %2406
  %2410 = vset.pattern.permute.xlu0 0
  %2411 = vperm.xlu0 %2410, %v2341
  %v2412 = vpop.permute.xlu0 %2411
  %2415 = vset.pattern.permute.xlu0 0
  %2416 = vperm.xlu0 %2415, %v2342
  %v2417 = vpop.permute.xlu0 %2416
  %2420 = vset.pattern.permute.xlu0 0
  %2421 = vperm.xlu0 %2420, %v2343
  %v2422 = vpop.permute.xlu0 %2421
  %2425 = vset.pattern.permute.xlu0 0
  %2426 = vperm.xlu0 %2425, %v2344
  %v2427 = vpop.permute.xlu0 %2426
  %2430 = vset.pattern.permute.xlu0 0
  %2431 = vperm.xlu0 %2430, %v2345
  %v2432 = vpop.permute.xlu0 %2431
  %2435 = vset.pattern.permute.xlu0 0
  %2436 = vperm.xlu0 %2435, %v2346
  %v2437 = vpop.permute.xlu0 %2436
  %2440 = vset.pattern.permute.xlu0 0
  %2441 = vperm.xlu0 %2440, %v2347
  %v2442 = vpop.permute.xlu0 %2441
  %2445 = vset.pattern.permute.xlu0 0
  %2446 = vperm.xlu0 %2445, %v2348
  %v2447 = vpop.permute.xlu0 %2446
  %2450 = vset.pattern.permute.xlu0 0
  %2451 = vperm.xlu0 %2450, %v2349
  %v2452 = vpop.permute.xlu0 %2451
  %2455 = vset.pattern.permute.xlu0 0
  %2456 = vperm.xlu0 %2455, %v2350
  %v2457 = vpop.permute.xlu0 %2456
  %2460 = vset.pattern.permute.xlu0 0
  %2461 = vperm.xlu0 %2460, %v2351
  %v2462 = vpop.permute.xlu0 %2461
  %2465 = vset.pattern.permute.xlu0 0
  %2466 = vperm.xlu0 %2465, %v2352
  %v2467 = vpop.permute.xlu0 %2466
  %2470 = vset.pattern.permute.xlu0 0
  %2471 = vperm.xlu0 %2470, %v2353
  %v2472 = vpop.permute.xlu0 %2471
  %2475 = vset.pattern.permute.xlu0 0
  %2476 = vperm.xlu0 %2475, %v2354
  %v2477 = vpop.permute.xlu0 %2476
  %2480 = vset.pattern.permute.xlu0 0
  %2481 = vperm.xlu0 %2480, %v2355
  %v2482 = vpop.permute.xlu0 %2481
  %2485 = vset.pattern.permute.xlu0 0
  %2486 = vperm.xlu0 %2485, %v2356
  %v2487 = vpop.permute.xlu0 %2486
  %2490 = vset.pattern.permute.xlu0 0
  %2491 = vperm.xlu0 %2490, %v2357
  %v2492 = vpop.permute.xlu0 %2491
  %2495 = vset.pattern.permute.xlu0 0
  %2496 = vperm.xlu0 %2495, %v2358
  %v2497 = vpop.permute.xlu0 %2496
  %2500 = vset.pattern.permute.xlu0 0
  %2501 = vperm.xlu0 %2500, %v2359
  %v2502 = vpop.permute.xlu0 %2501
  %2505 = vset.pattern.permute.xlu0 0
  %2506 = vperm.xlu0 %2505, %v2360
  %v2507 = vpop.permute.xlu0 %2506
  %2510 = vset.pattern.permute.xlu0 0
  %2511 = vperm.xlu0 %2510, %v2361
  %v2512 = vpop.permute.xlu0 %2511
  %2515 = vset.pattern.permute.xlu0 0
  %2516 = vperm.xlu0 %2515, %v2362
  %v2517 = vpop.permute.xlu0 %2516
  %2520 = vset.pattern.permute.xlu0 0
  %2521 = vperm.xlu0 %2520, %v2363
  %v2522 = vpop.permute.xlu0 %2521
  %v2524 = vadd.f32 %v2300, %v2367
  %v2525 = vadd.f32 %v2301, %v2372
  %v2526 = vadd.f32 %v2302, %v2377
  %v2527 = vadd.f32 %v2303, %v2382
  %v2528 = vadd.f32 %v2304, %v2387
  %v2529 = vadd.f32 %v2305, %v2392
  %v2530 = vadd.f32 %v2306, %v2397
  %v2531 = vadd.f32 %v2307, %v2402
  %v2532 = vadd.f32 %v2308, %v2407
  %v2533 = vadd.f32 %v2309, %v2412
  %v2534 = vadd.f32 %v2310, %v2417
  %v2535 = vadd.f32 %v2311, %v2422
  %v2536 = vadd.f32 %v2312, %v2427
  %v2537 = vadd.f32 %v2313, %v2432
  %v2538 = vadd.f32 %v2314, %v2437
  %v2539 = vadd.f32 %v2315, %v2442
  %v2540 = vadd.f32 %v2316, %v2447
  %v2541 = vadd.f32 %v2317, %v2452
  %v2542 = vadd.f32 %v2318, %v2457
  %v2543 = vadd.f32 %v2319, %v2462
  %v2544 = vadd.f32 %v2320, %v2467
  %v2545 = vadd.f32 %v2321, %v2472
  %v2546 = vadd.f32 %v2322, %v2477
  %v2547 = vadd.f32 %v2323, %v2482
  %v2548 = vadd.f32 %v2324, %v2487
  %v2549 = vadd.f32 %v2325, %v2492
  %v2550 = vadd.f32 %v2326, %v2497
  %v2551 = vadd.f32 %v2327, %v2502
  %v2552 = vadd.f32 %v2328, %v2507
  %v2553 = vadd.f32 %v2329, %v2512
  %v2554 = vadd.f32 %v2330, %v2517
  %v2555 = vadd.f32 %v2331, %v2522
  %vm2556 = vcmp.gt.f32.partialorder %v2524, 0.0
  %vm2557 = vcmp.gt.f32.partialorder %v2525, 0.0
  %vm2558 = vcmp.gt.f32.partialorder %v2526, 0.0
  %vm2559 = vcmp.gt.f32.partialorder %v2527, 0.0
  %vm2560 = vcmp.gt.f32.partialorder %v2528, 0.0
  %vm2561 = vcmp.gt.f32.partialorder %v2529, 0.0
  %vm2562 = vcmp.gt.f32.partialorder %v2530, 0.0
  %vm2563 = vcmp.gt.f32.partialorder %v2531, 0.0
  %vm2564 = vcmp.gt.f32.partialorder %v2532, 0.0
  %vm2565 = vcmp.gt.f32.partialorder %v2533, 0.0
  %vm2566 = vcmp.gt.f32.partialorder %v2534, 0.0
  %vm2567 = vcmp.gt.f32.partialorder %v2535, 0.0
  %vm2568 = vcmp.gt.f32.partialorder %v2536, 0.0
  %vm2569 = vcmp.gt.f32.partialorder %v2537, 0.0
  %vm2570 = vcmp.gt.f32.partialorder %v2538, 0.0
  %vm2571 = vcmp.gt.f32.partialorder %v2539, 0.0
  %vm2572 = vcmp.gt.f32.partialorder %v2540, 0.0
  %vm2573 = vcmp.gt.f32.partialorder %v2541, 0.0
  %vm2574 = vcmp.gt.f32.partialorder %v2542, 0.0
  %vm2575 = vcmp.gt.f32.partialorder %v2543, 0.0
  %vm2576 = vcmp.gt.f32.partialorder %v2544, 0.0
  %vm2577 = vcmp.gt.f32.partialorder %v2545, 0.0
  %vm2578 = vcmp.gt.f32.partialorder %v2546, 0.0
  %vm2579 = vcmp.gt.f32.partialorder %v2547, 0.0
  %vm2580 = vcmp.gt.f32.partialorder %v2548, 0.0
  %vm2581 = vcmp.gt.f32.partialorder %v2549, 0.0
  %vm2582 = vcmp.gt.f32.partialorder %v2550, 0.0
  %vm2583 = vcmp.gt.f32.partialorder %v2551, 0.0
  %vm2584 = vcmp.gt.f32.partialorder %v2552, 0.0
  %vm2585 = vcmp.gt.f32.partialorder %v2553, 0.0
  %vm2586 = vcmp.gt.f32.partialorder %v2554, 0.0
  %vm2587 = vcmp.gt.f32.partialorder %v2555, 0.0
  %v2588 = vmul.f32 %v2524, 0.01
  %v2589 = vmul.f32 %v2525, 0.01
  %v2590 = vmul.f32 %v2526, 0.01
  %v2591 = vmul.f32 %v2527, 0.01
  %v2592 = vmul.f32 %v2528, 0.01
  %v2593 = vmul.f32 %v2529, 0.01
  %v2594 = vmul.f32 %v2530, 0.01
  %v2595 = vmul.f32 %v2531, 0.01
  %v2596 = vmul.f32 %v2532, 0.01
  %v2597 = vmul.f32 %v2533, 0.01
  %v2598 = vmul.f32 %v2534, 0.01
  %v2599 = vmul.f32 %v2535, 0.01
  %v2600 = vmul.f32 %v2536, 0.01
  %v2601 = vmul.f32 %v2537, 0.01
  %v2602 = vmul.f32 %v2538, 0.01
  %v2603 = vmul.f32 %v2539, 0.01
  %v2604 = vmul.f32 %v2540, 0.01
  %v2605 = vmul.f32 %v2541, 0.01
  %v2606 = vmul.f32 %v2542, 0.01
  %v2607 = vmul.f32 %v2543, 0.01
  %v2608 = vmul.f32 %v2544, 0.01
  %v2609 = vmul.f32 %v2545, 0.01
  %v2610 = vmul.f32 %v2546, 0.01
  %v2611 = vmul.f32 %v2547, 0.01
  %v2612 = vmul.f32 %v2548, 0.01
  %v2613 = vmul.f32 %v2549, 0.01
  %v2614 = vmul.f32 %v2550, 0.01
  %v2615 = vmul.f32 %v2551, 0.01
  %v2616 = vmul.f32 %v2552, 0.01
  %v2617 = vmul.f32 %v2553, 0.01
  %v2618 = vmul.f32 %v2554, 0.01
  %v2619 = vmul.f32 %v2555, 0.01
  %v2620 = vsel %vm2556, %v2524, %v2588
  %v2621 = vsel %vm2557, %v2525, %v2589
  %v2622 = vsel %vm2558, %v2526, %v2590
  %v2623 = vsel %vm2559, %v2527, %v2591
  %v2624 = vsel %vm2560, %v2528, %v2592
  %v2625 = vsel %vm2561, %v2529, %v2593
  %v2626 = vsel %vm2562, %v2530, %v2594
  %v2627 = vsel %vm2563, %v2531, %v2595
  %v2628 = vsel %vm2564, %v2532, %v2596
  %v2629 = vsel %vm2565, %v2533, %v2597
  %v2630 = vsel %vm2566, %v2534, %v2598
  %v2631 = vsel %vm2567, %v2535, %v2599
  %v2632 = vsel %vm2568, %v2536, %v2600
  %v2633 = vsel %vm2569, %v2537, %v2601
  %v2634 = vsel %vm2570, %v2538, %v2602
  %v2635 = vsel %vm2571, %v2539, %v2603
  %v2636 = vsel %vm2572, %v2540, %v2604
  %v2637 = vsel %vm2573, %v2541, %v2605
  %v2638 = vsel %vm2574, %v2542, %v2606
  %v2639 = vsel %vm2575, %v2543, %v2607
  %v2640 = vsel %vm2576, %v2544, %v2608
  %v2641 = vsel %vm2577, %v2545, %v2609
  %v2642 = vsel %vm2578, %v2546, %v2610
  %v2643 = vsel %vm2579, %v2547, %v2611
  %v2644 = vsel %vm2580, %v2548, %v2612
  %v2645 = vsel %vm2581, %v2549, %v2613
  %v2646 = vsel %vm2582, %v2550, %v2614
  %v2647 = vsel %vm2583, %v2551, %v2615
  %v2648 = vsel %vm2584, %v2552, %v2616
  %v2649 = vsel %vm2585, %v2553, %v2617
  %v2650 = vsel %vm2586, %v2554, %v2618
  %v2651 = vsel %vm2587, %v2555, %v2619
  %2684 = vrot.lane.b32.xlu0 %v2620, 127
  %v2685 = vpop.permute.xlu0 %2684
  %2686 = vrot.lane.b32.xlu0 %v2621, 127
  %v2687 = vpop.permute.xlu0 %2686
  %2688 = vrot.lane.b32.xlu0 %v2622, 127
  %v2689 = vpop.permute.xlu0 %2688
  %2690 = vrot.lane.b32.xlu0 %v2623, 127
  %v2691 = vpop.permute.xlu0 %2690
  %2692 = vrot.lane.b32.xlu0 %v2624, 127
  %v2693 = vpop.permute.xlu0 %2692
  %2694 = vrot.lane.b32.xlu0 %v2625, 127
  %v2695 = vpop.permute.xlu0 %2694
  %2696 = vrot.lane.b32.xlu0 %v2626, 127
  %v2697 = vpop.permute.xlu0 %2696
  %2698 = vrot.lane.b32.xlu0 %v2627, 127
  %v2699 = vpop.permute.xlu0 %2698
  %2700 = vrot.lane.b32.xlu0 %v2628, 127
  %v2701 = vpop.permute.xlu0 %2700
  %2702 = vrot.lane.b32.xlu0 %v2629, 127
  %v2703 = vpop.permute.xlu0 %2702
  %2704 = vrot.lane.b32.xlu0 %v2630, 127
  %v2705 = vpop.permute.xlu0 %2704
  %2706 = vrot.lane.b32.xlu0 %v2631, 127
  %v2707 = vpop.permute.xlu0 %2706
  %2708 = vrot.lane.b32.xlu0 %v2632, 127
  %v2709 = vpop.permute.xlu0 %2708
  %2710 = vrot.lane.b32.xlu0 %v2633, 127
  %v2711 = vpop.permute.xlu0 %2710
  %2712 = vrot.lane.b32.xlu0 %v2634, 127
  %v2713 = vpop.permute.xlu0 %2712
  %2714 = vrot.lane.b32.xlu0 %v2635, 127
  %v2715 = vpop.permute.xlu0 %2714
  %2716 = vrot.lane.b32.xlu0 %v2636, 127
  %v2717 = vpop.permute.xlu0 %2716
  %2718 = vrot.lane.b32.xlu0 %v2637, 127
  %v2719 = vpop.permute.xlu0 %2718
  %2720 = vrot.lane.b32.xlu0 %v2638, 127
  %v2721 = vpop.permute.xlu0 %2720
  %2722 = vrot.lane.b32.xlu0 %v2639, 127
  %v2723 = vpop.permute.xlu0 %2722
  %2724 = vrot.lane.b32.xlu0 %v2640, 127
  %v2725 = vpop.permute.xlu0 %2724
  %2726 = vrot.lane.b32.xlu0 %v2641, 127
  %v2727 = vpop.permute.xlu0 %2726
  %2728 = vrot.lane.b32.xlu0 %v2642, 127
  %v2729 = vpop.permute.xlu0 %2728
  %2730 = vrot.lane.b32.xlu0 %v2643, 127
  %v2731 = vpop.permute.xlu0 %2730
  %2732 = vrot.lane.b32.xlu0 %v2644, 127
  %v2733 = vpop.permute.xlu0 %2732
  %2734 = vrot.lane.b32.xlu0 %v2645, 127
  %v2735 = vpop.permute.xlu0 %2734
  %2736 = vrot.lane.b32.xlu0 %v2646, 127
  %v2737 = vpop.permute.xlu0 %2736
  %2738 = vrot.lane.b32.xlu0 %v2647, 127
  %v2739 = vpop.permute.xlu0 %2738
  %2740 = vrot.lane.b32.xlu0 %v2648, 127
  %v2741 = vpop.permute.xlu0 %2740
  %2742 = vrot.lane.b32.xlu0 %v2649, 127
  %v2743 = vpop.permute.xlu0 %2742
  %2744 = vrot.lane.b32.xlu0 %v2650, 127
  %v2745 = vpop.permute.xlu0 %2744
  %2746 = vrot.lane.b32.xlu0 %v2651, 127
  %v2747 = vpop.permute.xlu0 %2746
  %2780 = vrot.lane.b32.xlu0 %v2620, 63
  %v2781 = vpop.permute.xlu0 %2780
  %2782 = vrot.lane.b32.xlu0 %v2621, 63
  %v2783 = vpop.permute.xlu0 %2782
  %2784 = vrot.lane.b32.xlu0 %v2622, 63
  %v2785 = vpop.permute.xlu0 %2784
  %2786 = vrot.lane.b32.xlu0 %v2623, 63
  %v2787 = vpop.permute.xlu0 %2786
  %2788 = vrot.lane.b32.xlu0 %v2624, 63
  %v2789 = vpop.permute.xlu0 %2788
  %2790 = vrot.lane.b32.xlu0 %v2625, 63
  %v2791 = vpop.permute.xlu0 %2790
  %2792 = vrot.lane.b32.xlu0 %v2626, 63
  %v2793 = vpop.permute.xlu0 %2792
  %2794 = vrot.lane.b32.xlu0 %v2627, 63
  %v2795 = vpop.permute.xlu0 %2794
  %2796 = vrot.lane.b32.xlu0 %v2628, 63
  %v2797 = vpop.permute.xlu0 %2796
  %2798 = vrot.lane.b32.xlu0 %v2629, 63
  %v2799 = vpop.permute.xlu0 %2798
  %2800 = vrot.lane.b32.xlu0 %v2630, 63
  %v2801 = vpop.permute.xlu0 %2800
  %2802 = vrot.lane.b32.xlu0 %v2631, 63
  %v2803 = vpop.permute.xlu0 %2802
  %2804 = vrot.lane.b32.xlu0 %v2632, 63
  %v2805 = vpop.permute.xlu0 %2804
  %2806 = vrot.lane.b32.xlu0 %v2633, 63
  %v2807 = vpop.permute.xlu0 %2806
  %2808 = vrot.lane.b32.xlu0 %v2634, 63
  %v2809 = vpop.permute.xlu0 %2808
  %2810 = vrot.lane.b32.xlu0 %v2635, 63
  %v2811 = vpop.permute.xlu0 %2810
  %2812 = vrot.lane.b32.xlu0 %v2636, 63
  %v2813 = vpop.permute.xlu0 %2812
  %2814 = vrot.lane.b32.xlu0 %v2637, 63
  %v2815 = vpop.permute.xlu0 %2814
  %2816 = vrot.lane.b32.xlu0 %v2638, 63
  %v2817 = vpop.permute.xlu0 %2816
  %2818 = vrot.lane.b32.xlu0 %v2639, 63
  %v2819 = vpop.permute.xlu0 %2818
  %2820 = vrot.lane.b32.xlu0 %v2640, 63
  %v2821 = vpop.permute.xlu0 %2820
  %2822 = vrot.lane.b32.xlu0 %v2641, 63
  %v2823 = vpop.permute.xlu0 %2822
  %2824 = vrot.lane.b32.xlu0 %v2642, 63
  %v2825 = vpop.permute.xlu0 %2824
  %2826 = vrot.lane.b32.xlu0 %v2643, 63
  %v2827 = vpop.permute.xlu0 %2826
  %2828 = vrot.lane.b32.xlu0 %v2644, 63
  %v2829 = vpop.permute.xlu0 %2828
  %2830 = vrot.lane.b32.xlu0 %v2645, 63
  %v2831 = vpop.permute.xlu0 %2830
  %2832 = vrot.lane.b32.xlu0 %v2646, 63
  %v2833 = vpop.permute.xlu0 %2832
  %2834 = vrot.lane.b32.xlu0 %v2647, 63
  %v2835 = vpop.permute.xlu0 %2834
  %2836 = vrot.lane.b32.xlu0 %v2648, 63
  %v2837 = vpop.permute.xlu0 %2836
  %2838 = vrot.lane.b32.xlu0 %v2649, 63
  %v2839 = vpop.permute.xlu0 %2838
  %2840 = vrot.lane.b32.xlu0 %v2650, 63
  %v2841 = vpop.permute.xlu0 %2840
  %2842 = vrot.lane.b32.xlu0 %v2651, 63
  %v2843 = vpop.permute.xlu0 %2842
  %v2876 = vsel %vm1143, %v2685, %v2781
  %v2877 = vsel %vm1143, %v2687, %v2783
  %v2878 = vsel %vm1143, %v2689, %v2785
  %v2879 = vsel %vm1143, %v2691, %v2787
  %v2880 = vsel %vm1143, %v2693, %v2789
  %v2881 = vsel %vm1143, %v2695, %v2791
  %v2882 = vsel %vm1143, %v2697, %v2793
  %v2883 = vsel %vm1143, %v2699, %v2795
  %v2884 = vsel %vm1143, %v2701, %v2797
  %v2885 = vsel %vm1143, %v2703, %v2799
  %v2886 = vsel %vm1143, %v2705, %v2801
  %v2887 = vsel %vm1143, %v2707, %v2803
  %v2888 = vsel %vm1143, %v2709, %v2805
  %v2889 = vsel %vm1143, %v2711, %v2807
  %v2890 = vsel %vm1143, %v2713, %v2809
  %v2891 = vsel %vm1143, %v2715, %v2811
  %v2892 = vsel %vm1143, %v2717, %v2813
  %v2893 = vsel %vm1143, %v2719, %v2815
  %v2894 = vsel %vm1143, %v2721, %v2817
  %v2895 = vsel %vm1143, %v2723, %v2819
  %v2896 = vsel %vm1143, %v2725, %v2821
  %v2897 = vsel %vm1143, %v2727, %v2823
  %v2898 = vsel %vm1143, %v2729, %v2825
  %v2899 = vsel %vm1143, %v2731, %v2827
  %v2900 = vsel %vm1143, %v2733, %v2829
  %v2901 = vsel %vm1143, %v2735, %v2831
  %v2902 = vsel %vm1143, %v2737, %v2833
  %v2903 = vsel %vm1143, %v2739, %v2835
  %v2904 = vsel %vm1143, %v2741, %v2837
  %v2905 = vsel %vm1143, %v2743, %v2839
  %v2906 = vsel %vm1143, %v2745, %v2841
  %v2907 = vsel %vm1143, %v2747, %v2843
  %v2908 = vmax.f32 %v2620, %v2876
  %v2909 = vmax.f32 %v2621, %v2877
  %v2910 = vmax.f32 %v2622, %v2878
  %v2911 = vmax.f32 %v2623, %v2879
  %v2912 = vmax.f32 %v2624, %v2880
  %v2913 = vmax.f32 %v2625, %v2881
  %v2914 = vmax.f32 %v2626, %v2882
  %v2915 = vmax.f32 %v2627, %v2883
  %v2916 = vmax.f32 %v2628, %v2884
  %v2917 = vmax.f32 %v2629, %v2885
  %v2918 = vmax.f32 %v2630, %v2886
  %v2919 = vmax.f32 %v2631, %v2887
  %v2920 = vmax.f32 %v2632, %v2888
  %v2921 = vmax.f32 %v2633, %v2889
  %v2922 = vmax.f32 %v2634, %v2890
  %v2923 = vmax.f32 %v2635, %v2891
  %v2924 = vmax.f32 %v2636, %v2892
  %v2925 = vmax.f32 %v2637, %v2893
  %v2926 = vmax.f32 %v2638, %v2894
  %v2927 = vmax.f32 %v2639, %v2895
  %v2928 = vmax.f32 %v2640, %v2896
  %v2929 = vmax.f32 %v2641, %v2897
  %v2930 = vmax.f32 %v2642, %v2898
  %v2931 = vmax.f32 %v2643, %v2899
  %v2932 = vmax.f32 %v2644, %v2900
  %v2933 = vmax.f32 %v2645, %v2901
  %v2934 = vmax.f32 %v2646, %v2902
  %v2935 = vmax.f32 %v2647, %v2903
  %v2936 = vmax.f32 %v2648, %v2904
  %v2937 = vmax.f32 %v2649, %v2905
  %v2938 = vmax.f32 %v2650, %v2906
  %v2939 = vmax.f32 %v2651, %v2907
  %v2940 = vld [vmem:[%s8] sm:$0xff]
  %v2941 = vld [vmem:[%s8 + $0x8] sm:$0xff]
  %v2942 = vld [vmem:[%s8 + $0x10] sm:$0xff]
  %v2943 = vld [vmem:[%s8 + $0x18] sm:$0xff]
  %v2944 = vld [vmem:[%s8 + $0x20] sm:$0xff]
  %v2945 = vld [vmem:[%s8 + $0x28] sm:$0xff]
  %v2946 = vld [vmem:[%s8 + $0x30] sm:$0xff]
  %v2947 = vld [vmem:[%s8 + $0x38] sm:$0xff]
  %vm2948 = vcmask 523264
  %v2950 = vsel %vm2948, %v2908, 0
  %v2953 = vsel %vm2948, %v2909, 0
  %v2956 = vsel %vm2948, %v2910, 0
  %v2959 = vsel %vm2948, %v2911, 0
  %v2962 = vsel %vm2948, %v2912, 0
  %v2965 = vsel %vm2948, %v2913, 0
  %v2968 = vsel %vm2948, %v2914, 0
  %v2971 = vsel %vm2948, %v2915, 0
  %v2974 = vsel %vm2948, %v2916, 0
  %v2977 = vsel %vm2948, %v2917, 0
  %v2980 = vsel %vm2948, %v2918, 0
  %v2983 = vsel %vm2948, %v2919, 0
  %v2986 = vsel %vm2948, %v2920, 0
  %v2989 = vsel %vm2948, %v2921, 0
  %v2992 = vsel %vm2948, %v2922, 0
  %v2995 = vsel %vm2948, %v2923, 0
  %v2998 = vsel %vm2948, %v2924, 0
  %v3001 = vsel %vm2948, %v2925, 0
  %v3004 = vsel %vm2948, %v2926, 0
  %v3007 = vsel %vm2948, %v2927, 0
  %v3010 = vsel %vm2948, %v2928, 0
  %v3013 = vsel %vm2948, %v2929, 0
  %v3016 = vsel %vm2948, %v2930, 0
  %v3019 = vsel %vm2948, %v2931, 0
  %v3022 = vsel %vm2948, %v2932, 0
  %v3025 = vsel %vm2948, %v2933, 0
  %v3028 = vsel %vm2948, %v2934, 0
  %v3031 = vsel %vm2948, %v2935, 0
  %v3034 = vsel %vm2948, %v2936, 0
  %v3037 = vsel %vm2948, %v2937, 0
  %v3040 = vsel %vm2948, %v2938, 0
  %v3043 = vsel %vm2948, %v2939, 0
  %3045 = vmatprep.subr.mxu0 0.0
  %3046 = vmatpush1.msra.mxu0 %v2940
  %3047 = vmatprep.subr.mxu0 0.0
  %3048 = vmatpush1.msra.mxu0 %v2941
  %3049 = vmatprep.subr.mxu0 0.0
  %3050 = vmatpush1.msra.mxu0 %v2942
  %3051 = vmatprep.subr.mxu0 0.0
  %3052 = vmatpush1.msra.mxu0 %v2943
  %3053 = vmatprep.subr.mxu0 0.0
  %3054 = vmatpush1.msra.mxu0 %v2944
  %3055 = vmatprep.subr.mxu0 0.0
  %3056 = vmatpush1.msra.mxu0 %v2945
  %3057 = vmatprep.subr.mxu0 0.0
  %3058 = vmatpush1.msra.mxu0 %v2946
  %3059 = vmatprep.subr.mxu0 0.0
  %3060 = vmatpush1.msra.mxu0 %v2947
  %3061 = vmatprep.subr.mxu0 0.0
  %3062 = vmatpush1.msra.mxu0 0.0
  %3063 = vmatprep.subr.mxu0 0.0
  %3064 = vmatpush1.msra.mxu0 0.0
  %3065 = vmatprep.subr.mxu0 0.0
  %3066 = vmatpush1.msra.mxu0 0.0
  %3067 = vmatprep.subr.mxu0 0.0
  %3068 = vmatpush1.msra.mxu0 0.0
  %3069 = vmatprep.subr.mxu0 0.0
  %3070 = vmatpush1.msra.mxu0 0.0
  %3071 = vmatprep.subr.mxu0 0.0
  %3072 = vmatpush1.msra.mxu0 0.0
  %3073 = vmatprep.subr.mxu0 0.0
  %3074 = vmatpush1.msra.mxu0 0.0
  %3075 = vmatprep.subr.mxu0 0.0
  %3076 = vmatpush1.msra.mxu0 0.0
  %3077 = vmatprep.subr.mxu0 0.0
  %3078 = vmatpush1.msra.mxu0 0.0
  %3079 = vmatprep.subr.mxu0 0.0
  %3080 = vmatpush1.msra.mxu0 0.0
  %3081 = vmatprep.subr.mxu0 0.0
  %3082 = vmatpush1.msra.mxu0 0.0
  %3083 = vmatprep.subr.mxu0 0.0
  %3084 = vmatpush1.msra.mxu0 0.0
  %3085 = vmatprep.subr.mxu0 0.0
  %3086 = vmatpush1.msra.mxu0 0.0
  %3087 = vmatprep.subr.mxu0 0.0
  %3088 = vmatpush1.msra.mxu0 0.0
  %3089 = vmatprep.subr.mxu0 0.0
  %3090 = vmatpush1.msra.mxu0 0.0
  %3091 = vmatprep.subr.mxu0 0.0
  %3092 = vmatpush1.msra.mxu0 0.0
  %3093 = vmatprep.subr.mxu0 0.0
  %3094 = vmatpush1.msra.mxu0 0.0
  %3095 = vmatprep.subr.mxu0 0.0
  %3096 = vmatpush1.msra.mxu0 0.0
  %3097 = vmatprep.subr.mxu0 0.0
  %3098 = vmatpush1.msra.mxu0 0.0
  %3099 = vmatprep.subr.mxu0 0.0
  %3100 = vmatpush1.msra.mxu0 0.0
  %3101 = vmatprep.subr.mxu0 0.0
  %3102 = vmatpush1.msra.mxu0 0.0
  %3103 = vmatprep.subr.mxu0 0.0
  %3104 = vmatpush1.msra.mxu0 0.0
  %3105 = vmatprep.subr.mxu0 0.0
  %3106 = vmatpush1.msra.mxu0 0.0
  %3107 = vmatprep.subr.mxu0 0.0
  %3108 = vmatpush1.msra.mxu0 0.0
  %3109 = vmatprep.mubr.f32.mxu0 0.0
  %3110 = vmatmul.mubr.f32.gmra.mrb[0].mxu0 %v2950
  %v3111 = vpop.f32.mrb[0].mxu0
  %v3112 = vadd.f32 0.0, %v3111
  %v3113 = vpop.f32.mrb[0].mxu0
  %3114 = vmatprep.mubr.f32.mxu0 0.0
  %3115 = vmatmul.mubr.f32.gmra.mrb[0].mxu0 %v2953
  %v3116 = vpop.f32.mrb[0].mxu0
  %v3117 = vadd.f32 0.0, %v3116
  %v3118 = vpop.f32.mrb[0].mxu0
  %3119 = vmatprep.mubr.f32.mxu0 0.0
  %3120 = vmatmul.mubr.f32.gmra.mrb[0].mxu0 %v2956
  %v3121 = vpop.f32.mrb[0].mxu0
  %v3122 = vadd.f32 0.0, %v3121
  %v3123 = vpop.f32.mrb[0].mxu0
  %3124 = vmatprep.mubr.f32.mxu0 0.0
  %3125 = vmatmul.mubr.f32.gmra.mrb[0].mxu0 %v2959
  %v3126 = vpop.f32.mrb[0].mxu0
  %v3127 = vadd.f32 0.0, %v3126
  %v3128 = vpop.f32.mrb[0].mxu0
  %3129 = vmatprep.mubr.f32.mxu0 0.0
  %3130 = vmatmul.mubr.f32.gmra.mrb[0].mxu0 %v2962
  %v3131 = vpop.f32.mrb[0].mxu0
  %v3132 = vadd.f32 0.0, %v3131
  %v3133 = vpop.f32.mrb[0].mxu0
  %3134 = vmatprep.mubr.f32.mxu0 0.0
  %3135 = vmatmul.mubr.f32.gmra.mrb[0].mxu0 %v2965
  %v3136 = vpop.f32.mrb[0].mxu0
  %v3137 = vadd.f32 0.0, %v3136
  %v3138 = vpop.f32.mrb[0].mxu0
  %3139 = vmatprep.mubr.f32.mxu0 0.0
  %3140 = vmatmul.mubr.f32.gmra.mrb[0].mxu0 %v2968
  %v3141 = vpop.f32.mrb[0].mxu0
  %v3142 = vadd.f32 0.0, %v3141
  %v3143 = vpop.f32.mrb[0].mxu0
  %3144 = vmatprep.mubr.f32.mxu0 0.0
  %3145 = vmatmul.mubr.f32.gmra.mrb[0].mxu0 %v2971
  %v3146 = vpop.f32.mrb[0].mxu0
  %v3147 = vadd.f32 0.0, %v3146
  %v3148 = vpop.f32.mrb[0].mxu0
  %3149 = vmatprep.mubr.f32.mxu0 0.0
  %3150 = vmatmul.mubr.f32.gmra.mrb[0].mxu0 %v2974
  %v3151 = vpop.f32.mrb[0].mxu0
  %v3152 = vadd.f32 0.0, %v3151
  %v3153 = vpop.f32.mrb[0].mxu0
  %3154 = vmatprep.mubr.f32.mxu0 0.0
  %3155 = vmatmul.mubr.f32.gmra.mrb[0].mxu0 %v2977
  %v3156 = vpop.f32.mrb[0].mxu0
  %v3157 = vadd.f32 0.0, %v3156
  %v3158 = vpop.f32.mrb[0].mxu0
  %3159 = vmatprep.mubr.f32.mxu0 0.0
  %3160 = vmatmul.mubr.f32.gmra.mrb[0].mxu0 %v2980
  %v3161 = vpop.f32.mrb[0].mxu0
  %v3162 = vadd.f32 0.0, %v3161
  %v3163 = vpop.f32.mrb[0].mxu0
  %3164 = vmatprep.mubr.f32.mxu0 0.0
  %3165 = vmatmul.mubr.f32.gmra.mrb[0].mxu0 %v2983
  %v3166 = vpop.f32.mrb[0].mxu0
  %v3167 = vadd.f32 0.0, %v3166
  %v3168 = vpop.f32.mrb[0].mxu0
  %3169 = vmatprep.mubr.f32.mxu0 0.0
  %3170 = vmatmul.mubr.f32.gmra.mrb[0].mxu0 %v2986
  %v3171 = vpop.f32.mrb[0].mxu0
  %v3172 = vadd.f32 0.0, %v3171
  %v3173 = vpop.f32.mrb[0].mxu0
  %3174 = vmatprep.mubr.f32.mxu0 0.0
  %3175 = vmatmul.mubr.f32.gmra.mrb[0].mxu0 %v2989
  %v3176 = vpop.f32.mrb[0].mxu0
  %v3177 = vadd.f32 0.0, %v3176
  %v3178 = vpop.f32.mrb[0].mxu0
  %3179 = vmatprep.mubr.f32.mxu0 0.0
  %3180 = vmatmul.mubr.f32.gmra.mrb[0].mxu0 %v2992
  %v3181 = vpop.f32.mrb[0].mxu0
  %v3182 = vadd.f32 0.0, %v3181
  %v3183 = vpop.f32.mrb[0].mxu0
  %3184 = vmatprep.mubr.f32.mxu0 0.0
  %3185 = vmatmul.mubr.f32.gmra.mrb[0].mxu0 %v2995
  %v3186 = vpop.f32.mrb[0].mxu0
  %v3187 = vadd.f32 0.0, %v3186
  %v3188 = vpop.f32.mrb[0].mxu0
  %3189 = vmatprep.mubr.f32.mxu0 0.0
  %3190 = vmatmul.mubr.f32.gmra.mrb[0].mxu0 %v2998
  %v3191 = vpop.f32.mrb[0].mxu0
  %v3192 = vadd.f32 0.0, %v3191
  %v3193 = vpop.f32.mrb[0].mxu0
  %3194 = vmatprep.mubr.f32.mxu0 0.0
  %3195 = vmatmul.mubr.f32.gmra.mrb[0].mxu0 %v3001
  %v3196 = vpop.f32.mrb[0].mxu0
  %v3197 = vadd.f32 0.0, %v3196
  %v3198 = vpop.f32.mrb[0].mxu0
  %3199 = vmatprep.mubr.f32.mxu0 0.0
  %3200 = vmatmul.mubr.f32.gmra.mrb[0].mxu0 %v3004
  %v3201 = vpop.f32.mrb[0].mxu0
  %v3202 = vadd.f32 0.0, %v3201
  %v3203 = vpop.f32.mrb[0].mxu0
  %3204 = vmatprep.mubr.f32.mxu0 0.0
  %3205 = vmatmul.mubr.f32.gmra.mrb[0].mxu0 %v3007
  %v3206 = vpop.f32.mrb[0].mxu0
  %v3207 = vadd.f32 0.0, %v3206
  %v3208 = vpop.f32.mrb[0].mxu0
  %3209 = vmatprep.mubr.f32.mxu0 0.0
  %3210 = vmatmul.mubr.f32.gmra.mrb[0].mxu0 %v3010
  %v3211 = vpop.f32.mrb[0].mxu0
  %v3212 = vadd.f32 0.0, %v3211
  %v3213 = vpop.f32.mrb[0].mxu0
  %3214 = vmatprep.mubr.f32.mxu0 0.0
  %3215 = vmatmul.mubr.f32.gmra.mrb[0].mxu0 %v3013
  %v3216 = vpop.f32.mrb[0].mxu0
  %v3217 = vadd.f32 0.0, %v3216
  %v3218 = vpop.f32.mrb[0].mxu0
  %3219 = vmatprep.mubr.f32.mxu0 0.0
  %3220 = vmatmul.mubr.f32.gmra.mrb[0].mxu0 %v3016
  %v3221 = vpop.f32.mrb[0].mxu0
  %v3222 = vadd.f32 0.0, %v3221
  %v3223 = vpop.f32.mrb[0].mxu0
  %3224 = vmatprep.mubr.f32.mxu0 0.0
  %3225 = vmatmul.mubr.f32.gmra.mrb[0].mxu0 %v3019
  %v3226 = vpop.f32.mrb[0].mxu0
  %v3227 = vadd.f32 0.0, %v3226
  %v3228 = vpop.f32.mrb[0].mxu0
  %3229 = vmatprep.mubr.f32.mxu0 0.0
  %3230 = vmatmul.mubr.f32.gmra.mrb[0].mxu0 %v3022
  %v3231 = vpop.f32.mrb[0].mxu0
  %v3232 = vadd.f32 0.0, %v3231
  %v3233 = vpop.f32.mrb[0].mxu0
  %3234 = vmatprep.mubr.f32.mxu0 0.0
  %3235 = vmatmul.mubr.f32.gmra.mrb[0].mxu0 %v3025
  %v3236 = vpop.f32.mrb[0].mxu0
  %v3237 = vadd.f32 0.0, %v3236
  %v3238 = vpop.f32.mrb[0].mxu0
  %3239 = vmatprep.mubr.f32.mxu0 0.0
  %3240 = vmatmul.mubr.f32.gmra.mrb[0].mxu0 %v3028
  %v3241 = vpop.f32.mrb[0].mxu0
  %v3242 = vadd.f32 0.0, %v3241
  %v3243 = vpop.f32.mrb[0].mxu0
  %3244 = vmatprep.mubr.f32.mxu0 0.0
  %3245 = vmatmul.mubr.f32.gmra.mrb[0].mxu0 %v3031
  %v3246 = vpop.f32.mrb[0].mxu0
  %v3247 = vadd.f32 0.0, %v3246
  %v3248 = vpop.f32.mrb[0].mxu0
  %3249 = vmatprep.mubr.f32.mxu0 0.0
  %3250 = vmatmul.mubr.f32.gmra.mrb[0].mxu0 %v3034
  %v3251 = vpop.f32.mrb[0].mxu0
  %v3252 = vadd.f32 0.0, %v3251
  %v3253 = vpop.f32.mrb[0].mxu0
  %3254 = vmatprep.mubr.f32.mxu0 0.0
  %3255 = vmatmul.mubr.f32.gmra.mrb[0].mxu0 %v3037
  %v3256 = vpop.f32.mrb[0].mxu0
  %v3257 = vadd.f32 0.0, %v3256
  %v3258 = vpop.f32.mrb[0].mxu0
  %3259 = vmatprep.mubr.f32.mxu0 0.0
  %3260 = vmatmul.mubr.f32.gmra.mrb[0].mxu0 %v3040
  %v3261 = vpop.f32.mrb[0].mxu0
  %v3262 = vadd.f32 0.0, %v3261
  %v3263 = vpop.f32.mrb[0].mxu0
  %3264 = vmatprep.mubr.f32.mxu0 0.0
  %3265 = vmatmul.mubr.f32.gmra.mrb[0].mxu0 %v3043
  %v3266 = vpop.f32.mrb[0].mxu0
  %v3267 = vadd.f32 0.0, %v3266
  %v3268 = vpop.f32.mrb[0].mxu0
  %3269 = vdwg.mxu0
  %vm3270 = vcmask 261120
  %3271 = vst.msk [vmem:[#allocation2] sm:$0xff] %vm3270, %v3112
  %3273 = vrot.lane.b32.xlu0 %v3117, 32
  %v3274 = vpop.permute.xlu0 %3273
  %vm3276 = vcmask 523520
  %3277 = vst.msk [vmem:[#allocation2] sm:$0xff] %vm3276, %v3274
  %3279 = vrot.lane.b32.xlu0 %v3122, 64
  %v3280 = vpop.permute.xlu0 %3279
  %vm3282 = vcmask 785920
  %3283 = vst.msk [vmem:[#allocation2] sm:$0xff] %vm3282, %v3280
  %3285 = vrot.lane.b32.xlu0 %v3127, 96
  %v3286 = vpop.permute.xlu0 %3285
  %vm3288 = vcmask 1048320
  %3289 = vst.msk [vmem:[#allocation2] sm:$0xff] %vm3288, %v3286
  %3290 = vst.msk [vmem:[#allocation2 + $0x8] sm:$0xff] %vm3270, %v3132
  %3292 = vrot.lane.b32.xlu0 %v3137, 32
  %v3293 = vpop.permute.xlu0 %3292
  %3295 = vst.msk [vmem:[#allocation2 + $0x8] sm:$0xff] %vm3276, %v3293
  %3297 = vrot.lane.b32.xlu0 %v3142, 64
  %v3298 = vpop.permute.xlu0 %3297
  %3300 = vst.msk [vmem:[#allocation2 + $0x8] sm:$0xff] %vm3282, %v3298
  %3302 = vrot.lane.b32.xlu0 %v3147, 96
  %v3303 = vpop.permute.xlu0 %3302
  %3305 = vst.msk [vmem:[#allocation2 + $0x8] sm:$0xff] %vm3288, %v3303
  %3306 = vst.msk [vmem:[#allocation2 + $0x10] sm:$0xff] %vm3270, %v3152
  %3308 = vrot.lane.b32.xlu0 %v3157, 32
  %v3309 = vpop.permute.xlu0 %3308
  %3311 = vst.msk [vmem:[#allocation2 + $0x10] sm:$0xff] %vm3276, %v3309
  %3313 = vrot.lane.b32.xlu0 %v3162, 64
  %v3314 = vpop.permute.xlu0 %3313
  %3316 = vst.msk [vmem:[#allocation2 + $0x10] sm:$0xff] %vm3282, %v3314
  %3318 = vrot.lane.b32.xlu0 %v3167, 96
  %v3319 = vpop.permute.xlu0 %3318
  %3321 = vst.msk [vmem:[#allocation2 + $0x10] sm:$0xff] %vm3288, %v3319
  %3322 = vst.msk [vmem:[#allocation2 + $0x18] sm:$0xff] %vm3270, %v3172
  %3324 = vrot.lane.b32.xlu0 %v3177, 32
  %v3325 = vpop.permute.xlu0 %3324
  %3327 = vst.msk [vmem:[#allocation2 + $0x18] sm:$0xff] %vm3276, %v3325
  %3329 = vrot.lane.b32.xlu0 %v3182, 64
  %v3330 = vpop.permute.xlu0 %3329
  %3332 = vst.msk [vmem:[#allocation2 + $0x18] sm:$0xff] %vm3282, %v3330
  %3334 = vrot.lane.b32.xlu0 %v3187, 96
  %v3335 = vpop.permute.xlu0 %3334
  %3337 = vst.msk [vmem:[#allocation2 + $0x18] sm:$0xff] %vm3288, %v3335
  %3338 = vst.msk [vmem:[#allocation2 + $0x20] sm:$0xff] %vm3270, %v3192
  %3340 = vrot.lane.b32.xlu0 %v3197, 32
  %v3341 = vpop.permute.xlu0 %3340
  %3343 = vst.msk [vmem:[#allocation2 + $0x20] sm:$0xff] %vm3276, %v3341
  %3345 = vrot.lane.b32.xlu0 %v3202, 64
  %v3346 = vpop.permute.xlu0 %3345
  %3348 = vst.msk [vmem:[#allocation2 + $0x20] sm:$0xff] %vm3282, %v3346
  %3350 = vrot.lane.b32.xlu0 %v3207, 96
  %v3351 = vpop.permute.xlu0 %3350
  %3353 = vst.msk [vmem:[#allocation2 + $0x20] sm:$0xff] %vm3288, %v3351
  %3354 = vst.msk [vmem:[#allocation2 + $0x28] sm:$0xff] %vm3270, %v3212
  %3356 = vrot.lane.b32.xlu0 %v3217, 32
  %v3357 = vpop.permute.xlu0 %3356
  %3359 = vst.msk [vmem:[#allocation2 + $0x28] sm:$0xff] %vm3276, %v3357
  %3361 = vrot.lane.b32.xlu0 %v3222, 64
  %v3362 = vpop.permute.xlu0 %3361
  %3364 = vst.msk [vmem:[#allocation2 + $0x28] sm:$0xff] %vm3282, %v3362
  %3366 = vrot.lane.b32.xlu0 %v3227, 96
  %v3367 = vpop.permute.xlu0 %3366
  %3369 = vst.msk [vmem:[#allocation2 + $0x28] sm:$0xff] %vm3288, %v3367
  %3370 = vst.msk [vmem:[#allocation2 + $0x30] sm:$0xff] %vm3270, %v3232
  %3372 = vrot.lane.b32.xlu0 %v3237, 32
  %v3373 = vpop.permute.xlu0 %3372
  %3375 = vst.msk [vmem:[#allocation2 + $0x30] sm:$0xff] %vm3276, %v3373
  %3377 = vrot.lane.b32.xlu0 %v3242, 64
  %v3378 = vpop.permute.xlu0 %3377
  %3380 = vst.msk [vmem:[#allocation2 + $0x30] sm:$0xff] %vm3282, %v3378
  %3382 = vrot.lane.b32.xlu0 %v3247, 96
  %v3383 = vpop.permute.xlu0 %3382
  %3385 = vst.msk [vmem:[#allocation2 + $0x30] sm:$0xff] %vm3288, %v3383
  %3386 = vst.msk [vmem:[#allocation2 + $0x38] sm:$0xff] %vm3270, %v3252
  %3388 = vrot.lane.b32.xlu0 %v3257, 32
  %v3389 = vpop.permute.xlu0 %3388
  %3391 = vst.msk [vmem:[#allocation2 + $0x38] sm:$0xff] %vm3276, %v3389
  %3393 = vrot.lane.b32.xlu0 %v3262, 64
  %v3394 = vpop.permute.xlu0 %3393
  %3396 = vst.msk [vmem:[#allocation2 + $0x38] sm:$0xff] %vm3282, %v3394
  %3398 = vrot.lane.b32.xlu0 %v3267, 96
  %v3399 = vpop.permute.xlu0 %3398
  %3401 = vst.msk [vmem:[#allocation2 + $0x38] sm:$0xff] %vm3288, %v3399
  %v3402 = vld [vmem:[#allocation2] sm:$0xff]
  %v3403 = vld [vmem:[#allocation2 + $0x8] sm:$0xff]
  %v3404 = vld [vmem:[#allocation2 + $0x10] sm:$0xff]
  %v3405 = vld [vmem:[#allocation2 + $0x18] sm:$0xff]
  %v3406 = vld [vmem:[#allocation2 + $0x20] sm:$0xff]
  %v3407 = vld [vmem:[#allocation2 + $0x28] sm:$0xff]
  %v3408 = vld [vmem:[#allocation2 + $0x30] sm:$0xff]
  %v3409 = vld [vmem:[#allocation2 + $0x38] sm:$0xff]
  %v3410 = vld [vmem:[%s9] sm:$0xff]
  %v3411 = vld [vmem:[%s9 + $0x8] sm:$0xff]
  %v3412 = vld [vmem:[%s9 + $0x10] sm:$0xff]
  %v3413 = vld [vmem:[%s9 + $0x18] sm:$0xff]
  %v3414 = vld [vmem:[%s9 + $0x20] sm:$0xff]
  %v3415 = vld [vmem:[%s9 + $0x28] sm:$0xff]
  %v3416 = vld [vmem:[%s9 + $0x30] sm:$0xff]
  %v3417 = vld [vmem:[%s9 + $0x38] sm:$0xff]
  %v3418 = vld [vmem:[%s9 + $0x40] sm:$0xff]
  %v3419 = vld [vmem:[%s9 + $0x48] sm:$0xff]
  %v3420 = vld [vmem:[%s9 + $0x50] sm:$0xff]
  %v3421 = vld [vmem:[%s9 + $0x58] sm:$0xff]
  %v3422 = vld [vmem:[%s9 + $0x60] sm:$0xff]
  %v3423 = vld [vmem:[%s9 + $0x68] sm:$0xff]
  %v3424 = vld [vmem:[%s9 + $0x70] sm:$0xff]
  %v3425 = vld [vmem:[%s9 + $0x78] sm:$0xff]
  %v3426 = vld [vmem:[%s9 + $0x80] sm:$0xff]
  %v3427 = vld [vmem:[%s9 + $0x88] sm:$0xff]
  %v3428 = vld [vmem:[%s9 + $0x90] sm:$0xff]
  %v3429 = vld [vmem:[%s9 + $0x98] sm:$0xff]
  %v3430 = vld [vmem:[%s9 + $0xa0] sm:$0xff]
  %v3431 = vld [vmem:[%s9 + $0xa8] sm:$0xff]
  %v3432 = vld [vmem:[%s9 + $0xb0] sm:$0xff]
  %v3433 = vld [vmem:[%s9 + $0xb8] sm:$0xff]
  %v3434 = vld [vmem:[%s9 + $0xc0] sm:$0xff]
  %v3435 = vld [vmem:[%s9 + $0xc8] sm:$0xff]
  %v3436 = vld [vmem:[%s9 + $0xd0] sm:$0xff]
  %v3437 = vld [vmem:[%s9 + $0xd8] sm:$0xff]
  %v3438 = vld [vmem:[%s9 + $0xe0] sm:$0xff]
  %v3439 = vld [vmem:[%s9 + $0xe8] sm:$0xff]
  %v3440 = vld [vmem:[%s9 + $0xf0] sm:$0xff]
  %v3441 = vld [vmem:[%s9 + $0xf8] sm:$0xff]
  %v3442 = vld [vmem:[%s9 + $0x100] sm:$0xff]
  %v3443 = vld [vmem:[%s9 + $0x108] sm:$0xff]
  %v3444 = vld [vmem:[%s9 + $0x110] sm:$0xff]
  %v3445 = vld [vmem:[%s9 + $0x118] sm:$0xff]
  %v3446 = vld [vmem:[%s9 + $0x120] sm:$0xff]
  %v3447 = vld [vmem:[%s9 + $0x128] sm:$0xff]
  %v3448 = vld [vmem:[%s9 + $0x130] sm:$0xff]
  %v3449 = vld [vmem:[%s9 + $0x138] sm:$0xff]
  %v3450 = vld [vmem:[%s9 + $0x140] sm:$0xff]
  %v3451 = vld [vmem:[%s9 + $0x148] sm:$0xff]
  %v3452 = vld [vmem:[%s9 + $0x150] sm:$0xff]
  %v3453 = vld [vmem:[%s9 + $0x158] sm:$0xff]
  %v3454 = vld [vmem:[%s9 + $0x160] sm:$0xff]
  %v3455 = vld [vmem:[%s9 + $0x168] sm:$0xff]
  %v3456 = vld [vmem:[%s9 + $0x170] sm:$0xff]
  %v3457 = vld [vmem:[%s9 + $0x178] sm:$0xff]
  %v3458 = vld [vmem:[%s9 + $0x180] sm:$0xff]
  %v3459 = vld [vmem:[%s9 + $0x188] sm:$0xff]
  %v3460 = vld [vmem:[%s9 + $0x190] sm:$0xff]
  %v3461 = vld [vmem:[%s9 + $0x198] sm:$0xff]
  %v3462 = vld [vmem:[%s9 + $0x1a0] sm:$0xff]
  %v3463 = vld [vmem:[%s9 + $0x1a8] sm:$0xff]
  %v3464 = vld [vmem:[%s9 + $0x1b0] sm:$0xff]
  %v3465 = vld [vmem:[%s9 + $0x1b8] sm:$0xff]
  %v3466 = vld [vmem:[%s9 + $0x1c0] sm:$0xff]
  %v3467 = vld [vmem:[%s9 + $0x1c8] sm:$0xff]
  %v3468 = vld [vmem:[%s9 + $0x1d0] sm:$0xff]
  %v3469 = vld [vmem:[%s9 + $0x1d8] sm:$0xff]
  %v3470 = vld [vmem:[%s9 + $0x1e0] sm:$0xff]
  %v3471 = vld [vmem:[%s9 + $0x1e8] sm:$0xff]
  %v3472 = vld [vmem:[%s9 + $0x1f0] sm:$0xff]
  %v3473 = vld [vmem:[%s9 + $0x1f8] sm:$0xff]
  %v3474 = vld [vmem:[%s9 + $0x200] sm:$0xff]
  %v3475 = vld [vmem:[%s9 + $0x208] sm:$0xff]
  %v3476 = vld [vmem:[%s9 + $0x210] sm:$0xff]
  %v3477 = vld [vmem:[%s9 + $0x218] sm:$0xff]
  %v3478 = vld [vmem:[%s9 + $0x220] sm:$0xff]
  %v3479 = vld [vmem:[%s9 + $0x228] sm:$0xff]
  %v3480 = vld [vmem:[%s9 + $0x230] sm:$0xff]
  %v3481 = vld [vmem:[%s9 + $0x238] sm:$0xff]
  %v3482 = vld [vmem:[%s9 + $0x240] sm:$0xff]
  %v3483 = vld [vmem:[%s9 + $0x248] sm:$0xff]
  %v3484 = vld [vmem:[%s9 + $0x250] sm:$0xff]
  %v3485 = vld [vmem:[%s9 + $0x258] sm:$0xff]
  %v3486 = vld [vmem:[%s9 + $0x260] sm:$0xff]
  %v3487 = vld [vmem:[%s9 + $0x268] sm:$0xff]
  %v3488 = vld [vmem:[%s9 + $0x270] sm:$0xff]
  %v3489 = vld [vmem:[%s9 + $0x278] sm:$0xff]
  %v3490 = vld [vmem:[%s9 + $0x280] sm:$0xff]
  %v3491 = vld [vmem:[%s9 + $0x288] sm:$0xff]
  %v3492 = vld [vmem:[%s9 + $0x290] sm:$0xff]
  %v3493 = vld [vmem:[%s9 + $0x298] sm:$0xff]
  %v3494 = vld [vmem:[%s9 + $0x2a0] sm:$0xff]
  %v3495 = vld [vmem:[%s9 + $0x2a8] sm:$0xff]
  %v3496 = vld [vmem:[%s9 + $0x2b0] sm:$0xff]
  %v3497 = vld [vmem:[%s9 + $0x2b8] sm:$0xff]
  %v3498 = vld [vmem:[%s9 + $0x2c0] sm:$0xff]
  %v3499 = vld [vmem:[%s9 + $0x2c8] sm:$0xff]
  %v3500 = vld [vmem:[%s9 + $0x2d0] sm:$0xff]
  %v3501 = vld [vmem:[%s9 + $0x2d8] sm:$0xff]
  %v3502 = vld [vmem:[%s9 + $0x2e0] sm:$0xff]
  %v3503 = vld [vmem:[%s9 + $0x2e8] sm:$0xff]
  %v3504 = vld [vmem:[%s9 + $0x2f0] sm:$0xff]
  %v3505 = vld [vmem:[%s9 + $0x2f8] sm:$0xff]
  %v3506 = vld [vmem:[%s9 + $0x300] sm:$0xff]
  %v3507 = vld [vmem:[%s9 + $0x308] sm:$0xff]
  %v3508 = vld [vmem:[%s9 + $0x310] sm:$0xff]
  %v3509 = vld [vmem:[%s9 + $0x318] sm:$0xff]
  %v3510 = vld [vmem:[%s9 + $0x320] sm:$0xff]
  %v3511 = vld [vmem:[%s9 + $0x328] sm:$0xff]
  %v3512 = vld [vmem:[%s9 + $0x330] sm:$0xff]
  %v3513 = vld [vmem:[%s9 + $0x338] sm:$0xff]
  %v3514 = vld [vmem:[%s9 + $0x340] sm:$0xff]
  %v3515 = vld [vmem:[%s9 + $0x348] sm:$0xff]
  %v3516 = vld [vmem:[%s9 + $0x350] sm:$0xff]
  %v3517 = vld [vmem:[%s9 + $0x358] sm:$0xff]
  %v3518 = vld [vmem:[%s9 + $0x360] sm:$0xff]
  %v3519 = vld [vmem:[%s9 + $0x368] sm:$0xff]
  %v3520 = vld [vmem:[%s9 + $0x370] sm:$0xff]
  %v3521 = vld [vmem:[%s9 + $0x378] sm:$0xff]
  %v3522 = vld [vmem:[%s9 + $0x380] sm:$0xff]
  %v3523 = vld [vmem:[%s9 + $0x388] sm:$0xff]
  %v3524 = vld [vmem:[%s9 + $0x390] sm:$0xff]
  %v3525 = vld [vmem:[%s9 + $0x398] sm:$0xff]
  %v3526 = vld [vmem:[%s9 + $0x3a0] sm:$0xff]
  %v3527 = vld [vmem:[%s9 + $0x3a8] sm:$0xff]
  %v3528 = vld [vmem:[%s9 + $0x3b0] sm:$0xff]
  %v3529 = vld [vmem:[%s9 + $0x3b8] sm:$0xff]
  %v3530 = vld [vmem:[%s9 + $0x3c0] sm:$0xff]
  %v3531 = vld [vmem:[%s9 + $0x3c8] sm:$0xff]
  %v3532 = vld [vmem:[%s9 + $0x3d0] sm:$0xff]
  %v3533 = vld [vmem:[%s9 + $0x3d8] sm:$0xff]
  %v3534 = vld [vmem:[%s9 + $0x3e0] sm:$0xff]
  %v3535 = vld [vmem:[%s9 + $0x3e8] sm:$0xff]
  %v3536 = vld [vmem:[%s9 + $0x3f0] sm:$0xff]
  %v3537 = vld [vmem:[%s9 + $0x3f8] sm:$0xff]
  %v3538 = vld [vmem:[%s10] sm:$0x1]
  %v3540 = vlaneseq
  %v3541 = vshrl.u32 %v3540, 7
  %v3542 = vsub.s32 0, %v3541
  %v3543 = vrot.slane %v3538, %v3542
  %3545 = vmatprep.subr.mxu0 0.0
  %3546 = vmatpush1.msra.mxu0 %v3410
  %3547 = vmatprep.subr.mxu0 0.0
  %3548 = vmatpush1.msra.mxu0 %v3411
  %3549 = vmatprep.subr.mxu0 0.0
  %3550 = vmatpush1.msra.mxu0 %v3412
  %3551 = vmatprep.subr.mxu0 0.0
  %3552 = vmatpush1.msra.mxu0 %v3413
  %3553 = vmatprep.subr.mxu0 0.0
  %3554 = vmatpush1.msra.mxu0 %v3414
  %3555 = vmatprep.subr.mxu0 0.0
  %3556 = vmatpush1.msra.mxu0 %v3415
  %3557 = vmatprep.subr.mxu0 0.0
  %3558 = vmatpush1.msra.mxu0 %v3416
  %3559 = vmatprep.subr.mxu0 0.0
  %3560 = vmatpush1.msra.mxu0 %v3417
  %3561 = vmatprep.subr.mxu0 0.0
  %3562 = vmatpush1.msra.mxu0 %v3418
  %3563 = vmatprep.subr.mxu0 0.0
  %3564 = vmatpush1.msra.mxu0 %v3419
  %3565 = vmatprep.subr.mxu0 0.0
  %3566 = vmatpush1.msra.mxu0 %v3420
  %3567 = vmatprep.subr.mxu0 0.0
  %3568 = vmatpush1.msra.mxu0 %v3421
  %3569 = vmatprep.subr.mxu0 0.0
  %3570 = vmatpush1.msra.mxu0 %v3422
  %3571 = vmatprep.subr.mxu0 0.0
  %3572 = vmatpush1.msra.mxu0 %v3423
  %3573 = vmatprep.subr.mxu0 0.0
  %3574 = vmatpush1.msra.mxu0 %v3424
  %3575 = vmatprep.subr.mxu0 0.0
  %3576 = vmatpush1.msra.mxu0 %v3425
  %3577 = vmatprep.subr.mxu0 0.0
  %3578 = vmatpush1.msra.mxu0 %v3426
  %3579 = vmatprep.subr.mxu0 0.0
  %3580 = vmatpush1.msra.mxu0 %v3427
  %3581 = vmatprep.subr.mxu0 0.0
  %3582 = vmatpush1.msra.mxu0 %v3428
  %3583 = vmatprep.subr.mxu0 0.0
  %3584 = vmatpush1.msra.mxu0 %v3429
  %3585 = vmatprep.subr.mxu0 0.0
  %3586 = vmatpush1.msra.mxu0 %v3430
  %3587 = vmatprep.subr.mxu0 0.0
  %3588 = vmatpush1.msra.mxu0 %v3431
  %3589 = vmatprep.subr.mxu0 0.0
  %3590 = vmatpush1.msra.mxu0 %v3432
  %3591 = vmatprep.subr.mxu0 0.0
  %3592 = vmatpush1.msra.mxu0 %v3433
  %3593 = vmatprep.subr.mxu0 0.0
  %3594 = vmatpush1.msra.mxu0 %v3434
  %3595 = vmatprep.subr.mxu0 0.0
  %3596 = vmatpush1.msra.mxu0 %v3435
  %3597 = vmatprep.subr.mxu0 0.0
  %3598 = vmatpush1.msra.mxu0 %v3436
  %3599 = vmatprep.subr.mxu0 0.0
  %3600 = vmatpush1.msra.mxu0 %v3437
  %3601 = vmatprep.subr.mxu0 0.0
  %3602 = vmatpush1.msra.mxu0 %v3438
  %3603 = vmatprep.subr.mxu0 0.0
  %3604 = vmatpush1.msra.mxu0 %v3439
  %3605 = vmatprep.subr.mxu0 0.0
  %3606 = vmatpush1.msra.mxu0 %v3440
  %3607 = vmatprep.subr.mxu0 0.0
  %3608 = vmatpush1.msra.mxu0 %v3441
  %3609 = vmatprep.mubr.f32.mxu0 %v3403
  %3610 = vmatmul.mubr.f32.gmra.mrb[0].mxu0 %v3402
  %v3611 = vpop.f32.mrb[0].mxu0
  %v3612 = vadd.f32 %v3543, %v3611
  %v3613 = vpop.f32.mrb[0].mxu0
  %3614 = vdwg.mxu0
  %3615 = vmatprep.subr.mxu0 0.0
  %3616 = vmatpush1.msra.mxu0 %v3442
  %3617 = vmatprep.subr.mxu0 0.0
  %3618 = vmatpush1.msra.mxu0 %v3443
  %3619 = vmatprep.subr.mxu0 0.0
  %3620 = vmatpush1.msra.mxu0 %v3444
  %3621 = vmatprep.subr.mxu0 0.0
  %3622 = vmatpush1.msra.mxu0 %v3445
  %3623 = vmatprep.subr.mxu0 0.0
  %3624 = vmatpush1.msra.mxu0 %v3446
  %3625 = vmatprep.subr.mxu0 0.0
  %3626 = vmatpush1.msra.mxu0 %v3447
  %3627 = vmatprep.subr.mxu0 0.0
  %3628 = vmatpush1.msra.mxu0 %v3448
  %3629 = vmatprep.subr.mxu0 0.0
  %3630 = vmatpush1.msra.mxu0 %v3449
  %3631 = vmatprep.subr.mxu0 0.0
  %3632 = vmatpush1.msra.mxu0 %v3450
  %3633 = vmatprep.subr.mxu0 0.0
  %3634 = vmatpush1.msra.mxu0 %v3451
  %3635 = vmatprep.subr.mxu0 0.0
  %3636 = vmatpush1.msra.mxu0 %v3452
  %3637 = vmatprep.subr.mxu0 0.0
  %3638 = vmatpush1.msra.mxu0 %v3453
  %3639 = vmatprep.subr.mxu0 0.0
  %3640 = vmatpush1.msra.mxu0 %v3454
  %3641 = vmatprep.subr.mxu0 0.0
  %3642 = vmatpush1.msra.mxu0 %v3455
  %3643 = vmatprep.subr.mxu0 0.0
  %3644 = vmatpush1.msra.mxu0 %v3456
  %3645 = vmatprep.subr.mxu0 0.0
  %3646 = vmatpush1.msra.mxu0 %v3457
  %3647 = vmatprep.subr.mxu0 0.0
  %3648 = vmatpush1.msra.mxu0 %v3458
  %3649 = vmatprep.subr.mxu0 0.0
  %3650 = vmatpush1.msra.mxu0 %v3459
  %3651 = vmatprep.subr.mxu0 0.0
  %3652 = vmatpush1.msra.mxu0 %v3460
  %3653 = vmatprep.subr.mxu0 0.0
  %3654 = vmatpush1.msra.mxu0 %v3461
  %3655 = vmatprep.subr.mxu0 0.0
  %3656 = vmatpush1.msra.mxu0 %v3462
  %3657 = vmatprep.subr.mxu0 0.0
  %3658 = vmatpush1.msra.mxu0 %v3463
  %3659 = vmatprep.subr.mxu0 0.0
  %3660 = vmatpush1.msra.mxu0 %v3464
  %3661 = vmatprep.subr.mxu0 0.0
  %3662 = vmatpush1.msra.mxu0 %v3465
  %3663 = vmatprep.subr.mxu0 0.0
  %3664 = vmatpush1.msra.mxu0 %v3466
  %3665 = vmatprep.subr.mxu0 0.0
  %3666 = vmatpush1.msra.mxu0 %v3467
  %3667 = vmatprep.subr.mxu0 0.0
  %3668 = vmatpush1.msra.mxu0 %v3468
  %3669 = vmatprep.subr.mxu0 0.0
  %3670 = vmatpush1.msra.mxu0 %v3469
  %3671 = vmatprep.subr.mxu0 0.0
  %3672 = vmatpush1.msra.mxu0 %v3470
  %3673 = vmatprep.subr.mxu0 0.0
  %3674 = vmatpush1.msra.mxu0 %v3471
  %3675 = vmatprep.subr.mxu0 0.0
  %3676 = vmatpush1.msra.mxu0 %v3472
  %3677 = vmatprep.subr.mxu0 0.0
  %3678 = vmatpush1.msra.mxu0 %v3473
  %3679 = vmatprep.mubr.f32.mxu0 %v3405
  %3680 = vmatmul.mubr.f32.gmra.mrb[0].mxu0 %v3404
  %v3681 = vpop.f32.mrb[0].mxu0
  %v3682 = vadd.f32 %v3612, %v3681
  %v3683 = vpop.f32.mrb[0].mxu0
  %3684 = vdwg.mxu0
  %3685 = vmatprep.subr.mxu0 0.0
  %3686 = vmatpush1.msra.mxu0 %v3474
  %3687 = vmatprep.subr.mxu0 0.0
  %3688 = vmatpush1.msra.mxu0 %v3475
  %3689 = vmatprep.subr.mxu0 0.0
  %3690 = vmatpush1.msra.mxu0 %v3476
  %3691 = vmatprep.subr.mxu0 0.0
  %3692 = vmatpush1.msra.mxu0 %v3477
  %3693 = vmatprep.subr.mxu0 0.0
  %3694 = vmatpush1.msra.mxu0 %v3478
  %3695 = vmatprep.subr.mxu0 0.0
  %3696 = vmatpush1.msra.mxu0 %v3479
  %3697 = vmatprep.subr.mxu0 0.0
  %3698 = vmatpush1.msra.mxu0 %v3480
  %3699 = vmatprep.subr.mxu0 0.0
  %3700 = vmatpush1.msra.mxu0 %v3481
  %3701 = vmatprep.subr.mxu0 0.0
  %3702 = vmatpush1.msra.mxu0 %v3482
  %3703 = vmatprep.subr.mxu0 0.0
  %3704 = vmatpush1.msra.mxu0 %v3483
  %3705 = vmatprep.subr.mxu0 0.0
  %3706 = vmatpush1.msra.mxu0 %v3484
  %3707 = vmatprep.subr.mxu0 0.0
  %3708 = vmatpush1.msra.mxu0 %v3485
  %3709 = vmatprep.subr.mxu0 0.0
  %3710 = vmatpush1.msra.mxu0 %v3486
  %3711 = vmatprep.subr.mxu0 0.0
  %3712 = vmatpush1.msra.mxu0 %v3487
  %3713 = vmatprep.subr.mxu0 0.0
  %3714 = vmatpush1.msra.mxu0 %v3488
  %3715 = vmatprep.subr.mxu0 0.0
  %3716 = vmatpush1.msra.mxu0 %v3489
  %3717 = vmatprep.subr.mxu0 0.0
  %3718 = vmatpush1.msra.mxu0 %v3490
  %3719 = vmatprep.subr.mxu0 0.0
  %3720 = vmatpush1.msra.mxu0 %v3491
  %3721 = vmatprep.subr.mxu0 0.0
  %3722 = vmatpush1.msra.mxu0 %v3492
  %3723 = vmatprep.subr.mxu0 0.0
  %3724 = vmatpush1.msra.mxu0 %v3493
  %3725 = vmatprep.subr.mxu0 0.0
  %3726 = vmatpush1.msra.mxu0 %v3494
  %3727 = vmatprep.subr.mxu0 0.0
  %3728 = vmatpush1.msra.mxu0 %v3495
  %3729 = vmatprep.subr.mxu0 0.0
  %3730 = vmatpush1.msra.mxu0 %v3496
  %3731 = vmatprep.subr.mxu0 0.0
  %3732 = vmatpush1.msra.mxu0 %v3497
  %3733 = vmatprep.subr.mxu0 0.0
  %3734 = vmatpush1.msra.mxu0 %v3498
  %3735 = vmatprep.subr.mxu0 0.0
  %3736 = vmatpush1.msra.mxu0 %v3499
  %3737 = vmatprep.subr.mxu0 0.0
  %3738 = vmatpush1.msra.mxu0 %v3500
  %3739 = vmatprep.subr.mxu0 0.0
  %3740 = vmatpush1.msra.mxu0 %v3501
  %3741 = vmatprep.subr.mxu0 0.0
  %3742 = vmatpush1.msra.mxu0 %v3502
  %3743 = vmatprep.subr.mxu0 0.0
  %3744 = vmatpush1.msra.mxu0 %v3503
  %3745 = vmatprep.subr.mxu0 0.0
  %3746 = vmatpush1.msra.mxu0 %v3504
  %3747 = vmatprep.subr.mxu0 0.0
  %3748 = vmatpush1.msra.mxu0 %v3505
  %3749 = vmatprep.mubr.f32.mxu0 %v3407
  %3750 = vmatmul.mubr.f32.gmra.mrb[0].mxu0 %v3406
  %v3751 = vpop.f32.mrb[0].mxu0
  %v3752 = vadd.f32 %v3682, %v3751
  %v3753 = vpop.f32.mrb[0].mxu0
  %3754 = vdwg.mxu0
  %3755 = vmatprep.subr.mxu0 0.0
  %3756 = vmatpush1.msra.mxu0 %v3506
  %3757 = vmatprep.subr.mxu0 0.0
  %3758 = vmatpush1.msra.mxu0 %v3507
  %3759 = vmatprep.subr.mxu0 0.0
  %3760 = vmatpush1.msra.mxu0 %v3508
  %3761 = vmatprep.subr.mxu0 0.0
  %3762 = vmatpush1.msra.mxu0 %v3509
  %3763 = vmatprep.subr.mxu0 0.0
  %3764 = vmatpush1.msra.mxu0 %v3510
  %3765 = vmatprep.subr.mxu0 0.0
  %3766 = vmatpush1.msra.mxu0 %v3511
  %3767 = vmatprep.subr.mxu0 0.0
  %3768 = vmatpush1.msra.mxu0 %v3512
  %3769 = vmatprep.subr.mxu0 0.0
  %3770 = vmatpush1.msra.mxu0 %v3513
  %3771 = vmatprep.subr.mxu0 0.0
  %3772 = vmatpush1.msra.mxu0 %v3514
  %3773 = vmatprep.subr.mxu0 0.0
  %3774 = vmatpush1.msra.mxu0 %v3515
  %3775 = vmatprep.subr.mxu0 0.0
  %3776 = vmatpush1.msra.mxu0 %v3516
  %3777 = vmatprep.subr.mxu0 0.0
  %3778 = vmatpush1.msra.mxu0 %v3517
  %3779 = vmatprep.subr.mxu0 0.0
  %3780 = vmatpush1.msra.mxu0 %v3518
  %3781 = vmatprep.subr.mxu0 0.0
  %3782 = vmatpush1.msra.mxu0 %v3519
  %3783 = vmatprep.subr.mxu0 0.0
  %3784 = vmatpush1.msra.mxu0 %v3520
  %3785 = vmatprep.subr.mxu0 0.0
  %3786 = vmatpush1.msra.mxu0 %v3521
  %3787 = vmatprep.subr.mxu0 0.0
  %3788 = vmatpush1.msra.mxu0 %v3522
  %3789 = vmatprep.subr.mxu0 0.0
  %3790 = vmatpush1.msra.mxu0 %v3523
  %3791 = vmatprep.subr.mxu0 0.0
  %3792 = vmatpush1.msra.mxu0 %v3524
  %3793 = vmatprep.subr.mxu0 0.0
  %3794 = vmatpush1.msra.mxu0 %v3525
  %3795 = vmatprep.subr.mxu0 0.0
  %3796 = vmatpush1.msra.mxu0 %v3526
  %3797 = vmatprep.subr.mxu0 0.0
  %3798 = vmatpush1.msra.mxu0 %v3527
  %3799 = vmatprep.subr.mxu0 0.0
  %3800 = vmatpush1.msra.mxu0 %v3528
  %3801 = vmatprep.subr.mxu0 0.0
  %3802 = vmatpush1.msra.mxu0 %v3529
  %3803 = vmatprep.subr.mxu0 0.0
  %3804 = vmatpush1.msra.mxu0 %v3530
  %3805 = vmatprep.subr.mxu0 0.0
  %3806 = vmatpush1.msra.mxu0 %v3531
  %3807 = vmatprep.subr.mxu0 0.0
  %3808 = vmatpush1.msra.mxu0 %v3532
  %3809 = vmatprep.subr.mxu0 0.0
  %3810 = vmatpush1.msra.mxu0 %v3533
  %3811 = vmatprep.subr.mxu0 0.0
  %3812 = vmatpush1.msra.mxu0 %v3534
  %3813 = vmatprep.subr.mxu0 0.0
  %3814 = vmatpush1.msra.mxu0 %v3535
  %3815 = vmatprep.subr.mxu0 0.0
  %3816 = vmatpush1.msra.mxu0 %v3536
  %3817 = vmatprep.subr.mxu0 0.0
  %3818 = vmatpush1.msra.mxu0 %v3537
  %3819 = vmatprep.mubr.f32.mxu0 %v3409
  %3820 = vmatmul.mubr.f32.gmra.mrb[0].mxu0 %v3408
  %v3821 = vpop.f32.mrb[0].mxu0
  %v3822 = vadd.f32 %v3752, %v3821
  %v3823 = vpop.f32.mrb[0].mxu0
  %3824 = vdwg.mxu0
  %vm3825 = vcmask 80896
  %v3826 = vsel %vm3825, %v3822, -inf
  %3827 = vmax.xlane.f32.xlu0 %v3826
  %v3828 = vpop.xlane.xlu0 %3827
  %v3829 = vsub.f32 %v3822, %v3828
  %v3830 = vmul.f32 %v3829, 1.442695
  %v3831 = vpow.pop %v3830
  %v3832 = vsel %vm3825, %v3831, 0.0
  %3833 = vadd.xlane.f32.xlu0 %v3832
  %v3834 = vpop.xlane.xlu0 %3833
  %v3835 = vrcp.pop %v3834
  %v3836 = vmul.f32 %v3831, %v3835
  %3837 = vst.msk [vmem:[%s11] sm:$0xff] %vm3825, %v3836
  // Predicated region
  $region46: #{_lambda_.1} parent=0 // pred_check
    _
  $region47: #{_lambda_.1} parent=0 // pred_check_branch
    %3839 = sbr.rel (0) target = $region49
  $region48: #{_lambda_.1} parent=0 // pred_region
    _
  $region49: #{_lambda_.1} parent=0 // pred_fallthru
    _
  // Predicated region
  $region50: #{_lambda_.1} parent=0 // pred_check
    _
  $region51: #{_lambda_.1} parent=0 // pred_check_branch
    %3841 = sbr.rel (0) target = $region53
  $region52: #{_lambda_.1} parent=0 // pred_region
    _
  $region53: #{_lambda_.1} parent=0 // pred_fallthru
    _

</llo_original>
